<compile_context>
chip_gen: v6e
topology: v6e:2x2x1
jax: 0.10.0
libtpu: 0.0.40
codegen_flags: <defaults>
</compile_context>

<pallas_src>
import jax
import jax.numpy as jnp
from jax.experimental import pallas as pl
from jax.experimental.pallas import tpu as pltpu

VMEM = pltpu.MemorySpace.VMEM


# --------------------------- parameter blob packing ---------------------------
def _pack_blob(pieces):
    """Pack many small 2-D f32 arrays into one blob ref.

    Every piece starts at an 8-row-aligned offset and is right-padded to the common
    column width; the kernel slices pieces back out with static offsets.  One ref /
    one prologue DMA instead of dozens of tiny padded ones.
    """
    width = max(arr.shape[1] for _, arr in pieces)
    layout, rows, off = {}, [], 0
    for name, arr in pieces:
        arr = jnp.asarray(arr, jnp.float32)
        r, c = arr.shape
        rp = -(-r // 8) * 8                                   # round rows up to sublane
        rows.append(jnp.zeros((rp, width), jnp.float32).at[:r, :c].set(arr))
        layout[name] = (off, r, c)
        off += rp
    return jnp.concatenate(rows, axis=0), layout


# --------------------------- fused forward kernel -----------------------------
def _make_hgcn_kernel(ntypes, rels, rels_by_dst, layout, heads):
    """Single fused forward kernel for a fixed hetero-graph structure.

    Inputs (refs): x per ntype, A_norm per relation, packed parameter blob.  Output (1, H).
    """
    n_t, n_r = len(ntypes), len(rels)

    def kernel(*refs):
        x_refs = refs[:n_t]
        a_refs = refs[n_t:n_t + n_r]
        blob_ref = refs[n_t + n_r]
        o_ref = refs[n_t + n_r + 1]

        def L(name):                              # static-offset slice of the packed blob
            off, r, c = layout[name]
            return blob_ref[off:off + r, :c]

        x = {nt: x_refs[i][...] for i, nt in enumerate(ntypes)}
        a = {rels[i][0]: a_refs[i][...] for i in range(n_r)}   # pre-normalized adjacency

        # -------- conv1: GraphConv(in->hid, norm='both') + hetero 'sum', fused --------
        # norms already folded into `a`; per-dst relations fused into one stacked matmul:
        # h = [m_r1 | m_r2 | ...] @ vstack(W1_r) + sum(b1_r)
        h1 = {}
        for dst, rlist in rels_by_dst:
            msgs = [jnp.dot(a[rel], x[src], preferred_element_type=jnp.float32)
                    for rel, src in rlist]
            m = msgs[0] if len(msgs) == 1 else jnp.concatenate(msgs, axis=1)
            v = jnp.dot(m, L('w1_' + dst), preferred_element_type=jnp.float32) + L('b1_' + dst)
            # F.normalize(dim=1)
            h1[dst] = v * jax.lax.rsqrt(
                jnp.maximum(jnp.sum(v * v, axis=1, keepdims=True), 1e-24))

        # -------- gatconv: GATConv(hid->hid, heads=3), all heads in one stacked tile ---
        headmask = L('headmask')                                   # (H, H*hid) 0/1 rows
        sel3 = {dst: L('sel3_' + dst) for dst, _ in rels_by_dst}   # (H*Nd, Nd) == [I;I;I]
        h2 = {dst: L('bg_' + dst) for dst, _ in rels_by_dst}       # init with summed bias
        for rel, src, dst in rels:
            a_r = a[rel]                                           # (Nd, Ns)
            nd = a_r.shape[0]
            s3 = sel3[dst]
            wg = L('wg_' + rel)                                    # (hid, H*hid)
            fs = jnp.dot(h1[src], wg, preferred_element_type=jnp.float32)       # (Ns, H*hid)
            fd = fs if src == dst else jnp.dot(h1[dst], wg,
                                               preferred_element_type=jnp.float32)
            # attention logits for ALL heads, sublane-stacked: row h*Nd+i -> (head h, dst i)
            el = jax.lax.dot_general(L('alrows_' + rel), fs, (((1,), (1,)), ((), ())),
                                     preferred_element_type=jnp.float32)        # (H*Nd, Ns)
            fd_rep = jnp.dot(s3, fd, preferred_element_type=jnp.float32)         # (H*Nd, H*hid)
            er = jnp.sum(fd_rep * L('arrows_' + rel), axis=1, keepdims=True)     # (H*Nd, 1)
            e = er + el
            e = jnp.where(e > 0, e, 0.2 * e)                                     # LeakyReLU(0.2)
            mask = jnp.dot(s3, a_r, preferred_element_type=jnp.float32) > 0.0    # tiled edge mask
            e = jnp.where(mask, e, jnp.float32(-1e30))
            # ONE masked edge-softmax over the stacked tile (was 3x per-head)
            e_max = jnp.max(e, axis=1, keepdims=True)
            p = jnp.where(mask, jnp.exp(e - e_max), 0.0)
            denom = jnp.maximum(jnp.sum(p, axis=1, keepdims=True), 1e-12)
            alpha = p / denom                                     # zero in-degree rows -> 0
            # ONE aggregation matmul for all heads; pick each head's block back out
            out_all = jnp.dot(alpha, fs, preferred_element_type=jnp.float32)     # (H*Nd, H*hid)
            out = out_all[0:nd, :] * headmask[0:1, :]
            for h in range(1, heads):                              # static unroll, heads=3
                out = out + out_all[h * nd:(h + 1) * nd, :] * headmask[h:h + 1, :]
            h2[dst] = h2[dst] + out
        # F.relu; TODO(synk): F.dropout(0.3) kept as identity (eval-mode equivalent).
        h2 = {nt: jnp.maximum(v, 0.0) for nt, v in h2.items()}

        # -------- conv2: per-head GraphConv(hid->out), fused per dst ntype -------------
        h3 = {}
        for dst, rlist in rels_by_dst:
            msgs = [jnp.dot(a[rel], h2[src], preferred_element_type=jnp.float32)
                    for rel, src in rlist]
            m = msgs[0] if len(msgs) == 1 else jnp.concatenate(msgs, axis=1)
            h3[dst] = (jnp.dot(m, L('w2_' + dst), preferred_element_type=jnp.float32)
                       + L('b2_' + dst))

        # -------- readout: sigmoid -> mean_nodes -> sum -> classify -> mean over C -----
        hg = None
        for nt in ntypes:
            if nt in h3:
                v = jax.nn.sigmoid(h3[nt])
                n = v.shape[0]
                mn = jnp.dot(jnp.full((1, n), 1.0 / n, jnp.float32), v,
                             preferred_element_type=jnp.float32)                 # mean_nodes
                hg = mn if hg is None else hg + mn
        logits = jnp.dot(hg, L('wc'), preferred_element_type=jnp.float32) + L('bc')
        s = jax.nn.sigmoid(logits)                                               # (1, H*C)
        o_ref[...] = jnp.dot(s, L('avg'), preferred_element_type=jnp.float32)    # (1, H)

    return kernel


# ------------------------------ parameters -----------------------------------
def init_params(key, in_feats, hid_feats, out_feats, num_classes, rel_names, heads=3):
    def nrm(k, shape, scale=0.1):
        return scale * jax.random.normal(k, shape, dtype=jnp.float32)

    params = {'conv1': {}, 'gat': {}, 'conv2': {}}
    for rel in rel_names:
        key, k1, k2, k3, k4, k5, k6, k7, k8 = jax.random.split(key, 9)
        params['conv1'][rel] = {'w': nrm(k1, (in_feats, hid_feats)),
                                'b': nrm(k2, (hid_feats,))}
        params['gat'][rel] = {'w': nrm(k3, (hid_feats, heads * hid_feats)),
                              'al': nrm(k4, (heads, hid_feats)),
                              'ar': nrm(k5, (heads, hid_feats)),
                              'b': nrm(k6, (heads * hid_feats,))}
        params['conv2'][rel] = {'w': nrm(k7, (hid_feats, out_feats)),
                                'b': nrm(k8, (out_feats,))}
    key, kw, kb = jax.random.split(key, 3)
    params['classify'] = {'w': nrm(kw, (num_classes, out_feats)),  # torch Linear layout (C, out)
                          'b': nrm(kb, (num_classes,))}
    return params


# ------------------------------ full forward ---------------------------------
def hgcn_forward(params, graph, inputs, *, heads=3):
    # graph: {rel_name: (src_ntype, dst_ntype, A[N_dst, N_src])}; A is assumed BINARY
    # (the GAT edge mask is derived as A_norm > 0).
    ntypes = tuple(sorted(inputs.keys()))
    rels = tuple((rel, src, dst) for rel, (src, dst, _) in graph.items())
    any_rel = rels[0][0]
    hid = params['conv1'][any_rel]['w'].shape[1]
    out_feats = params['conv2'][any_rel]['w'].shape[1]
    wc, bc = params['classify']['w'], params['classify']['b']
    num_classes = wc.shape[0]
    hh, ho = heads * hid, heads * out_feats
    eye = jnp.eye(heads, dtype=jnp.float32)
    n_nodes = {nt: inputs[nt].shape[0] for nt in ntypes}

    # Graph preprocessing (XLA, outside the kernel): fold GraphConv norm='both' into A.
    # A_norm = D_dst^-1/2 A D_src^-1/2, degrees clamped at 1 (DGL semantics).
    a_norm = {}
    for rel, src, dst in rels:
        A = graph[rel][2].astype(jnp.float32)
        ns = jax.lax.rsqrt(jnp.maximum(jnp.sum(A, axis=0), 1.0))   # (Ns,)
        nd = jax.lax.rsqrt(jnp.maximum(jnp.sum(A, axis=1), 1.0))   # (Nd,)
        a_norm[rel] = A * nd[:, None] * ns[None, :]

    # Relations grouped by destination ntype (order preserved -> matches stacked weights).
    rels_by_dst = {}
    for rel, src, dst in rels:
        rels_by_dst.setdefault(dst, []).append((rel, src))

    pieces = []
    for dst, rlist in rels_by_dst.items():
        w1s = jnp.concatenate([params['conv1'][rel]['w'] for rel, _ in rlist], axis=0)
        b1s = sum(params['conv1'][rel]['b'] for rel, _ in rlist).reshape(1, -1)
        bgs = sum(params['gat'][rel]['b'] for rel, _ in rlist).reshape(1, -1)
        w2s = jnp.concatenate(                                     # per-head block-diag, vstacked
            [(eye[:, None, :, None] * params['conv2'][rel]['w'][None, :, None, :]
              ).reshape(hh, ho) for rel, _ in rlist], axis=0)
        b2s = jnp.tile(sum(params['conv2'][rel]['b'] for rel, _ in rlist),
                       heads).reshape(1, -1)
        sel3 = jnp.tile(jnp.eye(n_nodes[dst], dtype=jnp.float32), (heads, 1))   # [I;I;I]
        pieces += [('w1_' + dst, w1s), ('b1_' + dst, b1s), ('bg_' + dst, bgs),
                   ('w2_' + dst, w2s), ('b2_' + dst, b2s), ('sel3_' + dst, sel3)]
    for rel, src, dst in rels:
        pg = params['gat'][rel]
        al_full = (eye[:, :, None] * pg['al'][None, :, :]).reshape(heads, hh)
        ar_full = (eye[:, :, None] * pg['ar'][None, :, :]).reshape(heads, hh)
        nd = n_nodes[dst]
        pieces += [('wg_' + rel, pg['w']),
                   ('alrows_' + rel, jnp.repeat(al_full, nd, axis=0)),   # row h*Nd+i = al[h]
                   ('arrows_' + rel, jnp.repeat(ar_full, nd, axis=0))]
    wc_bd = (eye[:, None, :, None] * wc.T[None, :, None, :]).reshape(ho, heads * num_classes)
    pieces += [('wc', wc_bd),
               ('bc', jnp.tile(bc, heads).reshape(1, -1)),
               ('avg', jnp.repeat(eye, num_classes, axis=0) / num_classes),  # mean over classes
               ('headmask', jnp.repeat(eye, hid, axis=1))]                   # (H, H*hid)
    blob, layout = _pack_blob(pieces)

    args = ([inputs[nt].astype(jnp.float32) for nt in ntypes]
            + [a_norm[rel] for rel, _, _ in rels] + [blob])
    kern = _make_hgcn_kernel(
        ntypes, rels, tuple((d, tuple(rl)) for d, rl in rels_by_dst.items()), layout, heads)

    # TODO(synk): large graphs -> grid over dst-node row blocks (parallel/arbitrary
    # dimension_semantics for v7x's 2 TCs), bf16 adjacency tiles for v6e/v7x, and an
    # explicit vmem_limit_bytes sized for v7x's 64 MiB VMEM.
    return pl.pallas_call(
        kern,
        out_shape=jax.ShapeDtypeStruct((1, heads), jnp.float32),
        in_specs=[pl.BlockSpec(memory_space=VMEM) for _ in args],
        out_specs=pl.BlockSpec(memory_space=VMEM),
    )(*args)


# ----------------------------------- main -------------------------------------
if __name__ == "__main__":
    key = jax.random.PRNGKey(0)
    Nu, Ni = 16, 12
    in_feats, hid_feats, out_feats, num_classes, heads = 8, 16, 16, 4, 3
    rel_names = ('follows', 'clicks', 'clicked_by')

    key, kf, kc, kcb, ku, ki, kp = jax.random.split(key, 7)
    graph = {
        'follows':    ('user', 'user', jax.random.bernoulli(kf, 0.3, (Nu, Nu)).astype(jnp.float32)),
        'clicks':     ('user', 'item', jax.random.bernoulli(kc, 0.3, (Ni, Nu)).astype(jnp.float32)),
        'clicked_by': ('item', 'user', jax.random.bernoulli(kcb, 0.3, (Nu, Ni)).astype(jnp.float32)),
    }
    inputs = {'user': jax.random.normal(ku, (Nu, in_feats), dtype=jnp.float32),
              'item': jax.random.normal(ki, (Ni, in_feats), dtype=jnp.float32)}
    params = init_params(kp, in_feats, hid_feats, out_feats, num_classes, rel_names, heads)

    out = hgcn_forward(params, graph, inputs, heads=heads)
    out = jax.block_until_ready(out)
    assert out.shape == (1, heads), out.shape
    assert bool(jnp.all(jnp.isfinite(out)))
    print("KERNEL_OK")
</pallas_src>

<mosaic_0001>
module attributes {stable_mosaic.version = 11 : i64} {
  func.func @kernel(%arg0: memref<12x8xf32, #tpu.memory_space<vmem>>, %arg1: memref<16x8xf32, #tpu.memory_space<vmem>>, %arg2: memref<16x16xf32, #tpu.memory_space<vmem>>, %arg3: memref<12x16xf32, #tpu.memory_space<vmem>>, %arg4: memref<16x12xf32, #tpu.memory_space<vmem>>, %arg5: memref<704x48xf32, #tpu.memory_space<vmem>>, %arg6: memref<1x3xf32, #tpu.memory_space<vmem>>) attributes {dimension_semantics = [], scalar_prefetch = 0 : i64, scratch_operands = 0 : i64, tpu.core_type = #tpu.core_type<tc>} {
    %c0 = arith.constant 0 : index
    %c0_0 = arith.constant 0 : index
    %0 = vector.load %arg0[%c0, %c0_0] : memref<12x8xf32, #tpu.memory_space<vmem>>, vector<12x8xf32>
    %c0_1 = arith.constant 0 : index
    %c0_2 = arith.constant 0 : index
    %1 = vector.load %arg1[%c0_1, %c0_2] : memref<16x8xf32, #tpu.memory_space<vmem>>, vector<16x8xf32>
    %c0_3 = arith.constant 0 : index
    %c0_4 = arith.constant 0 : index
    %2 = vector.load %arg2[%c0_3, %c0_4] : memref<16x16xf32, #tpu.memory_space<vmem>>, vector<16x16xf32>
    %c0_5 = arith.constant 0 : index
    %c0_6 = arith.constant 0 : index
    %3 = vector.load %arg3[%c0_5, %c0_6] : memref<12x16xf32, #tpu.memory_space<vmem>>, vector<12x16xf32>
    %c0_7 = arith.constant 0 : index
    %c0_8 = arith.constant 0 : index
    %4 = vector.load %arg4[%c0_7, %c0_8] : memref<16x12xf32, #tpu.memory_space<vmem>>, vector<16x12xf32>
    %cst = arith.constant dense<0.000000e+00> : vector<16x8xf32>
    %5 = tpu.matmul %2, %1, %cst {dimension_numbers = #tpu.dot_dimension_numbers<[1], [0], [0], [1], [0, 0, 1, 1], [], []>} : vector<16x16xf32>, vector<16x8xf32>, vector<16x8xf32> -> vector<16x8xf32>
    %cst_9 = arith.constant dense<0.000000e+00> : vector<16x8xf32>
    %6 = tpu.matmul %4, %0, %cst_9 {dimension_numbers = #tpu.dot_dimension_numbers<[1], [0], [0], [1], [0, 0, 1, 1], [], []>} : vector<16x12xf32>, vector<12x8xf32>, vector<16x8xf32> -> vector<16x8xf32>
    %7 = tpu.concatenate %5, %6 in 1 : vector<16x8xf32>, vector<16x8xf32> -> vector<16x16xf32>
    %c0_10 = arith.constant 0 : index
    %c0_11 = arith.constant 0 : index
    %8 = vector.load %arg5[%c0_10, %c0_11] : memref<704x48xf32, #tpu.memory_space<vmem>>, vector<16x16xf32>
    %cst_12 = arith.constant dense<0.000000e+00> : vector<16x16xf32>
    %9 = tpu.matmul %7, %8, %cst_12 {dimension_numbers = #tpu.dot_dimension_numbers<[1], [0], [0], [1], [0, 0, 1, 1], [], []>} : vector<16x16xf32>, vector<16x16xf32>, vector<16x16xf32> -> vector<16x16xf32>
    %c16 = arith.constant 16 : index
    %c0_13 = arith.constant 0 : index
    %10 = vector.load %arg5[%c16, %c0_13] : memref<704x48xf32, #tpu.memory_space<vmem>>, vector<1x16xf32>
    %11 = vector.broadcast %10 : vector<1x16xf32> to vector<16x16xf32>
    %12 = arith.addf %9, %11 : vector<16x16xf32>
    %13 = arith.mulf %12, %12 : vector<16x16xf32>
    %cst_14 = arith.constant dense<0.000000e+00> : vector<16xf32>
    %14 = vector.multi_reduction <add>, %13, %cst_14 [1] : vector<16x16xf32> to vector<16xf32>
    %15 = vector.shape_cast %14 : vector<16xf32> to vector<16x1xf32>
    %cst_15 = arith.constant 1.000000e-24 : f32
    %16 = vector.broadcast %cst_15 : f32 to vector<16x1xf32>
    %17 = arith.maximumf %15, %16 : vector<16x1xf32>
    %18 = math.rsqrt %17 : vector<16x1xf32>
    %19 = vector.broadcast %18 : vector<16x1xf32> to vector<16x16xf32>
    %20 = arith.mulf %12, %19 : vector<16x16xf32>
    %cst_16 = arith.constant dense<0.000000e+00> : vector<12x8xf32>
    %21 = tpu.matmul %3, %1, %cst_16 {dimension_numbers = #tpu.dot_dimension_numbers<[1], [0], [0], [1], [0, 0, 1, 1], [], []>} : vector<12x16xf32>, vector<16x8xf32>, vector<12x8xf32> -> vector<12x8xf32>
    %c184 = arith.constant 184 : index
    %c0_17 = arith.constant 0 : index
    %22 = vector.load %arg5[%c184, %c0_17] : memref<704x48xf32, #tpu.memory_space<vmem>>, vector<8x16xf32>
    %cst_18 = arith.constant dense<0.000000e+00> : vector<12x16xf32>
    %23 = tpu.matmul %21, %22, %cst_18 {dimension_numbers = #tpu.dot_dimension_numbers<[1], [0], [0], [1], [0, 0, 1, 1], [], []>} : vector<12x8xf32>, vector<8x16xf32>, vector<12x16xf32> -> vector<12x16xf32>
    %c192 = arith.constant 192 : index
    %c0_19 = arith.constant 0 : index
    %24 = vector.load %arg5[%c192, %c0_19] : memref<704x48xf32, #tpu.memory_space<vmem>>, vector<1x16xf32>
    %25 = vector.broadcast %24 : vector<1x16xf32> to vector<12x16xf32>
    %26 = arith.addf %23, %25 : vector<12x16xf32>
    %27 = arith.mulf %26, %26 : vector<12x16xf32>
    %cst_20 = arith.constant dense<0.000000e+00> : vector<12xf32>
    %28 = vector.multi_reduction <add>, %27, %cst_20 [1] : vector<12x16xf32> to vector<12xf32>
    %29 = vector.shape_cast %28 : vector<12xf32> to vector<12x1xf32>
    %cst_21 = arith.constant 1.000000e-24 : f32
    %30 = vector.broadcast %cst_21 : f32 to vector<12x1xf32>
    %31 = arith.maximumf %29, %30 : vector<12x1xf32>
    %32 = math.rsqrt %31 : vector<12x1xf32>
    %33 = vector.broadcast %32 : vector<12x1xf32> to vector<12x16xf32>
    %34 = arith.mulf %26, %33 : vector<12x16xf32>
    %c696 = arith.constant 696 : index
    %c0_22 = arith.constant 0 : index
    %35 = vector.load %arg5[%c696, %c0_22] : memref<704x48xf32, #tpu.memory_space<vmem>>, vector<3x48xf32>
    %c136 = arith.constant 136 : index
    %c0_23 = arith.constant 0 : index
    %36 = vector.load %arg5[%c136, %c0_23] : memref<704x48xf32, #tpu.memory_space<vmem>>, vector<48x16xf32>
    %c264 = arith.constant 264 : index
    %c0_24 = arith.constant 0 : index
    %37 = vector.load %arg5[%c264, %c0_24] : memref<704x48xf32, #tpu.memory_space<vmem>>, vector<36x12xf32>
    %c24 = arith.constant 24 : index
    %c0_25 = arith.constant 0 : index
    %38 = vector.load %arg5[%c24, %c0_25] : memref<704x48xf32, #tpu.memory_space<vmem>>, vector<1x48xf32>
    %c200 = arith.constant 200 : index
    %c0_26 = arith.constant 0 : index
    %39 = vector.load %arg5[%c200, %c0_26] : memref<704x48xf32, #tpu.memory_space<vmem>>, vector<1x48xf32>
    %c304 = arith.constant 304 : index
    %c0_27 = arith.constant 0 : index
    %40 = vector.load %arg5[%c304, %c0_27] : memref<704x48xf32, #tpu.memory_space<vmem>>, vector<16x48xf32>
    %cst_28 = arith.constant dense<0.000000e+00> : vector<16x48xf32>
    %41 = tpu.matmul %20, %40, %cst_28 {dimension_numbers = #tpu.dot_dimension_numbers<[1], [0], [0], [1], [0, 0, 1, 1], [], []>} : vector<16x16xf32>, vector<16x48xf32>, vector<16x48xf32> -> vector<16x48xf32>
    %c320 = arith.constant 320 : index
    %c0_29 = arith.constant 0 : index
    %42 = vector.load %arg5[%c320, %c0_29] : memref<704x48xf32, #tpu.memory_space<vmem>>, vector<48x48xf32>
    %cst_30 = arith.constant dense<0.000000e+00> : vector<48x16xf32>
    %43 = tpu.matmul %42, %41, %cst_30 {dimension_numbers = #tpu.dot_dimension_numbers<[1], [1], [0], [0], [0, 0, 1, 0], [], []>} : vector<48x48xf32>, vector<16x48xf32>, vector<48x16xf32> -> vector<48x16xf32>
    %cst_31 = arith.constant dense<0.000000e+00> : vector<48x48xf32>
    %44 = tpu.matmul %36, %41, %cst_31 {dimension_numbers = #tpu.dot_dimension_numbers<[1], [0], [0], [1], [0, 0, 1, 1], [], []>} : vector<48x16xf32>, vector<16x48xf32>, vector<48x48xf32> -> vector<48x48xf32>
    %c368 = arith.constant 368 : index
    %c0_32 = arith.constant 0 : index
    %45 = vector.load %arg5[%c368, %c0_32] : memref<704x48xf32, #tpu.memory_space<vmem>>, vector<48x48xf32>
    %46 = arith.mulf %44, %45 : vector<48x48xf32>
    %cst_33 = arith.constant dense<0.000000e+00> : vector<48xf32>
    %47 = vector.multi_reduction <add>, %46, %cst_33 [1] : vector<48x48xf32> to vector<48xf32>
    %48 = vector.shape_cast %47 : vector<48xf32> to vector<48x1xf32>
    %49 = vector.broadcast %48 : vector<48x1xf32> to vector<48x16xf32>
    %50 = arith.addf %49, %43 : vector<48x16xf32>
    %cst_34 = arith.constant 0.000000e+00 : f32
    %51 = vector.broadcast %cst_34 : f32 to vector<48x16xf32>
    %52 = arith.cmpf ogt, %50, %51 : vector<48x16xf32>
    %cst_35 = arith.constant 2.000000e-01 : f32
    %53 = vector.broadcast %cst_35 : f32 to vector<48x16xf32>
    %54 = arith.mulf %53, %50 : vector<48x16xf32>
    %55 = arith.select %52, %50, %54 : vector<48x16xi1>, vector<48x16xf32>
    %cst_36 = arith.constant dense<0.000000e+00> : vector<48x16xf32>
    %56 = tpu.matmul %36, %2, %cst_36 {dimension_numbers = #tpu.dot_dimension_numbers<[1], [0], [0], [1], [0, 0, 1, 1], [], []>} : vector<48x16xf32>, vector<16x16xf32>, vector<48x16xf32> -> vector<48x16xf32>
    %cst_37 = arith.constant 0.000000e+00 : f32
    %57 = vector.broadcast %cst_37 : f32 to vector<48x16xf32>
    %58 = arith.cmpf ogt, %56, %57 : vector<48x16xf32>
    %cst_38 = arith.constant -1.000000e+30 : f32
    %59 = vector.broadcast %cst_38 : f32 to vector<48x16xf32>
    %60 = arith.select %58, %55, %59 : vector<48x16xi1>, vector<48x16xf32>
    %cst_39 = arith.constant dense<0xFF800000> : vector<48xf32>
    %61 = vector.multi_reduction <maximumf>, %60, %cst_39 [1] : vector<48x16xf32> to vector<48xf32>
    %62 = vector.shape_cast %61 : vector<48xf32> to vector<48x1xf32>
    %63 = vector.broadcast %62 : vector<48x1xf32> to vector<48x16xf32>
    %64 = arith.subf %60, %63 : vector<48x16xf32>
    %65 = math.exp %64 : vector<48x16xf32>
    %cst_40 = arith.constant 0.000000e+00 : f32
    %66 = vector.broadcast %cst_40 : f32 to vector<48x16xf32>
    %67 = arith.select %58, %65, %66 : vector<48x16xi1>, vector<48x16xf32>
    %cst_41 = arith.constant dense<0.000000e+00> : vector<48xf32>
    %68 = vector.multi_reduction <add>, %67, %cst_41 [1] : vector<48x16xf32> to vector<48xf32>
    %69 = vector.shape_cast %68 : vector<48xf32> to vector<48x1xf32>
    %cst_42 = arith.constant 9.99999996E-13 : f32
    %70 = vector.broadcast %cst_42 : f32 to vector<48x1xf32>
    %71 = arith.maximumf %69, %70 : vector<48x1xf32>
    %72 = vector.broadcast %71 : vector<48x1xf32> to vector<48x16xf32>
    %73 = arith.divf %67, %72 : vector<48x16xf32>
    %cst_43 = arith.constant dense<0.000000e+00> : vector<48x48xf32>
    %74 = tpu.matmul %73, %41, %cst_43 {dimension_numbers = #tpu.dot_dimension_numbers<[1], [0], [0], [1], [0, 0, 1, 1], [], []>} : vector<48x16xf32>, vector<16x48xf32>, vector<48x48xf32> -> vector<48x48xf32>
    %75 = vector.extract_strided_slice %74 {offsets = [0, 0], sizes = [16, 48], strides = [1, 1]} : vector<48x48xf32> to vector<16x48xf32>
    %76 = vector.extract_strided_slice %35 {offsets = [0, 0], sizes = [1, 48], strides = [1, 1]} : vector<3x48xf32> to vector<1x48xf32>
    %77 = vector.broadcast %76 : vector<1x48xf32> to vector<16x48xf32>
    %78 = arith.mulf %75, %77 : vector<16x48xf32>
    %79 = vector.extract_strided_slice %74 {offsets = [16, 0], sizes = [16, 48], strides = [1, 1]} : vector<48x48xf32> to vector<16x48xf32>
    %80 = vector.extract_strided_slice %35 {offsets = [1, 0], sizes = [1, 48], strides = [1, 1]} : vector<3x48xf32> to vector<1x48xf32>
    %81 = vector.broadcast %80 : vector<1x48xf32> to vector<16x48xf32>
    %82 = arith.mulf %79, %81 : vector<16x48xf32>
    %83 = arith.addf %78, %82 : vector<16x48xf32>
    %84 = vector.extract_strided_slice %74 {offsets = [32, 0], sizes = [16, 48], strides = [1, 1]} : vector<48x48xf32> to vector<16x48xf32>
    %85 = vector.extract_strided_slice %35 {offsets = [2, 0], sizes = [1, 48], strides = [1, 1]} : vector<3x48xf32> to vector<1x48xf32>
    %86 = vector.broadcast %85 : vector<1x48xf32> to vector<16x48xf32>
    %87 = arith.mulf %84, %86 : vector<16x48xf32>
    %88 = arith.addf %83, %87 : vector<16x48xf32>
    %89 = vector.broadcast %38 : vector<1x48xf32> to vector<16x48xf32>
    %90 = arith.addf %89, %88 : vector<16x48xf32>
    %c416 = arith.constant 416 : index
    %c0_44 = arith.constant 0 : index
    %91 = vector.load %arg5[%c416, %c0_44] : memref<704x48xf32, #tpu.memory_space<vmem>>, vector<16x48xf32>
    %cst_45 = arith.constant dense<0.000000e+00> : vector<16x48xf32>
    %92 = tpu.matmul %20, %91, %cst_45 {dimension_numbers = #tpu.dot_dimension_numbers<[1], [0], [0], [1], [0, 0, 1, 1], [], []>} : vector<16x16xf32>, vector<16x48xf32>, vector<16x48xf32> -> vector<16x48xf32>
    %cst_46 = arith.constant dense<0.000000e+00> : vector<12x48xf32>
    %93 = tpu.matmul %34, %91, %cst_46 {dimension_numbers = #tpu.dot_dimension_numbers<[1], [0], [0], [1], [0, 0, 1, 1], [], []>} : vector<12x16xf32>, vector<16x48xf32>, vector<12x48xf32> -> vector<12x48xf32>
    %c432 = arith.constant 432 : index
    %c0_47 = arith.constant 0 : index
    %94 = vector.load %arg5[%c432, %c0_47] : memref<704x48xf32, #tpu.memory_space<vmem>>, vector<36x48xf32>
    %cst_48 = arith.constant dense<0.000000e+00> : vector<36x16xf32>
    %95 = tpu.matmul %94, %92, %cst_48 {dimension_numbers = #tpu.dot_dimension_numbers<[1], [1], [0], [0], [0, 0, 1, 0], [], []>} : vector<36x48xf32>, vector<16x48xf32>, vector<36x16xf32> -> vector<36x16xf32>
    %cst_49 = arith.constant dense<0.000000e+00> : vector<36x48xf32>
    %96 = tpu.matmul %37, %93, %cst_49 {dimension_numbers = #tpu.dot_dimension_numbers<[1], [0], [0], [1], [0, 0, 1, 1], [], []>} : vector<36x12xf32>, vector<12x48xf32>, vector<36x48xf32> -> vector<36x48xf32>
    %c472 = arith.constant 472 : index
    %c0_50 = arith.constant 0 : index
    %97 = vector.load %arg5[%c472, %c0_50] : memref<704x48xf32, #tpu.memory_space<vmem>>, vector<36x48xf32>
    %98 = arith.mulf %96, %97 : vector<36x48xf32>
    %cst_51 = arith.constant dense<0.000000e+00> : vector<36xf32>
    %99 = vector.multi_reduction <add>, %98, %cst_51 [1] : vector<36x48xf32> to vector<36xf32>
    %100 = vector.shape_cast %99 : vector<36xf32> to vector<36x1xf32>
    %101 = vector.broadcast %100 : vector<36x1xf32> to vector<36x16xf32>
    %102 = arith.addf %101, %95 : vector<36x16xf32>
    %cst_52 = arith.constant 0.000000e+00 : f32
    %103 = vector.broadcast %cst_52 : f32 to vector<36x16xf32>
    %104 = arith.cmpf ogt, %102, %103 : vector<36x16xf32>
    %cst_53 = arith.constant 2.000000e-01 : f32
    %105 = vector.broadcast %cst_53 : f32 to vector<36x16xf32>
    %106 = arith.mulf %105, %102 : vector<36x16xf32>
    %107 = arith.select %104, %102, %106 : vector<36x16xi1>, vector<36x16xf32>
    %cst_54 = arith.constant dense<0.000000e+00> : vector<36x16xf32>
    %108 = tpu.matmul %37, %3, %cst_54 {dimension_numbers = #tpu.dot_dimension_numbers<[1], [0], [0], [1], [0, 0, 1, 1], [], []>} : vector<36x12xf32>, vector<12x16xf32>, vector<36x16xf32> -> vector<36x16xf32>
    %cst_55 = arith.constant 0.000000e+00 : f32
    %109 = vector.broadcast %cst_55 : f32 to vector<36x16xf32>
    %110 = arith.cmpf ogt, %108, %109 : vector<36x16xf32>
    %cst_56 = arith.constant -1.000000e+30 : f32
    %111 = vector.broadcast %cst_56 : f32 to vector<36x16xf32>
    %112 = arith.select %110, %107, %111 : vector<36x16xi1>, vector<36x16xf32>
    %cst_57 = arith.constant dense<0xFF800000> : vector<36xf32>
    %113 = vector.multi_reduction <maximumf>, %112, %cst_57 [1] : vector<36x16xf32> to vector<36xf32>
    %114 = vector.shape_cast %113 : vector<36xf32> to vector<36x1xf32>
    %115 = vector.broadcast %114 : vector<36x1xf32> to vector<36x16xf32>
    %116 = arith.subf %112, %115 : vector<36x16xf32>
    %117 = math.exp %116 : vector<36x16xf32>
    %cst_58 = arith.constant 0.000000e+00 : f32
    %118 = vector.broadcast %cst_58 : f32 to vector<36x16xf32>
    %119 = arith.select %110, %117, %118 : vector<36x16xi1>, vector<36x16xf32>
    %cst_59 = arith.constant dense<0.000000e+00> : vector<36xf32>
    %120 = vector.multi_reduction <add>, %119, %cst_59 [1] : vector<36x16xf32> to vector<36xf32>
    %121 = vector.shape_cast %120 : vector<36xf32> to vector<36x1xf32>
    %cst_60 = arith.constant 9.99999996E-13 : f32
    %122 = vector.broadcast %cst_60 : f32 to vector<36x1xf32>
    %123 = arith.maximumf %121, %122 : vector<36x1xf32>
    %124 = vector.broadcast %123 : vector<36x1xf32> to vector<36x16xf32>
    %125 = arith.divf %119, %124 : vector<36x16xf32>
    %cst_61 = arith.constant dense<0.000000e+00> : vector<36x48xf32>
    %126 = tpu.matmul %125, %92, %cst_61 {dimension_numbers = #tpu.dot_dimension_numbers<[1], [0], [0], [1], [0, 0, 1, 1], [], []>} : vector<36x16xf32>, vector<16x48xf32>, vector<36x48xf32> -> vector<36x48xf32>
    %127 = vector.extract_strided_slice %126 {offsets = [0, 0], sizes = [12, 48], strides = [1, 1]} : vector<36x48xf32> to vector<12x48xf32>
    %128 = vector.extract_strided_slice %35 {offsets = [0, 0], sizes = [1, 48], strides = [1, 1]} : vector<3x48xf32> to vector<1x48xf32>
    %129 = vector.broadcast %128 : vector<1x48xf32> to vector<12x48xf32>
    %130 = arith.mulf %127, %129 : vector<12x48xf32>
    %131 = vector.extract_strided_slice %126 {offsets = [12, 0], sizes = [12, 48], strides = [1, 1]} : vector<36x48xf32> to vector<12x48xf32>
    %132 = vector.extract_strided_slice %35 {offsets = [1, 0], sizes = [1, 48], strides = [1, 1]} : vector<3x48xf32> to vector<1x48xf32>
    %133 = vector.broadcast %132 : vector<1x48xf32> to vector<12x48xf32>
    %134 = arith.mulf %131, %133 : vector<12x48xf32>
    %135 = arith.addf %130, %134 : vector<12x48xf32>
    %136 = vector.extract_strided_slice %126 {offsets = [24, 0], sizes = [12, 48], strides = [1, 1]} : vector<36x48xf32> to vector<12x48xf32>
    %137 = vector.extract_strided_slice %35 {offsets = [2, 0], sizes = [1, 48], strides = [1, 1]} : vector<3x48xf32> to vector<1x48xf32>
    %138 = vector.broadcast %137 : vector<1x48xf32> to vector<12x48xf32>
    %139 = arith.mulf %136, %138 : vector<12x48xf32>
    %140 = arith.addf %135, %139 : vector<12x48xf32>
    %141 = vector.broadcast %39 : vector<1x48xf32> to vector<12x48xf32>
    %142 = arith.addf %141, %140 : vector<12x48xf32>
    %c512 = arith.constant 512 : index
    %c0_62 = arith.constant 0 : index
    %143 = vector.load %arg5[%c512, %c0_62] : memref<704x48xf32, #tpu.memory_space<vmem>>, vector<16x48xf32>
    %cst_63 = arith.constant dense<0.000000e+00> : vector<12x48xf32>
    %144 = tpu.matmul %34, %143, %cst_63 {dimension_numbers = #tpu.dot_dimension_numbers<[1], [0], [0], [1], [0, 0, 1, 1], [], []>} : vector<12x16xf32>, vector<16x48xf32>, vector<12x48xf32> -> vector<12x48xf32>
    %cst_64 = arith.constant dense<0.000000e+00> : vector<16x48xf32>
    %145 = tpu.matmul %20, %143, %cst_64 {dimension_numbers = #tpu.dot_dimension_numbers<[1], [0], [0], [1], [0, 0, 1, 1], [], []>} : vector<16x16xf32>, vector<16x48xf32>, vector<16x48xf32> -> vector<16x48xf32>
    %c528 = arith.constant 528 : index
    %c0_65 = arith.constant 0 : index
    %146 = vector.load %arg5[%c528, %c0_65] : memref<704x48xf32, #tpu.memory_space<vmem>>, vector<48x48xf32>
    %cst_66 = arith.constant dense<0.000000e+00> : vector<48x12xf32>
    %147 = tpu.matmul %146, %144, %cst_66 {dimension_numbers = #tpu.dot_dimension_numbers<[1], [1], [0], [0], [0, 0, 1, 0], [], []>} : vector<48x48xf32>, vector<12x48xf32>, vector<48x12xf32> -> vector<48x12xf32>
    %cst_67 = arith.constant dense<0.000000e+00> : vector<48x48xf32>
    %148 = tpu.matmul %36, %145, %cst_67 {dimension_numbers = #tpu.dot_dimension_numbers<[1], [0], [0], [1], [0, 0, 1, 1], [], []>} : vector<48x16xf32>, vector<16x48xf32>, vector<48x48xf32> -> vector<48x48xf32>
    %c576 = arith.constant 576 : index
    %c0_68 = arith.constant 0 : index
    %149 = vector.load %arg5[%c576, %c0_68] : memref<704x48xf32, #tpu.memory_space<vmem>>, vector<48x48xf32>
    %150 = arith.mulf %148, %149 : vector<48x48xf32>
    %cst_69 = arith.constant dense<0.000000e+00> : vector<48xf32>
    %151 = vector.multi_reduction <add>, %150, %cst_69 [1] : vector<48x48xf32> to vector<48xf32>
    %152 = vector.shape_cast %151 : vector<48xf32> to vector<48x1xf32>
    %153 = vector.broadcast %152 : vector<48x1xf32> to vector<48x12xf32>
    %154 = arith.addf %153, %147 : vector<48x12xf32>
    %cst_70 = arith.constant 0.000000e+00 : f32
    %155 = vector.broadcast %cst_70 : f32 to vector<48x12xf32>
    %156 = arith.cmpf ogt, %154, %155 : vector<48x12xf32>
    %cst_71 = arith.constant 2.000000e-01 : f32
    %157 = vector.broadcast %cst_71 : f32 to vector<48x12xf32>
    %158 = arith.mulf %157, %154 : vector<48x12xf32>
    %159 = arith.select %156, %154, %158 : vector<48x12xi1>, vector<48x12xf32>
    %cst_72 = arith.constant dense<0.000000e+00> : vector<48x12xf32>
    %160 = tpu.matmul %36, %4, %cst_72 {dimension_numbers = #tpu.dot_dimension_numbers<[1], [0], [0], [1], [0, 0, 1, 1], [], []>} : vector<48x16xf32>, vector<16x12xf32>, vector<48x12xf32> -> vector<48x12xf32>
    %cst_73 = arith.constant 0.000000e+00 : f32
    %161 = vector.broadcast %cst_73 : f32 to vector<48x12xf32>
    %162 = arith.cmpf ogt, %160, %161 : vector<48x12xf32>
    %cst_74 = arith.constant -1.000000e+30 : f32
    %163 = vector.broadcast %cst_74 : f32 to vector<48x12xf32>
    %164 = arith.select %162, %159, %163 : vector<48x12xi1>, vector<48x12xf32>
    %cst_75 = arith.constant dense<0xFF800000> : vector<48xf32>
    %165 = vector.multi_reduction <maximumf>, %164, %cst_75 [1] : vector<48x12xf32> to vector<48xf32>
    %166 = vector.shape_cast %165 : vector<48xf32> to vector<48x1xf32>
    %167 = vector.broadcast %166 : vector<48x1xf32> to vector<48x12xf32>
    %168 = arith.subf %164, %167 : vector<48x12xf32>
    %169 = math.exp %168 : vector<48x12xf32>
    %cst_76 = arith.constant 0.000000e+00 : f32
    %170 = vector.broadcast %cst_76 : f32 to vector<48x12xf32>
    %171 = arith.select %162, %169, %170 : vector<48x12xi1>, vector<48x12xf32>
    %cst_77 = arith.constant dense<0.000000e+00> : vector<48xf32>
    %172 = vector.multi_reduction <add>, %171, %cst_77 [1] : vector<48x12xf32> to vector<48xf32>
    %173 = vector.shape_cast %172 : vector<48xf32> to vector<48x1xf32>
    %cst_78 = arith.constant 9.99999996E-13 : f32
    %174 = vector.broadcast %cst_78 : f32 to vector<48x1xf32>
    %175 = arith.maximumf %173, %174 : vector<48x1xf32>
    %176 = vector.broadcast %175 : vector<48x1xf32> to vector<48x12xf32>
    %177 = arith.divf %171, %176 : vector<48x12xf32>
    %cst_79 = arith.constant dense<0.000000e+00> : vector<48x48xf32>
    %178 = tpu.matmul %177, %144, %cst_79 {dimension_numbers = #tpu.dot_dimension_numbers<[1], [0], [0], [1], [0, 0, 1, 1], [], []>} : vector<48x12xf32>, vector<12x48xf32>, vector<48x48xf32> -> vector<48x48xf32>
    %179 = vector.extract_strided_slice %178 {offsets = [0, 0], sizes = [16, 48], strides = [1, 1]} : vector<48x48xf32> to vector<16x48xf32>
    %180 = vector.extract_strided_slice %35 {offsets = [0, 0], sizes = [1, 48], strides = [1, 1]} : vector<3x48xf32> to vector<1x48xf32>
    %181 = vector.broadcast %180 : vector<1x48xf32> to vector<16x48xf32>
    %182 = arith.mulf %179, %181 : vector<16x48xf32>
    %183 = vector.extract_strided_slice %178 {offsets = [16, 0], sizes = [16, 48], strides = [1, 1]} : vector<48x48xf32> to vector<16x48xf32>
    %184 = vector.extract_strided_slice %35 {offsets = [1, 0], sizes = [1, 48], strides = [1, 1]} : vector<3x48xf32> to vector<1x48xf32>
    %185 = vector.broadcast %184 : vector<1x48xf32> to vector<16x48xf32>
    %186 = arith.mulf %183, %185 : vector<16x48xf32>
    %187 = arith.addf %182, %186 : vector<16x48xf32>
    %188 = vector.extract_strided_slice %178 {offsets = [32, 0], sizes = [16, 48], strides = [1, 1]} : vector<48x48xf32> to vector<16x48xf32>
    %189 = vector.extract_strided_slice %35 {offsets = [2, 0], sizes = [1, 48], strides = [1, 1]} : vector<3x48xf32> to vector<1x48xf32>
    %190 = vector.broadcast %189 : vector<1x48xf32> to vector<16x48xf32>
    %191 = arith.mulf %188, %190 : vector<16x48xf32>
    %192 = arith.addf %187, %191 : vector<16x48xf32>
    %193 = arith.addf %90, %192 : vector<16x48xf32>
    %cst_80 = arith.constant 0.000000e+00 : f32
    %194 = vector.broadcast %cst_80 : f32 to vector<16x48xf32>
    %195 = arith.maximumf %193, %194 : vector<16x48xf32>
    %cst_81 = arith.constant 0.000000e+00 : f32
    %196 = vector.broadcast %cst_81 : f32 to vector<12x48xf32>
    %197 = arith.maximumf %142, %196 : vector<12x48xf32>
    %cst_82 = arith.constant dense<0.000000e+00> : vector<16x48xf32>
    %198 = tpu.matmul %2, %195, %cst_82 {dimension_numbers = #tpu.dot_dimension_numbers<[1], [0], [0], [1], [0, 0, 1, 1], [], []>} : vector<16x16xf32>, vector<16x48xf32>, vector<16x48xf32> -> vector<16x48xf32>
    %cst_83 = arith.constant dense<0.000000e+00> : vector<16x48xf32>
    %199 = tpu.matmul %4, %197, %cst_83 {dimension_numbers = #tpu.dot_dimension_numbers<[1], [0], [0], [1], [0, 0, 1, 1], [], []>} : vector<16x12xf32>, vector<12x48xf32>, vector<16x48xf32> -> vector<16x48xf32>
    %200 = tpu.concatenate %198, %199 in 1 : vector<16x48xf32>, vector<16x48xf32> -> vector<16x96xf32>
    %c32 = arith.constant 32 : index
    %c0_84 = arith.constant 0 : index
    %201 = vector.load %arg5[%c32, %c0_84] : memref<704x48xf32, #tpu.memory_space<vmem>>, vector<96x48xf32>
    %cst_85 = arith.constant dense<0.000000e+00> : vector<16x48xf32>
    %202 = tpu.matmul %200, %201, %cst_85 {dimension_numbers = #tpu.dot_dimension_numbers<[1], [0], [0], [1], [0, 0, 1, 1], [], []>} : vector<16x96xf32>, vector<96x48xf32>, vector<16x48xf32> -> vector<16x48xf32>
    %c128 = arith.constant 128 : index
    %c0_86 = arith.constant 0 : index
    %203 = vector.load %arg5[%c128, %c0_86] : memref<704x48xf32, #tpu.memory_space<vmem>>, vector<1x48xf32>
    %204 = vector.broadcast %203 : vector<1x48xf32> to vector<16x48xf32>
    %205 = arith.addf %202, %204 : vector<16x48xf32>
    %cst_87 = arith.constant dense<0.000000e+00> : vector<12x48xf32>
    %206 = tpu.matmul %3, %195, %cst_87 {dimension_numbers = #tpu.dot_dimension_numbers<[1], [0], [0], [1], [0, 0, 1, 1], [], []>} : vector<12x16xf32>, vector<16x48xf32>, vector<12x48xf32> -> vector<12x48xf32>
    %c208 = arith.constant 208 : index
    %c0_88 = arith.constant 0 : index
    %207 = vector.load %arg5[%c208, %c0_88] : memref<704x48xf32, #tpu.memory_space<vmem>>, vector<48x48xf32>
    %cst_89 = arith.constant dense<0.000000e+00> : vector<12x48xf32>
    %208 = tpu.matmul %206, %207, %cst_89 {dimension_numbers = #tpu.dot_dimension_numbers<[1], [0], [0], [1], [0, 0, 1, 1], [], []>} : vector<12x48xf32>, vector<48x48xf32>, vector<12x48xf32> -> vector<12x48xf32>
    %c256 = arith.constant 256 : index
    %c0_90 = arith.constant 0 : index
    %209 = vector.load %arg5[%c256, %c0_90] : memref<704x48xf32, #tpu.memory_space<vmem>>, vector<1x48xf32>
    %210 = vector.broadcast %209 : vector<1x48xf32> to vector<12x48xf32>
    %211 = arith.addf %208, %210 : vector<12x48xf32>
    %212 = arith.negf %211 : vector<12x48xf32>
    %213 = math.exp %212 : vector<12x48xf32>
    %cst_91 = arith.constant 1.000000e+00 : f32
    %214 = vector.broadcast %cst_91 : f32 to vector<12x48xf32>
    %215 = arith.addf %214, %213 : vector<12x48xf32>
    %216 = arith.divf %214, %215 : vector<12x48xf32>
    %cst_92 = arith.constant 0.0833333358 : f32
    %217 = vector.broadcast %cst_92 : f32 to vector<1x12xf32>
    %cst_93 = arith.constant dense<0.000000e+00> : vector<1x48xf32>
    %218 = tpu.matmul %217, %216, %cst_93 {dimension_numbers = #tpu.dot_dimension_numbers<[1], [0], [0], [1], [0, 0, 1, 1], [], []>} : vector<1x12xf32>, vector<12x48xf32>, vector<1x48xf32> -> vector<1x48xf32>
    %219 = arith.negf %205 : vector<16x48xf32>
    %220 = math.exp %219 : vector<16x48xf32>
    %cst_94 = arith.constant 1.000000e+00 : f32
    %221 = vector.broadcast %cst_94 : f32 to vector<16x48xf32>
    %222 = arith.addf %221, %220 : vector<16x48xf32>
    %223 = arith.divf %221, %222 : vector<16x48xf32>
    %cst_95 = arith.constant 6.250000e-02 : f32
    %224 = vector.broadcast %cst_95 : f32 to vector<1x16xf32>
    %cst_96 = arith.constant dense<0.000000e+00> : vector<1x48xf32>
    %225 = tpu.matmul %224, %223, %cst_96 {dimension_numbers = #tpu.dot_dimension_numbers<[1], [0], [0], [1], [0, 0, 1, 1], [], []>} : vector<1x16xf32>, vector<16x48xf32>, vector<1x48xf32> -> vector<1x48xf32>
    %226 = arith.addf %218, %225 : vector<1x48xf32>
    %c624 = arith.constant 624 : index
    %c0_97 = arith.constant 0 : index
    %227 = vector.load %arg5[%c624, %c0_97] : memref<704x48xf32, #tpu.memory_space<vmem>>, vector<48x12xf32>
    %cst_98 = arith.constant dense<0.000000e+00> : vector<1x12xf32>
    %228 = tpu.matmul %226, %227, %cst_98 {dimension_numbers = #tpu.dot_dimension_numbers<[1], [0], [0], [1], [0, 0, 1, 1], [], []>} : vector<1x48xf32>, vector<48x12xf32>, vector<1x12xf32> -> vector<1x12xf32>
    %c672 = arith.constant 672 : index
    %c0_99 = arith.constant 0 : index
    %229 = vector.load %arg5[%c672, %c0_99] : memref<704x48xf32, #tpu.memory_space<vmem>>, vector<1x12xf32>
    %230 = arith.addf %228, %229 : vector<1x12xf32>
    %231 = arith.negf %230 : vector<1x12xf32>
    %232 = math.exp %231 : vector<1x12xf32>
    %cst_100 = arith.constant 1.000000e+00 : f32
    %233 = vector.broadcast %cst_100 : f32 to vector<1x12xf32>
    %234 = arith.addf %233, %232 : vector<1x12xf32>
    %235 = arith.divf %233, %234 : vector<1x12xf32>
    %c680 = arith.constant 680 : index
    %c0_101 = arith.constant 0 : index
    %236 = vector.load %arg5[%c680, %c0_101] : memref<704x48xf32, #tpu.memory_space<vmem>>, vector<12x3xf32>
    %cst_102 = arith.constant dense<0.000000e+00> : vector<1x3xf32>
    %237 = tpu.matmul %235, %236, %cst_102 {dimension_numbers = #tpu.dot_dimension_numbers<[1], [0], [0], [1], [0, 0, 1, 1], [], []>} : vector<1x12xf32>, vector<12x3xf32>, vector<1x3xf32> -> vector<1x3xf32>
    %c0_103 = arith.constant 0 : index
    %c0_104 = arith.constant 0 : index
    %238 = vector.load %arg6[%c0_103, %c0_104] : memref<1x3xf32, #tpu.memory_space<vmem>>, vector<1x3xf32>
    tpu.vector_store %arg6[%c0_103, %c0_104], %237 {strides = array<i32>} : memref<1x3xf32, #tpu.memory_space<vmem>>, vector<1x3xf32>,
    return
  }
}

</mosaic_0001>

<llo_original>
// kernel: tpu_custom_call.1
$region0: #{tpu_custom_call.1}
  #allocation0 [shape = 'u32[]', space=smem, size = 0x4, offset = 0x4, fixed_abs, tag = 'smem constant byte address 0x4 - core index']
  #allocation1 [shape = 'u32[144,128]{1,0:T(1,128)}', space=vmem, size = 0x12000, scoped, tag = 'internal scratch']
  %s0 = inlined_call_operand.vmem [shape: f32[12,8], index: 0, kind: input, shape index: {}]
  %s1 = inlined_call_operand.vmem [shape: f32[16,8], index: 1, kind: input, shape index: {}]
  %s2 = inlined_call_operand.vmem [shape: f32[16,16], index: 2, kind: input, shape index: {}]
  %s3 = inlined_call_operand.vmem [shape: f32[12,16], index: 3, kind: input, shape index: {}]
  %s4 = inlined_call_operand.vmem [shape: f32[16,12], index: 4, kind: input, shape index: {}]
  %s5 = inlined_call_operand.vmem [shape: f32[704,48], index: 5, kind: input, shape index: {}]
  %s6 = inlined_call_operand.hbm [shape: f32[1,3], index: 6, kind: output, shape index: {}]
  %s7 = sld [smem:[#allocation0]]
  $region34: #{tpu_custom_call.1} parent=0
    _
  %s9 = ssub.s32 1, %s7
  %s10 = scalar_select 0, %s9, %s7
  $region1: #{tpu_custom_call.1} parent=0
    #allocation2 [shape = 'u8[512]{0}', space=vmem, size = 0x400, scoped, tag = 'output window, operand 0, single buffered']
    #allocation3 [shape = 's32[1]{0}', space=sflag, size = 0x4, scoped, tag = 'scoped memory for tpu_custom_call.1']
    %11 = vsyncpa [#allocation3], 0
    // Predicated region
    $region2: #{tpu_custom_call.1} parent=1 // pred_check
      _
    $region3: #{tpu_custom_call.1} parent=1 // pred_check_branch
      %13 = sbr.rel (0) target = $region5
    $region4: #{tpu_custom_call.1} parent=1 // pred_region
      _
    $region5: #{tpu_custom_call.1} parent=1 // pred_fallthru
      _
    // Predicated region
    $region6: #{tpu_custom_call.1} parent=1 // pred_check
      _
    $region7: #{tpu_custom_call.1} parent=1 // pred_check_branch
      %15 = sbr.rel (0) target = $region9
    $region8: #{tpu_custom_call.1} parent=1 // pred_region
      _
    $region9: #{tpu_custom_call.1} parent=1 // pred_fallthru
      _
    // Predicated region
    $region10: #{tpu_custom_call.1} parent=1 // pred_check
      _
    $region11: #{tpu_custom_call.1} parent=1 // pred_check_branch
      %17 = sbr.rel (0) target = $region13
    $region12: #{tpu_custom_call.1} parent=1 // pred_region
      _
    $region13: #{tpu_custom_call.1} parent=1 // pred_fallthru
      _
    // Predicated region
    $region14: #{tpu_custom_call.1} parent=1 // pred_check
      _
    $region15: #{tpu_custom_call.1} parent=1 // pred_check_branch
      %19 = sbr.rel (0) target = $region17
    $region16: #{tpu_custom_call.1} parent=1 // pred_region
      _
    $region17: #{tpu_custom_call.1} parent=1 // pred_fallthru
      _
    // Predicated region
    $region18: #{tpu_custom_call.1} parent=1 // pred_check
      _
    $region19: #{tpu_custom_call.1} parent=1 // pred_check_branch
      %21 = sbr.rel (0) target = $region21
    $region20: #{tpu_custom_call.1} parent=1 // pred_region
      _
    $region21: #{tpu_custom_call.1} parent=1 // pred_fallthru
      _
    // Predicated region
    $region22: #{tpu_custom_call.1} parent=1 // pred_check
      _
    $region23: #{tpu_custom_call.1} parent=1 // pred_check_branch
      %23 = sbr.rel (0) target = $region25
    $region24: #{tpu_custom_call.1} parent=1 // pred_region
      _
    $region25: #{tpu_custom_call.1} parent=1 // pred_fallthru
      _
    %v24 = vld [vmem:[%s0] sm:$0xff]
    %v25 = vld [vmem:[%s0 + $0x8] sm:$0xf]
    %v26 = vld [vmem:[%s1] sm:$0xff]
    %v27 = vld [vmem:[%s1 + $0x8] sm:$0xff]
    %v28 = vld [vmem:[%s2] sm:$0xff]
    %v29 = vld [vmem:[%s2 + $0x8] sm:$0xff]
    %v30 = vld [vmem:[%s3] sm:$0xff]
    %v31 = vld [vmem:[%s3 + $0x8] sm:$0xf]
    %v32 = vld [vmem:[%s4] sm:$0xff]
    %v33 = vld [vmem:[%s4 + $0x8] sm:$0xff]
    %vm34 = vcmask 130048
    %v36 = vsel %vm34, %v28, 0
    %v39 = vsel %vm34, %v29, 0
    %41 = vmatprep.subr.mxu0 0.0
    %42 = vmatpush1.msra.mxu0 0.0
    %43 = vmatprep.subr.mxu0 0.0
    %44 = vmatpush1.msra.mxu0 0.0
    %45 = vmatprep.subr.mxu0 0.0
    %46 = vmatpush1.msra.mxu0 0.0
    %47 = vmatprep.subr.mxu0 0.0
    %48 = vmatpush1.msra.mxu0 0.0
    %49 = vmatprep.subr.mxu0 0.0
    %50 = vmatpush1.msra.mxu0 0.0
    %51 = vmatprep.subr.mxu0 0.0
    %52 = vmatpush1.msra.mxu0 0.0
    %53 = vmatprep.subr.mxu0 0.0
    %54 = vmatpush1.msra.mxu0 0.0
    %55 = vmatprep.subr.mxu0 0.0
    %56 = vmatpush1.msra.mxu0 0.0
    %57 = vmatprep.subr.mxu0 0.0
    %58 = vmatpush1.msra.mxu0 0.0
    %59 = vmatprep.subr.mxu0 0.0
    %60 = vmatpush1.msra.mxu0 0.0
    %61 = vmatprep.subr.mxu0 0.0
    %62 = vmatpush1.msra.mxu0 0.0
    %63 = vmatprep.subr.mxu0 0.0
    %64 = vmatpush1.msra.mxu0 0.0
    %65 = vmatprep.subr.mxu0 0.0
    %66 = vmatpush1.msra.mxu0 0.0
    %67 = vmatprep.subr.mxu0 0.0
    %68 = vmatpush1.msra.mxu0 0.0
    %69 = vmatprep.subr.mxu0 0.0
    %70 = vmatpush1.msra.mxu0 %v27
    %71 = vmatprep.subr.mxu0 0.0
    %72 = vmatpush1.msra.mxu0 %v26
    %73 = vmatprep.subr.mxu0 0.0
    %74 = vmatpush2.msra.mxu0 0.0
    %75 = vmatprep.subr.mxu0 0.0
    %76 = vmatpush2.msra.mxu0 0.0
    %77 = vmatprep.subr.mxu0 0.0
    %78 = vmatpush2.msra.mxu0 0.0
    %79 = vmatprep.subr.mxu0 0.0
    %80 = vmatpush2.msra.mxu0 0.0
    %81 = vmatprep.subr.mxu0 0.0
    %82 = vmatpush2.msra.mxu0 0.0
    %83 = vmatprep.subr.mxu0 0.0
    %84 = vmatpush2.msra.mxu0 0.0
    %85 = vmatprep.subr.mxu0 0.0
    %86 = vmatpush2.msra.mxu0 0.0
    %87 = vmatprep.subr.mxu0 0.0
    %88 = vmatpush2.msra.mxu0 0.0
    %89 = vmatprep.subr.mxu0 0.0
    %90 = vmatpush2.msra.mxu0 0.0
    %91 = vmatprep.subr.mxu0 0.0
    %92 = vmatpush2.msra.mxu0 0.0
    %93 = vmatprep.subr.mxu0 0.0
    %94 = vmatpush2.msra.mxu0 0.0
    %95 = vmatprep.subr.mxu0 0.0
    %96 = vmatpush2.msra.mxu0 0.0
    %97 = vmatprep.subr.mxu0 0.0
    %98 = vmatpush2.msra.mxu0 0.0
    %99 = vmatprep.subr.mxu0 0.0
    %100 = vmatpush2.msra.mxu0 0.0
    %101 = vmatprep.subr.mxu0 0.0
    %102 = vmatpush2.msra.mxu0 0.0
    %103 = vmatprep.subr.mxu0 0.0
    %104 = vmatpush2.msra.mxu0 0.0
    %105 = vmatprep.mubr.f32.mxu0 0.0
    %106 = vmatmul.mubr.f32.gmra.mxu0 %v36
    %v107 = vpop.f32.mrf.mxu0
    %v108 = vadd.f32 0.0, %v107
    %v109 = vpop.f32.mrf.mxu0
    %110 = vmatprep.mubr.f32.mxu0 0.0
    %111 = vmatmul.mubr.f32.gmra.mxu0 %v39
    %v112 = vpop.f32.mrf.mxu0
    %v113 = vadd.f32 0.0, %v112
    %v114 = vpop.f32.mrf.mxu0
    %115 = vdwg.mxu0
    %vm116 = vcmask 97280
    %v118 = vsel %vm116, %v32, 0
    %v121 = vsel %vm116, %v33, 0
    %vm123 = vcmask 1043456
    %v125 = vsel %vm123, %v25, 0
    %127 = vmatprep.subr.mxu0 0.0
    %128 = vmatpush1.msra.mxu0 0.0
    %129 = vmatprep.subr.mxu0 0.0
    %130 = vmatpush1.msra.mxu0 0.0
    %131 = vmatprep.subr.mxu0 0.0
    %132 = vmatpush1.msra.mxu0 0.0
    %133 = vmatprep.subr.mxu0 0.0
    %134 = vmatpush1.msra.mxu0 0.0
    %135 = vmatprep.subr.mxu0 0.0
    %136 = vmatpush1.msra.mxu0 0.0
    %137 = vmatprep.subr.mxu0 0.0
    %138 = vmatpush1.msra.mxu0 0.0
    %139 = vmatprep.subr.mxu0 0.0
    %140 = vmatpush1.msra.mxu0 0.0
    %141 = vmatprep.subr.mxu0 0.0
    %142 = vmatpush1.msra.mxu0 0.0
    %143 = vmatprep.subr.mxu0 0.0
    %144 = vmatpush1.msra.mxu0 0.0
    %145 = vmatprep.subr.mxu0 0.0
    %146 = vmatpush1.msra.mxu0 0.0
    %147 = vmatprep.subr.mxu0 0.0
    %148 = vmatpush1.msra.mxu0 0.0
    %149 = vmatprep.subr.mxu0 0.0
    %150 = vmatpush1.msra.mxu0 0.0
    %151 = vmatprep.subr.mxu0 0.0
    %152 = vmatpush1.msra.mxu0 0.0
    %153 = vmatprep.subr.mxu0 0.0
    %154 = vmatpush1.msra.mxu0 0.0
    %155 = vmatprep.subr.mxu0 0.0
    %156 = vmatpush1.msra.mxu0 %v125
    %157 = vmatprep.subr.mxu0 0.0
    %158 = vmatpush1.msra.mxu0 %v24
    %159 = vmatprep.subr.mxu0 0.0
    %160 = vmatpush2.msra.mxu0 0.0
    %161 = vmatprep.subr.mxu0 0.0
    %162 = vmatpush2.msra.mxu0 0.0
    %163 = vmatprep.subr.mxu0 0.0
    %164 = vmatpush2.msra.mxu0 0.0
    %165 = vmatprep.subr.mxu0 0.0
    %166 = vmatpush2.msra.mxu0 0.0
    %167 = vmatprep.subr.mxu0 0.0
    %168 = vmatpush2.msra.mxu0 0.0
    %169 = vmatprep.subr.mxu0 0.0
    %170 = vmatpush2.msra.mxu0 0.0
    %171 = vmatprep.subr.mxu0 0.0
    %172 = vmatpush2.msra.mxu0 0.0
    %173 = vmatprep.subr.mxu0 0.0
    %174 = vmatpush2.msra.mxu0 0.0
    %175 = vmatprep.subr.mxu0 0.0
    %176 = vmatpush2.msra.mxu0 0.0
    %177 = vmatprep.subr.mxu0 0.0
    %178 = vmatpush2.msra.mxu0 0.0
    %179 = vmatprep.subr.mxu0 0.0
    %180 = vmatpush2.msra.mxu0 0.0
    %181 = vmatprep.subr.mxu0 0.0
    %182 = vmatpush2.msra.mxu0 0.0
    %183 = vmatprep.subr.mxu0 0.0
    %184 = vmatpush2.msra.mxu0 0.0
    %185 = vmatprep.subr.mxu0 0.0
    %186 = vmatpush2.msra.mxu0 0.0
    %187 = vmatprep.subr.mxu0 0.0
    %188 = vmatpush2.msra.mxu0 0.0
    %189 = vmatprep.subr.mxu0 0.0
    %190 = vmatpush2.msra.mxu0 0.0
    %191 = vmatprep.mubr.f32.mxu0 0.0
    %192 = vmatmul.mubr.f32.gmra.mxu0 %v118
    %v193 = vpop.f32.mrf.mxu0
    %v194 = vadd.f32 0.0, %v193
    %v195 = vpop.f32.mrf.mxu0
    %196 = vmatprep.mubr.f32.mxu0 0.0
    %197 = vmatmul.mubr.f32.gmra.mxu0 %v121
    %v198 = vpop.f32.mrf.mxu0
    %v199 = vadd.f32 0.0, %v198
    %v200 = vpop.f32.mrf.mxu0
    %201 = vdwg.mxu0
    %204 = vrot.lane.b32.xlu0 %v194, 8
    %v205 = vpop.permute.xlu0 %204
    %206 = vrot.lane.b32.xlu0 %v199, 8
    %v207 = vpop.permute.xlu0 %206
    %vm210 = vcmask 64512
    %v211 = vsel %vm210, %v108, %v205
    %v212 = vsel %vm210, %v113, %v207
    %v213 = vld [vmem:[%s5] sm:$0xff]
    %v214 = vld [vmem:[%s5 + $0x8] sm:$0xff]
    %v215 = vld [vmem:[%s5 + $0x10] sm:$0x1]
    %v216 = vlaneseq
    %v217 = vshrl.u32 %v216, 7
    %v218 = vsub.s32 0, %v217
    %v219 = vrot.slane %v215, %v218
    %v221 = vsel %vm34, %v211, 0
    %v224 = vsel %vm34, %v212, 0
    %226 = vmatprep.subr.mxu0 0.0
    %227 = vmatpush1.msra.mxu0 0.0
    %228 = vmatprep.subr.mxu0 0.0
    %229 = vmatpush1.msra.mxu0 0.0
    %230 = vmatprep.subr.mxu0 0.0
    %231 = vmatpush1.msra.mxu0 0.0
    %232 = vmatprep.subr.mxu0 0.0
    %233 = vmatpush1.msra.mxu0 0.0
    %234 = vmatprep.subr.mxu0 0.0
    %235 = vmatpush1.msra.mxu0 0.0
    %236 = vmatprep.subr.mxu0 0.0
    %237 = vmatpush1.msra.mxu0 0.0
    %238 = vmatprep.subr.mxu0 0.0
    %239 = vmatpush1.msra.mxu0 0.0
    %240 = vmatprep.subr.mxu0 0.0
    %241 = vmatpush1.msra.mxu0 0.0
    %242 = vmatprep.subr.mxu0 0.0
    %243 = vmatpush1.msra.mxu0 0.0
    %244 = vmatprep.subr.mxu0 0.0
    %245 = vmatpush1.msra.mxu0 0.0
    %246 = vmatprep.subr.mxu0 0.0
    %247 = vmatpush1.msra.mxu0 0.0
    %248 = vmatprep.subr.mxu0 0.0
    %249 = vmatpush1.msra.mxu0 0.0
    %250 = vmatprep.subr.mxu0 0.0
    %251 = vmatpush1.msra.mxu0 0.0
    %252 = vmatprep.subr.mxu0 0.0
    %253 = vmatpush1.msra.mxu0 0.0
    %254 = vmatprep.subr.mxu0 0.0
    %255 = vmatpush1.msra.mxu0 %v214
    %256 = vmatprep.subr.mxu0 0.0
    %257 = vmatpush1.msra.mxu0 %v213
    %258 = vmatprep.subr.mxu0 0.0
    %259 = vmatpush2.msra.mxu0 0.0
    %260 = vmatprep.subr.mxu0 0.0
    %261 = vmatpush2.msra.mxu0 0.0
    %262 = vmatprep.subr.mxu0 0.0
    %263 = vmatpush2.msra.mxu0 0.0
    %264 = vmatprep.subr.mxu0 0.0
    %265 = vmatpush2.msra.mxu0 0.0
    %266 = vmatprep.subr.mxu0 0.0
    %267 = vmatpush2.msra.mxu0 0.0
    %268 = vmatprep.subr.mxu0 0.0
    %269 = vmatpush2.msra.mxu0 0.0
    %270 = vmatprep.subr.mxu0 0.0
    %271 = vmatpush2.msra.mxu0 0.0
    %272 = vmatprep.subr.mxu0 0.0
    %273 = vmatpush2.msra.mxu0 0.0
    %274 = vmatprep.subr.mxu0 0.0
    %275 = vmatpush2.msra.mxu0 0.0
    %276 = vmatprep.subr.mxu0 0.0
    %277 = vmatpush2.msra.mxu0 0.0
    %278 = vmatprep.subr.mxu0 0.0
    %279 = vmatpush2.msra.mxu0 0.0
    %280 = vmatprep.subr.mxu0 0.0
    %281 = vmatpush2.msra.mxu0 0.0
    %282 = vmatprep.subr.mxu0 0.0
    %283 = vmatpush2.msra.mxu0 0.0
    %284 = vmatprep.subr.mxu0 0.0
    %285 = vmatpush2.msra.mxu0 0.0
    %286 = vmatprep.subr.mxu0 0.0
    %287 = vmatpush2.msra.mxu0 0.0
    %288 = vmatprep.subr.mxu0 0.0
    %289 = vmatpush2.msra.mxu0 0.0
    %290 = vmatprep.mubr.f32.mxu0 0.0
    %291 = vmatmul.mubr.f32.gmra.mxu0 %v221
    %v292 = vpop.f32.mrf.mxu0
    %v293 = vadd.f32 %v219, %v292
    %v294 = vpop.f32.mrf.mxu0
    %295 = vmatprep.mubr.f32.mxu0 0.0
    %296 = vmatmul.mubr.f32.gmra.mxu0 %v224
    %v297 = vpop.f32.mrf.mxu0
    %v298 = vadd.f32 %v219, %v297
    %v299 = vpop.f32.mrf.mxu0
    %300 = vdwg.mxu0
    %v301 = vmul.f32 %v293, %v293
    %v302 = vmul.f32 %v298, %v298
    %v303 = vsel %vm34, %v301, 0.0
    %304 = vadd.xlane.f32.xlu0 %v303
    %v305 = vpop.xlane.xlu0 %304
    %v306 = vsel %vm34, %v302, 0.0
    %307 = vadd.xlane.f32.xlu0 %v306
    %v308 = vpop.xlane.xlu0 %307
    %v309 = vmax.f32 %v305, 1e-24
    %v310 = vmax.f32 %v308, 1e-24
    %v311 = vrsqrt.pop %v309
    %v312 = vrsqrt.pop %v310
    %v313 = vmul.f32 %v293, %v311
    %v314 = vmul.f32 %v298, %v312
    %v316 = vsel %vm34, %v30, 0
    %v319 = vsel %vm34, %v31, 0
    %321 = vmatprep.subr.mxu0 0.0
    %322 = vmatpush1.msra.mxu0 0.0
    %323 = vmatprep.subr.mxu0 0.0
    %324 = vmatpush1.msra.mxu0 0.0
    %325 = vmatprep.subr.mxu0 0.0
    %326 = vmatpush1.msra.mxu0 0.0
    %327 = vmatprep.subr.mxu0 0.0
    %328 = vmatpush1.msra.mxu0 0.0
    %329 = vmatprep.subr.mxu0 0.0
    %330 = vmatpush1.msra.mxu0 0.0
    %331 = vmatprep.subr.mxu0 0.0
    %332 = vmatpush1.msra.mxu0 0.0
    %333 = vmatprep.subr.mxu0 0.0
    %334 = vmatpush1.msra.mxu0 0.0
    %335 = vmatprep.subr.mxu0 0.0
    %336 = vmatpush1.msra.mxu0 0.0
    %337 = vmatprep.subr.mxu0 0.0
    %338 = vmatpush1.msra.mxu0 0.0
    %339 = vmatprep.subr.mxu0 0.0
    %340 = vmatpush1.msra.mxu0 0.0
    %341 = vmatprep.subr.mxu0 0.0
    %342 = vmatpush1.msra.mxu0 0.0
    %343 = vmatprep.subr.mxu0 0.0
    %344 = vmatpush1.msra.mxu0 0.0
    %345 = vmatprep.subr.mxu0 0.0
    %346 = vmatpush1.msra.mxu0 0.0
    %347 = vmatprep.subr.mxu0 0.0
    %348 = vmatpush1.msra.mxu0 0.0
    %349 = vmatprep.subr.mxu0 0.0
    %350 = vmatpush1.msra.mxu0 %v27
    %351 = vmatprep.subr.mxu0 0.0
    %352 = vmatpush1.msra.mxu0 %v26
    %353 = vmatprep.subr.mxu0 0.0
    %354 = vmatpush2.msra.mxu0 0.0
    %355 = vmatprep.subr.mxu0 0.0
    %356 = vmatpush2.msra.mxu0 0.0
    %357 = vmatprep.subr.mxu0 0.0
    %358 = vmatpush2.msra.mxu0 0.0
    %359 = vmatprep.subr.mxu0 0.0
    %360 = vmatpush2.msra.mxu0 0.0
    %361 = vmatprep.subr.mxu0 0.0
    %362 = vmatpush2.msra.mxu0 0.0
    %363 = vmatprep.subr.mxu0 0.0
    %364 = vmatpush2.msra.mxu0 0.0
    %365 = vmatprep.subr.mxu0 0.0
    %366 = vmatpush2.msra.mxu0 0.0
    %367 = vmatprep.subr.mxu0 0.0
    %368 = vmatpush2.msra.mxu0 0.0
    %369 = vmatprep.subr.mxu0 0.0
    %370 = vmatpush2.msra.mxu0 0.0
    %371 = vmatprep.subr.mxu0 0.0
    %372 = vmatpush2.msra.mxu0 0.0
    %373 = vmatprep.subr.mxu0 0.0
    %374 = vmatpush2.msra.mxu0 0.0
    %375 = vmatprep.subr.mxu0 0.0
    %376 = vmatpush2.msra.mxu0 0.0
    %377 = vmatprep.subr.mxu0 0.0
    %378 = vmatpush2.msra.mxu0 0.0
    %379 = vmatprep.subr.mxu0 0.0
    %380 = vmatpush2.msra.mxu0 0.0
    %381 = vmatprep.subr.mxu0 0.0
    %382 = vmatpush2.msra.mxu0 0.0
    %383 = vmatprep.subr.mxu0 0.0
    %384 = vmatpush2.msra.mxu0 0.0
    %385 = vmatprep.mubr.f32.mxu0 0.0
    %386 = vmatmul.mubr.f32.gmra.mxu0 %v316
    %v387 = vpop.f32.mrf.mxu0
    %v388 = vadd.f32 0.0, %v387
    %v389 = vpop.f32.mrf.mxu0
    %390 = vmatprep.mubr.f32.mxu0 0.0
    %391 = vmatmul.mubr.f32.gmra.mxu0 %v319
    %v392 = vpop.f32.mrf.mxu0
    %v393 = vadd.f32 0.0, %v392
    %v394 = vpop.f32.mrf.mxu0
    %395 = vdwg.mxu0
    %v396 = vld [vmem:[%s5 + $0xb8] sm:$0xff]
    %v397 = vld [vmem:[%s5 + $0xc0] sm:$0x1]
    %v398 = vlaneseq
    %v399 = vshrl.u32 %v398, 7
    %v400 = vsub.s32 0, %v399
    %v401 = vrot.slane %v397, %v400
    %v403 = vsel %vm210, %v388, 0
    %v406 = vsel %vm210, %v393, 0
    %408 = vmatprep.subr.mxu0 0.0
    %409 = vmatpush1.msra.mxu0 0.0
    %410 = vmatprep.subr.mxu0 0.0
    %411 = vmatpush1.msra.mxu0 0.0
    %412 = vmatprep.subr.mxu0 0.0
    %413 = vmatpush1.msra.mxu0 0.0
    %414 = vmatprep.subr.mxu0 0.0
    %415 = vmatpush1.msra.mxu0 0.0
    %416 = vmatprep.subr.mxu0 0.0
    %417 = vmatpush1.msra.mxu0 0.0
    %418 = vmatprep.subr.mxu0 0.0
    %419 = vmatpush1.msra.mxu0 0.0
    %420 = vmatprep.subr.mxu0 0.0
    %421 = vmatpush1.msra.mxu0 0.0
    %422 = vmatprep.subr.mxu0 0.0
    %423 = vmatpush1.msra.mxu0 0.0
    %424 = vmatprep.subr.mxu0 0.0
    %425 = vmatpush1.msra.mxu0 0.0
    %426 = vmatprep.subr.mxu0 0.0
    %427 = vmatpush1.msra.mxu0 0.0
    %428 = vmatprep.subr.mxu0 0.0
    %429 = vmatpush1.msra.mxu0 0.0
    %430 = vmatprep.subr.mxu0 0.0
    %431 = vmatpush1.msra.mxu0 0.0
    %432 = vmatprep.subr.mxu0 0.0
    %433 = vmatpush1.msra.mxu0 0.0
    %434 = vmatprep.subr.mxu0 0.0
    %435 = vmatpush1.msra.mxu0 0.0
    %436 = vmatprep.subr.mxu0 0.0
    %437 = vmatpush1.msra.mxu0 0.0
    %438 = vmatprep.subr.mxu0 0.0
    %439 = vmatpush1.msra.mxu0 %v396
    %440 = vmatprep.subr.mxu0 0.0
    %441 = vmatpush2.msra.mxu0 0.0
    %442 = vmatprep.subr.mxu0 0.0
    %443 = vmatpush2.msra.mxu0 0.0
    %444 = vmatprep.subr.mxu0 0.0
    %445 = vmatpush2.msra.mxu0 0.0
    %446 = vmatprep.subr.mxu0 0.0
    %447 = vmatpush2.msra.mxu0 0.0
    %448 = vmatprep.subr.mxu0 0.0
    %449 = vmatpush2.msra.mxu0 0.0
    %450 = vmatprep.subr.mxu0 0.0
    %451 = vmatpush2.msra.mxu0 0.0
    %452 = vmatprep.subr.mxu0 0.0
    %453 = vmatpush2.msra.mxu0 0.0
    %454 = vmatprep.subr.mxu0 0.0
    %455 = vmatpush2.msra.mxu0 0.0
    %456 = vmatprep.subr.mxu0 0.0
    %457 = vmatpush2.msra.mxu0 0.0
    %458 = vmatprep.subr.mxu0 0.0
    %459 = vmatpush2.msra.mxu0 0.0
    %460 = vmatprep.subr.mxu0 0.0
    %461 = vmatpush2.msra.mxu0 0.0
    %462 = vmatprep.subr.mxu0 0.0
    %463 = vmatpush2.msra.mxu0 0.0
    %464 = vmatprep.subr.mxu0 0.0
    %465 = vmatpush2.msra.mxu0 0.0
    %466 = vmatprep.subr.mxu0 0.0
    %467 = vmatpush2.msra.mxu0 0.0
    %468 = vmatprep.subr.mxu0 0.0
    %469 = vmatpush2.msra.mxu0 0.0
    %470 = vmatprep.subr.mxu0 0.0
    %471 = vmatpush2.msra.mxu0 0.0
    %472 = vmatprep.mubr.f32.mxu0 0.0
    %473 = vmatmul.mubr.f32.gmra.mxu0 %v403
    %v474 = vpop.f32.mrf.mxu0
    %v475 = vadd.f32 %v401, %v474
    %v476 = vpop.f32.mrf.mxu0
    %477 = vmatprep.mubr.f32.mxu0 0.0
    %478 = vmatmul.mubr.f32.gmra.mxu0 %v406
    %v479 = vpop.f32.mrf.mxu0
    %v480 = vadd.f32 %v401, %v479
    %v481 = vpop.f32.mrf.mxu0
    %482 = vdwg.mxu0
    %v483 = vmul.f32 %v475, %v475
    %v484 = vmul.f32 %v480, %v480
    %v485 = vsel %vm34, %v483, 0.0
    %486 = vadd.xlane.f32.xlu0 %v485
    %v487 = vpop.xlane.xlu0 %486
    %vm488 = vcmask 125952
    %v489 = vsel %vm488, %v484, 0.0
    %490 = vadd.xlane.f32.xlu0 %v489
    %v491 = vpop.xlane.xlu0 %490
    %v492 = vmax.f32 %v487, 1e-24
    %v493 = vmax.f32 %v491, 1e-24
    %v494 = vrsqrt.pop %v492
    %v495 = vrsqrt.pop %v493
    %v496 = vmul.f32 %v475, %v494
    %v497 = vmul.f32 %v480, %v495
    %v498 = vld [vmem:[%s5 + $0x2b8] sm:$0x7]
    %v499 = vld [vmem:[%s5 + $0x88] sm:$0xff]
    %v500 = vld [vmem:[%s5 + $0x90] sm:$0xff]
    %v501 = vld [vmem:[%s5 + $0x98] sm:$0xff]
    %v502 = vld [vmem:[%s5 + $0xa0] sm:$0xff]
    %v503 = vld [vmem:[%s5 + $0xa8] sm:$0xff]
    %v504 = vld [vmem:[%s5 + $0xb0] sm:$0xff]
    %v505 = vld [vmem:[%s5 + $0x108] sm:$0xff]
    %v506 = vld [vmem:[%s5 + $0x110] sm:$0xff]
    %v507 = vld [vmem:[%s5 + $0x118] sm:$0xff]
    %v508 = vld [vmem:[%s5 + $0x120] sm:$0xff]
    %v509 = vld [vmem:[%s5 + $0x128] sm:$0xf]
    %v510 = vld [vmem:[%s5 + $0x18] sm:$0x1]
    %v511 = vld [vmem:[%s5 + $0xc8] sm:$0x1]
    %v512 = vld [vmem:[%s5 + $0x130] sm:$0xff]
    %v513 = vld [vmem:[%s5 + $0x138] sm:$0xff]
    %v515 = vsel %vm34, %v313, 0
    %v518 = vsel %vm34, %v314, 0
    %520 = vmatprep.subr.mxu0 0.0
    %521 = vmatpush1.msra.mxu0 0.0
    %522 = vmatprep.subr.mxu0 0.0
    %523 = vmatpush1.msra.mxu0 0.0
    %524 = vmatprep.subr.mxu0 0.0
    %525 = vmatpush1.msra.mxu0 0.0
    %526 = vmatprep.subr.mxu0 0.0
    %527 = vmatpush1.msra.mxu0 0.0
    %528 = vmatprep.subr.mxu0 0.0
    %529 = vmatpush1.msra.mxu0 0.0
    %530 = vmatprep.subr.mxu0 0.0
    %531 = vmatpush1.msra.mxu0 0.0
    %532 = vmatprep.subr.mxu0 0.0
    %533 = vmatpush1.msra.mxu0 0.0
    %534 = vmatprep.subr.mxu0 0.0
    %535 = vmatpush1.msra.mxu0 0.0
    %536 = vmatprep.subr.mxu0 0.0
    %537 = vmatpush1.msra.mxu0 0.0
    %538 = vmatprep.subr.mxu0 0.0
    %539 = vmatpush1.msra.mxu0 0.0
    %540 = vmatprep.subr.mxu0 0.0
    %541 = vmatpush1.msra.mxu0 0.0
    %542 = vmatprep.subr.mxu0 0.0
    %543 = vmatpush1.msra.mxu0 0.0
    %544 = vmatprep.subr.mxu0 0.0
    %545 = vmatpush1.msra.mxu0 0.0
    %546 = vmatprep.subr.mxu0 0.0
    %547 = vmatpush1.msra.mxu0 0.0
    %548 = vmatprep.subr.mxu0 0.0
    %549 = vmatpush1.msra.mxu0 %v513
    %550 = vmatprep.subr.mxu0 0.0
    %551 = vmatpush1.msra.mxu0 %v512
    %552 = vmatprep.subr.mxu0 0.0
    %553 = vmatpush2.msra.mxu0 0.0
    %554 = vmatprep.subr.mxu0 0.0
    %555 = vmatpush2.msra.mxu0 0.0
    %556 = vmatprep.subr.mxu0 0.0
    %557 = vmatpush2.msra.mxu0 0.0
    %558 = vmatprep.subr.mxu0 0.0
    %559 = vmatpush2.msra.mxu0 0.0
    %560 = vmatprep.subr.mxu0 0.0
    %561 = vmatpush2.msra.mxu0 0.0
    %562 = vmatprep.subr.mxu0 0.0
    %563 = vmatpush2.msra.mxu0 0.0
    %564 = vmatprep.subr.mxu0 0.0
    %565 = vmatpush2.msra.mxu0 0.0
    %566 = vmatprep.subr.mxu0 0.0
    %567 = vmatpush2.msra.mxu0 0.0
    %568 = vmatprep.subr.mxu0 0.0
    %569 = vmatpush2.msra.mxu0 0.0
    %570 = vmatprep.subr.mxu0 0.0
    %571 = vmatpush2.msra.mxu0 0.0
    %572 = vmatprep.subr.mxu0 0.0
    %573 = vmatpush2.msra.mxu0 0.0
    %574 = vmatprep.subr.mxu0 0.0
    %575 = vmatpush2.msra.mxu0 0.0
    %576 = vmatprep.subr.mxu0 0.0
    %577 = vmatpush2.msra.mxu0 0.0
    %578 = vmatprep.subr.mxu0 0.0
    %579 = vmatpush2.msra.mxu0 0.0
    %580 = vmatprep.subr.mxu0 0.0
    %581 = vmatpush2.msra.mxu0 0.0
    %582 = vmatprep.subr.mxu0 0.0
    %583 = vmatpush2.msra.mxu0 0.0
    %584 = vmatprep.mubr.f32.mxu0 0.0
    %585 = vmatmul.mubr.f32.gmra.mxu0 %v515
    %v586 = vpop.f32.mrf.mxu0
    %v587 = vadd.f32 0.0, %v586
    %v588 = vpop.f32.mrf.mxu0
    %589 = vmatprep.mubr.f32.mxu0 0.0
    %590 = vmatmul.mubr.f32.gmra.mxu0 %v518
    %v591 = vpop.f32.mrf.mxu0
    %v592 = vadd.f32 0.0, %v591
    %v593 = vpop.f32.mrf.mxu0
    %594 = vdwg.mxu0
    %v595 = vld [vmem:[%s5 + $0x140] sm:$0xff]
    %v596 = vld [vmem:[%s5 + $0x148] sm:$0xff]
    %v597 = vld [vmem:[%s5 + $0x150] sm:$0xff]
    %v598 = vld [vmem:[%s5 + $0x158] sm:$0xff]
    %v599 = vld [vmem:[%s5 + $0x160] sm:$0xff]
    %v600 = vld [vmem:[%s5 + $0x168] sm:$0xff]
    %vm601 = vcmask 392192
    %v603 = vsel %vm601, %v595, 0
    %v606 = vsel %vm601, %v596, 0
    %v609 = vsel %vm601, %v597, 0
    %v612 = vsel %vm601, %v598, 0
    %v615 = vsel %vm601, %v599, 0
    %v618 = vsel %vm601, %v600, 0
    %v621 = vsel %vm601, %v587, 0
    %v624 = vsel %vm601, %v592, 0
    %626 = vmatprep.subr.mxu0 0.0
    %627 = vmatpush1.xpose.msra.mxu0 0.0
    %628 = vmatprep.subr.mxu0 0.0
    %629 = vmatpush1.xpose.msra.mxu0 0.0
    %630 = vmatprep.subr.mxu0 0.0
    %631 = vmatpush1.xpose.msra.mxu0 0.0
    %632 = vmatprep.subr.mxu0 0.0
    %633 = vmatpush1.xpose.msra.mxu0 0.0
    %634 = vmatprep.subr.mxu0 0.0
    %635 = vmatpush1.xpose.msra.mxu0 0.0
    %636 = vmatprep.subr.mxu0 0.0
    %637 = vmatpush1.xpose.msra.mxu0 0.0
    %638 = vmatprep.subr.mxu0 0.0
    %639 = vmatpush1.xpose.msra.mxu0 0.0
    %640 = vmatprep.subr.mxu0 0.0
    %641 = vmatpush1.xpose.msra.mxu0 0.0
    %642 = vmatprep.subr.mxu0 0.0
    %643 = vmatpush1.xpose.msra.mxu0 0.0
    %644 = vmatprep.subr.mxu0 0.0
    %645 = vmatpush1.xpose.msra.mxu0 0.0
    %646 = vmatprep.subr.mxu0 0.0
    %647 = vmatpush1.xpose.msra.mxu0 0.0
    %648 = vmatprep.subr.mxu0 0.0
    %649 = vmatpush1.xpose.msra.mxu0 0.0
    %650 = vmatprep.subr.mxu0 0.0
    %651 = vmatpush1.xpose.msra.mxu0 0.0
    %652 = vmatprep.subr.mxu0 0.0
    %653 = vmatpush1.xpose.msra.mxu0 0.0
    %654 = vmatprep.subr.mxu0 0.0
    %655 = vmatpush1.xpose.msra.mxu0 %v624
    %656 = vmatprep.subr.mxu0 0.0
    %657 = vmatpush1.xpose.msra.mxu0 %v621
    %658 = vmatprep.subr.mxu0 0.0
    %659 = vmatpush2.xpose.msra.mxu0 0.0
    %660 = vmatprep.subr.mxu0 0.0
    %661 = vmatpush2.xpose.msra.mxu0 0.0
    %662 = vmatprep.subr.mxu0 0.0
    %663 = vmatpush2.xpose.msra.mxu0 0.0
    %664 = vmatprep.subr.mxu0 0.0
    %665 = vmatpush2.xpose.msra.mxu0 0.0
    %666 = vmatprep.subr.mxu0 0.0
    %667 = vmatpush2.xpose.msra.mxu0 0.0
    %668 = vmatprep.subr.mxu0 0.0
    %669 = vmatpush2.xpose.msra.mxu0 0.0
    %670 = vmatprep.subr.mxu0 0.0
    %671 = vmatpush2.xpose.msra.mxu0 0.0
    %672 = vmatprep.subr.mxu0 0.0
    %673 = vmatpush2.xpose.msra.mxu0 0.0
    %674 = vmatprep.subr.mxu0 0.0
    %675 = vmatpush2.xpose.msra.mxu0 0.0
    %676 = vmatprep.subr.mxu0 0.0
    %677 = vmatpush2.xpose.msra.mxu0 0.0
    %678 = vmatprep.subr.mxu0 0.0
    %679 = vmatpush2.xpose.msra.mxu0 0.0
    %680 = vmatprep.subr.mxu0 0.0
    %681 = vmatpush2.xpose.msra.mxu0 0.0
    %682 = vmatprep.subr.mxu0 0.0
    %683 = vmatpush2.xpose.msra.mxu0 0.0
    %684 = vmatprep.subr.mxu0 0.0
    %685 = vmatpush2.xpose.msra.mxu0 0.0
    %686 = vmatprep.subr.mxu0 0.0
    %687 = vmatpush2.xpose.msra.mxu0 0.0
    %688 = vmatprep.subr.mxu0 0.0
    %689 = vmatpush2.xpose.msra.mxu0 0.0
    %690 = vmatprep.mubr.f32.mxu0 0.0
    %691 = vmatmul.mubr.f32.gmra.mxu0 %v603
    %v692 = vpop.f32.mrf.mxu0
    %v693 = vadd.f32 0.0, %v692
    %v694 = vpop.f32.mrf.mxu0
    %695 = vmatprep.mubr.f32.mxu0 0.0
    %696 = vmatmul.mubr.f32.gmra.mxu0 %v606
    %v697 = vpop.f32.mrf.mxu0
    %v698 = vadd.f32 0.0, %v697
    %v699 = vpop.f32.mrf.mxu0
    %700 = vmatprep.mubr.f32.mxu0 0.0
    %701 = vmatmul.mubr.f32.gmra.mxu0 %v609
    %v702 = vpop.f32.mrf.mxu0
    %v703 = vadd.f32 0.0, %v702
    %v704 = vpop.f32.mrf.mxu0
    %705 = vmatprep.mubr.f32.mxu0 0.0
    %706 = vmatmul.mubr.f32.gmra.mxu0 %v612
    %v707 = vpop.f32.mrf.mxu0
    %v708 = vadd.f32 0.0, %v707
    %v709 = vpop.f32.mrf.mxu0
    %710 = vmatprep.mubr.f32.mxu0 0.0
    %711 = vmatmul.mubr.f32.gmra.mxu0 %v615
    %v712 = vpop.f32.mrf.mxu0
    %v713 = vadd.f32 0.0, %v712
    %v714 = vpop.f32.mrf.mxu0
    %715 = vmatprep.mubr.f32.mxu0 0.0
    %716 = vmatmul.mubr.f32.gmra.mxu0 %v618
    %v717 = vpop.f32.mrf.mxu0
    %v718 = vadd.f32 0.0, %v717
    %v719 = vpop.f32.mrf.mxu0
    %720 = vdwg.mxu0
    %v722 = vsel %vm34, %v499, 0
    %v725 = vsel %vm34, %v500, 0
    %v728 = vsel %vm34, %v501, 0
    %v731 = vsel %vm34, %v502, 0
    %v734 = vsel %vm34, %v503, 0
    %v737 = vsel %vm34, %v504, 0
    %739 = vmatprep.subr.mxu0 0.0
    %740 = vmatpush1.msra.mxu0 0.0
    %741 = vmatprep.subr.mxu0 0.0
    %742 = vmatpush1.msra.mxu0 0.0
    %743 = vmatprep.subr.mxu0 0.0
    %744 = vmatpush1.msra.mxu0 0.0
    %745 = vmatprep.subr.mxu0 0.0
    %746 = vmatpush1.msra.mxu0 0.0
    %747 = vmatprep.subr.mxu0 0.0
    %748 = vmatpush1.msra.mxu0 0.0
    %749 = vmatprep.subr.mxu0 0.0
    %750 = vmatpush1.msra.mxu0 0.0
    %751 = vmatprep.subr.mxu0 0.0
    %752 = vmatpush1.msra.mxu0 0.0
    %753 = vmatprep.subr.mxu0 0.0
    %754 = vmatpush1.msra.mxu0 0.0
    %755 = vmatprep.subr.mxu0 0.0
    %756 = vmatpush1.msra.mxu0 0.0
    %757 = vmatprep.subr.mxu0 0.0
    %758 = vmatpush1.msra.mxu0 0.0
    %759 = vmatprep.subr.mxu0 0.0
    %760 = vmatpush1.msra.mxu0 0.0
    %761 = vmatprep.subr.mxu0 0.0
    %762 = vmatpush1.msra.mxu0 0.0
    %763 = vmatprep.subr.mxu0 0.0
    %764 = vmatpush1.msra.mxu0 0.0
    %765 = vmatprep.subr.mxu0 0.0
    %766 = vmatpush1.msra.mxu0 0.0
    %767 = vmatprep.subr.mxu0 0.0
    %768 = vmatpush1.msra.mxu0 %v592
    %769 = vmatprep.subr.mxu0 0.0
    %770 = vmatpush1.msra.mxu0 %v587
    %771 = vmatprep.subr.mxu0 0.0
    %772 = vmatpush2.msra.mxu0 0.0
    %773 = vmatprep.subr.mxu0 0.0
    %774 = vmatpush2.msra.mxu0 0.0
    %775 = vmatprep.subr.mxu0 0.0
    %776 = vmatpush2.msra.mxu0 0.0
    %777 = vmatprep.subr.mxu0 0.0
    %778 = vmatpush2.msra.mxu0 0.0
    %779 = vmatprep.subr.mxu0 0.0
    %780 = vmatpush2.msra.mxu0 0.0
    %781 = vmatprep.subr.mxu0 0.0
    %782 = vmatpush2.msra.mxu0 0.0
    %783 = vmatprep.subr.mxu0 0.0
    %784 = vmatpush2.msra.mxu0 0.0
    %785 = vmatprep.subr.mxu0 0.0
    %786 = vmatpush2.msra.mxu0 0.0
    %787 = vmatprep.subr.mxu0 0.0
    %788 = vmatpush2.msra.mxu0 0.0
    %789 = vmatprep.subr.mxu0 0.0
    %790 = vmatpush2.msra.mxu0 0.0
    %791 = vmatprep.subr.mxu0 0.0
    %792 = vmatpush2.msra.mxu0 0.0
    %793 = vmatprep.subr.mxu0 0.0
    %794 = vmatpush2.msra.mxu0 0.0
    %795 = vmatprep.subr.mxu0 0.0
    %796 = vmatpush2.msra.mxu0 0.0
    %797 = vmatprep.subr.mxu0 0.0
    %798 = vmatpush2.msra.mxu0 0.0
    %799 = vmatprep.subr.mxu0 0.0
    %800 = vmatpush2.msra.mxu0 0.0
    %801 = vmatprep.subr.mxu0 0.0
    %802 = vmatpush2.msra.mxu0 0.0
    %803 = vmatprep.mubr.f32.mxu0 0.0
    %804 = vmatmul.mubr.f32.gmra.mxu0 %v722
    %v805 = vpop.f32.mrf.mxu0
    %v806 = vadd.f32 0.0, %v805
    %v807 = vpop.f32.mrf.mxu0
    %808 = vmatprep.mubr.f32.mxu0 0.0
    %809 = vmatmul.mubr.f32.gmra.mxu0 %v725
    %v810 = vpop.f32.mrf.mxu0
    %v811 = vadd.f32 0.0, %v810
    %v812 = vpop.f32.mrf.mxu0
    %813 = vmatprep.mubr.f32.mxu0 0.0
    %814 = vmatmul.mubr.f32.gmra.mxu0 %v728
    %v815 = vpop.f32.mrf.mxu0
    %v816 = vadd.f32 0.0, %v815
    %v817 = vpop.f32.mrf.mxu0
    %818 = vmatprep.mubr.f32.mxu0 0.0
    %819 = vmatmul.mubr.f32.gmra.mxu0 %v731
    %v820 = vpop.f32.mrf.mxu0
    %v821 = vadd.f32 0.0, %v820
    %v822 = vpop.f32.mrf.mxu0
    %823 = vmatprep.mubr.f32.mxu0 0.0
    %824 = vmatmul.mubr.f32.gmra.mxu0 %v734
    %v825 = vpop.f32.mrf.mxu0
    %v826 = vadd.f32 0.0, %v825
    %v827 = vpop.f32.mrf.mxu0
    %828 = vmatprep.mubr.f32.mxu0 0.0
    %829 = vmatmul.mubr.f32.gmra.mxu0 %v737
    %v830 = vpop.f32.mrf.mxu0
    %v831 = vadd.f32 0.0, %v830
    %v832 = vpop.f32.mrf.mxu0
    %833 = vdwg.mxu0
    %v834 = vld [vmem:[%s5 + $0x170] sm:$0xff]
    %v835 = vld [vmem:[%s5 + $0x178] sm:$0xff]
    %v836 = vld [vmem:[%s5 + $0x180] sm:$0xff]
    %v837 = vld [vmem:[%s5 + $0x188] sm:$0xff]
    %v838 = vld [vmem:[%s5 + $0x190] sm:$0xff]
    %v839 = vld [vmem:[%s5 + $0x198] sm:$0xff]
    %v840 = vmul.f32 %v806, %v834
    %v841 = vmul.f32 %v811, %v835
    %v842 = vmul.f32 %v816, %v836
    %v843 = vmul.f32 %v821, %v837
    %v844 = vmul.f32 %v826, %v838
    %v845 = vmul.f32 %v831, %v839
    %v846 = vsel %vm601, %v840, 0.0
    %847 = vadd.xlane.f32.xlu0 %v846
    %v848 = vpop.xlane.xlu0 %847
    %v849 = vsel %vm601, %v841, 0.0
    %850 = vadd.xlane.f32.xlu0 %v849
    %v851 = vpop.xlane.xlu0 %850
    %v852 = vsel %vm601, %v842, 0.0
    %853 = vadd.xlane.f32.xlu0 %v852
    %v854 = vpop.xlane.xlu0 %853
    %v855 = vsel %vm601, %v843, 0.0
    %856 = vadd.xlane.f32.xlu0 %v855
    %v857 = vpop.xlane.xlu0 %856
    %v858 = vsel %vm601, %v844, 0.0
    %859 = vadd.xlane.f32.xlu0 %v858
    %v860 = vpop.xlane.xlu0 %859
    %v861 = vsel %vm601, %v845, 0.0
    %862 = vadd.xlane.f32.xlu0 %v861
    %v863 = vpop.xlane.xlu0 %862
    %v864 = vadd.f32 %v848, %v693
    %v865 = vadd.f32 %v851, %v698
    %v866 = vadd.f32 %v854, %v703
    %v867 = vadd.f32 %v857, %v708
    %v868 = vadd.f32 %v860, %v713
    %v869 = vadd.f32 %v863, %v718
    %vm870 = vcmp.gt.f32.partialorder %v864, 0.0
    %vm871 = vcmp.gt.f32.partialorder %v865, 0.0
    %vm872 = vcmp.gt.f32.partialorder %v866, 0.0
    %vm873 = vcmp.gt.f32.partialorder %v867, 0.0
    %vm874 = vcmp.gt.f32.partialorder %v868, 0.0
    %vm875 = vcmp.gt.f32.partialorder %v869, 0.0
    %v876 = vmul.f32 %v864, 0.2
    %v877 = vmul.f32 %v865, 0.2
    %v878 = vmul.f32 %v866, 0.2
    %v879 = vmul.f32 %v867, 0.2
    %v880 = vmul.f32 %v868, 0.2
    %v881 = vmul.f32 %v869, 0.2
    %v882 = vsel %vm870, %v864, %v876
    %v883 = vsel %vm871, %v865, %v877
    %v884 = vsel %vm872, %v866, %v878
    %v885 = vsel %vm873, %v867, %v879
    %v886 = vsel %vm874, %v868, %v880
    %v887 = vsel %vm875, %v869, %v881
    %888 = vmatprep.subr.mxu0 0.0
    %889 = vmatpush1.msra.mxu0 0.0
    %890 = vmatprep.subr.mxu0 0.0
    %891 = vmatpush1.msra.mxu0 0.0
    %892 = vmatprep.subr.mxu0 0.0
    %893 = vmatpush1.msra.mxu0 0.0
    %894 = vmatprep.subr.mxu0 0.0
    %895 = vmatpush1.msra.mxu0 0.0
    %896 = vmatprep.subr.mxu0 0.0
    %897 = vmatpush1.msra.mxu0 0.0
    %898 = vmatprep.subr.mxu0 0.0
    %899 = vmatpush1.msra.mxu0 0.0
    %900 = vmatprep.subr.mxu0 0.0
    %901 = vmatpush1.msra.mxu0 0.0
    %902 = vmatprep.subr.mxu0 0.0
    %903 = vmatpush1.msra.mxu0 0.0
    %904 = vmatprep.subr.mxu0 0.0
    %905 = vmatpush1.msra.mxu0 0.0
    %906 = vmatprep.subr.mxu0 0.0
    %907 = vmatpush1.msra.mxu0 0.0
    %908 = vmatprep.subr.mxu0 0.0
    %909 = vmatpush1.msra.mxu0 0.0
    %910 = vmatprep.subr.mxu0 0.0
    %911 = vmatpush1.msra.mxu0 0.0
    %912 = vmatprep.subr.mxu0 0.0
    %913 = vmatpush1.msra.mxu0 0.0
    %914 = vmatprep.subr.mxu0 0.0
    %915 = vmatpush1.msra.mxu0 0.0
    %916 = vmatprep.subr.mxu0 0.0
    %917 = vmatpush1.msra.mxu0 %v29
    %918 = vmatprep.subr.mxu0 0.0
    %919 = vmatpush1.msra.mxu0 %v28
    %920 = vmatprep.subr.mxu0 0.0
    %921 = vmatpush2.msra.mxu0 0.0
    %922 = vmatprep.subr.mxu0 0.0
    %923 = vmatpush2.msra.mxu0 0.0
    %924 = vmatprep.subr.mxu0 0.0
    %925 = vmatpush2.msra.mxu0 0.0
    %926 = vmatprep.subr.mxu0 0.0
    %927 = vmatpush2.msra.mxu0 0.0
    %928 = vmatprep.subr.mxu0 0.0
    %929 = vmatpush2.msra.mxu0 0.0
    %930 = vmatprep.subr.mxu0 0.0
    %931 = vmatpush2.msra.mxu0 0.0
    %932 = vmatprep.subr.mxu0 0.0
    %933 = vmatpush2.msra.mxu0 0.0
    %934 = vmatprep.subr.mxu0 0.0
    %935 = vmatpush2.msra.mxu0 0.0
    %936 = vmatprep.subr.mxu0 0.0
    %937 = vmatpush2.msra.mxu0 0.0
    %938 = vmatprep.subr.mxu0 0.0
    %939 = vmatpush2.msra.mxu0 0.0
    %940 = vmatprep.subr.mxu0 0.0
    %941 = vmatpush2.msra.mxu0 0.0
    %942 = vmatprep.subr.mxu0 0.0
    %943 = vmatpush2.msra.mxu0 0.0
    %944 = vmatprep.subr.mxu0 0.0
    %945 = vmatpush2.msra.mxu0 0.0
    %946 = vmatprep.subr.mxu0 0.0
    %947 = vmatpush2.msra.mxu0 0.0
    %948 = vmatprep.subr.mxu0 0.0
    %949 = vmatpush2.msra.mxu0 0.0
    %950 = vmatprep.subr.mxu0 0.0
    %951 = vmatpush2.msra.mxu0 0.0
    %952 = vmatprep.mubr.f32.mxu0 0.0
    %953 = vmatmul.mubr.f32.gmra.mxu0 %v722
    %v954 = vpop.f32.mrf.mxu0
    %v955 = vadd.f32 0.0, %v954
    %v956 = vpop.f32.mrf.mxu0
    %957 = vmatprep.mubr.f32.mxu0 0.0
    %958 = vmatmul.mubr.f32.gmra.mxu0 %v725
    %v959 = vpop.f32.mrf.mxu0
    %v960 = vadd.f32 0.0, %v959
    %v961 = vpop.f32.mrf.mxu0
    %962 = vmatprep.mubr.f32.mxu0 0.0
    %963 = vmatmul.mubr.f32.gmra.mxu0 %v728
    %v964 = vpop.f32.mrf.mxu0
    %v965 = vadd.f32 0.0, %v964
    %v966 = vpop.f32.mrf.mxu0
    %967 = vmatprep.mubr.f32.mxu0 0.0
    %968 = vmatmul.mubr.f32.gmra.mxu0 %v731
    %v969 = vpop.f32.mrf.mxu0
    %v970 = vadd.f32 0.0, %v969
    %v971 = vpop.f32.mrf.mxu0
    %972 = vmatprep.mubr.f32.mxu0 0.0
    %973 = vmatmul.mubr.f32.gmra.mxu0 %v734
    %v974 = vpop.f32.mrf.mxu0
    %v975 = vadd.f32 0.0, %v974
    %v976 = vpop.f32.mrf.mxu0
    %977 = vmatprep.mubr.f32.mxu0 0.0
    %978 = vmatmul.mubr.f32.gmra.mxu0 %v737
    %v979 = vpop.f32.mrf.mxu0
    %v980 = vadd.f32 0.0, %v979
    %v981 = vpop.f32.mrf.mxu0
    %982 = vdwg.mxu0
    %vm983 = vcmp.gt.f32.partialorder %v955, 0.0
    %vm984 = vcmp.gt.f32.partialorder %v960, 0.0
    %vm985 = vcmp.gt.f32.partialorder %v965, 0.0
    %vm986 = vcmp.gt.f32.partialorder %v970, 0.0
    %vm987 = vcmp.gt.f32.partialorder %v975, 0.0
    %vm988 = vcmp.gt.f32.partialorder %v980, 0.0
    %v989 = vsel %vm983, %v882, -1e+30
    %v990 = vsel %vm984, %v883, -1e+30
    %v991 = vsel %vm985, %v884, -1e+30
    %v992 = vsel %vm986, %v885, -1e+30
    %v993 = vsel %vm987, %v886, -1e+30
    %v994 = vsel %vm988, %v887, -1e+30
    %v995 = vsel %vm34, %v989, -inf
    %996 = vmax.xlane.f32.xlu0 %v995
    %v997 = vpop.xlane.xlu0 %996
    %v998 = vsel %vm34, %v990, -inf
    %999 = vmax.xlane.f32.xlu0 %v998
    %v1000 = vpop.xlane.xlu0 %999
    %v1001 = vsel %vm34, %v991, -inf
    %1002 = vmax.xlane.f32.xlu0 %v1001
    %v1003 = vpop.xlane.xlu0 %1002
    %v1004 = vsel %vm34, %v992, -inf
    %1005 = vmax.xlane.f32.xlu0 %v1004
    %v1006 = vpop.xlane.xlu0 %1005
    %v1007 = vsel %vm34, %v993, -inf
    %1008 = vmax.xlane.f32.xlu0 %v1007
    %v1009 = vpop.xlane.xlu0 %1008
    %v1010 = vsel %vm34, %v994, -inf
    %1011 = vmax.xlane.f32.xlu0 %v1010
    %v1012 = vpop.xlane.xlu0 %1011
    %v1013 = vsub.f32 %v989, %v997
    %v1014 = vsub.f32 %v990, %v1000
    %v1015 = vsub.f32 %v991, %v1003
    %v1016 = vsub.f32 %v992, %v1006
    %v1017 = vsub.f32 %v993, %v1009
    %v1018 = vsub.f32 %v994, %v1012
    %v1019 = vmul.f32 %v1013, 1.442695
    %v1020 = vpow.pop %v1019
    %v1021 = vmul.f32 %v1014, 1.442695
    %v1022 = vpow.pop %v1021
    %v1023 = vmul.f32 %v1015, 1.442695
    %v1024 = vpow.pop %v1023
    %v1025 = vmul.f32 %v1016, 1.442695
    %v1026 = vpow.pop %v1025
    %v1027 = vmul.f32 %v1017, 1.442695
    %v1028 = vpow.pop %v1027
    %v1029 = vmul.f32 %v1018, 1.442695
    %v1030 = vpow.pop %v1029
    %v1031 = vsel %vm983, %v1020, 0.0
    %v1032 = vsel %vm984, %v1022, 0.0
    %v1033 = vsel %vm985, %v1024, 0.0
    %v1034 = vsel %vm986, %v1026, 0.0
    %v1035 = vsel %vm987, %v1028, 0.0
    %v1036 = vsel %vm988, %v1030, 0.0
    %v1037 = vsel %vm34, %v1031, 0.0
    %1038 = vadd.xlane.f32.xlu0 %v1037
    %v1039 = vpop.xlane.xlu0 %1038
    %v1040 = vsel %vm34, %v1032, 0.0
    %1041 = vadd.xlane.f32.xlu0 %v1040
    %v1042 = vpop.xlane.xlu0 %1041
    %v1043 = vsel %vm34, %v1033, 0.0
    %1044 = vadd.xlane.f32.xlu0 %v1043
    %v1045 = vpop.xlane.xlu0 %1044
    %v1046 = vsel %vm34, %v1034, 0.0
    %1047 = vadd.xlane.f32.xlu0 %v1046
    %v1048 = vpop.xlane.xlu0 %1047
    %v1049 = vsel %vm34, %v1035, 0.0
    %1050 = vadd.xlane.f32.xlu0 %v1049
    %v1051 = vpop.xlane.xlu0 %1050
    %v1052 = vsel %vm34, %v1036, 0.0
    %1053 = vadd.xlane.f32.xlu0 %v1052
    %v1054 = vpop.xlane.xlu0 %1053
    %v1055 = vmax.f32 %v1039, 1e-12
    %v1056 = vmax.f32 %v1042, 1e-12
    %v1057 = vmax.f32 %v1045, 1e-12
    %v1058 = vmax.f32 %v1048, 1e-12
    %v1059 = vmax.f32 %v1051, 1e-12
    %v1060 = vmax.f32 %v1054, 1e-12
    %v1061 = vrcp.pop %v1055
    %v1062 = vmul.f32 %v1031, %v1061
    %v1063 = vrcp.pop %v1056
    %v1064 = vmul.f32 %v1032, %v1063
    %v1065 = vrcp.pop %v1057
    %v1066 = vmul.f32 %v1033, %v1065
    %v1067 = vrcp.pop %v1058
    %v1068 = vmul.f32 %v1034, %v1067
    %v1069 = vrcp.pop %v1059
    %v1070 = vmul.f32 %v1035, %v1069
    %v1071 = vrcp.pop %v1060
    %v1072 = vmul.f32 %v1036, %v1071
    %v1074 = vsel %vm34, %v1062, 0
    %v1077 = vsel %vm34, %v1064, 0
    %v1080 = vsel %vm34, %v1066, 0
    %v1083 = vsel %vm34, %v1068, 0
    %v1086 = vsel %vm34, %v1070, 0
    %v1089 = vsel %vm34, %v1072, 0
    %1091 = vmatprep.subr.mxu0 0.0
    %1092 = vmatpush1.msra.mxu0 0.0
    %1093 = vmatprep.subr.mxu0 0.0
    %1094 = vmatpush1.msra.mxu0 0.0
    %1095 = vmatprep.subr.mxu0 0.0
    %1096 = vmatpush1.msra.mxu0 0.0
    %1097 = vmatprep.subr.mxu0 0.0
    %1098 = vmatpush1.msra.mxu0 0.0
    %1099 = vmatprep.subr.mxu0 0.0
    %1100 = vmatpush1.msra.mxu0 0.0
    %1101 = vmatprep.subr.mxu0 0.0
    %1102 = vmatpush1.msra.mxu0 0.0
    %1103 = vmatprep.subr.mxu0 0.0
    %1104 = vmatpush1.msra.mxu0 0.0
    %1105 = vmatprep.subr.mxu0 0.0
    %1106 = vmatpush1.msra.mxu0 0.0
    %1107 = vmatprep.subr.mxu0 0.0
    %1108 = vmatpush1.msra.mxu0 0.0
    %1109 = vmatprep.subr.mxu0 0.0
    %1110 = vmatpush1.msra.mxu0 0.0
    %1111 = vmatprep.subr.mxu0 0.0
    %1112 = vmatpush1.msra.mxu0 0.0
    %1113 = vmatprep.subr.mxu0 0.0
    %1114 = vmatpush1.msra.mxu0 0.0
    %1115 = vmatprep.subr.mxu0 0.0
    %1116 = vmatpush1.msra.mxu0 0.0
    %1117 = vmatprep.subr.mxu0 0.0
    %1118 = vmatpush1.msra.mxu0 0.0
    %1119 = vmatprep.subr.mxu0 0.0
    %1120 = vmatpush1.msra.mxu0 %v592
    %1121 = vmatprep.subr.mxu0 0.0
    %1122 = vmatpush1.msra.mxu0 %v587
    %1123 = vmatprep.subr.mxu0 0.0
    %1124 = vmatpush2.msra.mxu0 0.0
    %1125 = vmatprep.subr.mxu0 0.0
    %1126 = vmatpush2.msra.mxu0 0.0
    %1127 = vmatprep.subr.mxu0 0.0
    %1128 = vmatpush2.msra.mxu0 0.0
    %1129 = vmatprep.subr.mxu0 0.0
    %1130 = vmatpush2.msra.mxu0 0.0
    %1131 = vmatprep.subr.mxu0 0.0
    %1132 = vmatpush2.msra.mxu0 0.0
    %1133 = vmatprep.subr.mxu0 0.0
    %1134 = vmatpush2.msra.mxu0 0.0
    %1135 = vmatprep.subr.mxu0 0.0
    %1136 = vmatpush2.msra.mxu0 0.0
    %1137 = vmatprep.subr.mxu0 0.0
    %1138 = vmatpush2.msra.mxu0 0.0
    %1139 = vmatprep.subr.mxu0 0.0
    %1140 = vmatpush2.msra.mxu0 0.0
    %1141 = vmatprep.subr.mxu0 0.0
    %1142 = vmatpush2.msra.mxu0 0.0
    %1143 = vmatprep.subr.mxu0 0.0
    %1144 = vmatpush2.msra.mxu0 0.0
    %1145 = vmatprep.subr.mxu0 0.0
    %1146 = vmatpush2.msra.mxu0 0.0
    %1147 = vmatprep.subr.mxu0 0.0
    %1148 = vmatpush2.msra.mxu0 0.0
    %1149 = vmatprep.subr.mxu0 0.0
    %1150 = vmatpush2.msra.mxu0 0.0
    %1151 = vmatprep.subr.mxu0 0.0
    %1152 = vmatpush2.msra.mxu0 0.0
    %1153 = vmatprep.subr.mxu0 0.0
    %1154 = vmatpush2.msra.mxu0 0.0
    %1155 = vmatprep.mubr.f32.mxu0 0.0
    %1156 = vmatmul.mubr.f32.gmra.mxu0 %v1074
    %v1157 = vpop.f32.mrf.mxu0
    %v1158 = vadd.f32 0.0, %v1157
    %v1159 = vpop.f32.mrf.mxu0
    %1160 = vmatprep.mubr.f32.mxu0 0.0
    %1161 = vmatmul.mubr.f32.gmra.mxu0 %v1077
    %v1162 = vpop.f32.mrf.mxu0
    %v1163 = vadd.f32 0.0, %v1162
    %v1164 = vpop.f32.mrf.mxu0
    %1165 = vmatprep.mubr.f32.mxu0 0.0
    %1166 = vmatmul.mubr.f32.gmra.mxu0 %v1080
    %v1167 = vpop.f32.mrf.mxu0
    %v1168 = vadd.f32 0.0, %v1167
    %v1169 = vpop.f32.mrf.mxu0
    %1170 = vmatprep.mubr.f32.mxu0 0.0
    %1171 = vmatmul.mubr.f32.gmra.mxu0 %v1083
    %v1172 = vpop.f32.mrf.mxu0
    %v1173 = vadd.f32 0.0, %v1172
    %v1174 = vpop.f32.mrf.mxu0
    %1175 = vmatprep.mubr.f32.mxu0 0.0
    %1176 = vmatmul.mubr.f32.gmra.mxu0 %v1086
    %v1177 = vpop.f32.mrf.mxu0
    %v1178 = vadd.f32 0.0, %v1177
    %v1179 = vpop.f32.mrf.mxu0
    %1180 = vmatprep.mubr.f32.mxu0 0.0
    %1181 = vmatmul.mubr.f32.gmra.mxu0 %v1089
    %v1182 = vpop.f32.mrf.mxu0
    %v1183 = vadd.f32 0.0, %v1182
    %v1184 = vpop.f32.mrf.mxu0
    %1185 = vdwg.mxu0
    %v1186 = vlaneseq
    %v1187 = vshrl.u32 %v1186, 7
    %v1188 = vsub.s32 0, %v1187
    %v1189 = vrot.slane %v498, %v1188
    %v1190 = vmul.f32 %v1158, %v1189
    %v1191 = vmul.f32 %v1163, %v1189
    %v1192 = vlaneseq
    %v1193 = vshrl.u32 %v1192, 7
    %v1194 = vsub.s32 1, %v1193
    %v1195 = vrot.slane %v498, %v1194
    %v1196 = vmul.f32 %v1168, %v1195
    %v1197 = vmul.f32 %v1173, %v1195
    %v1198 = vadd.f32 %v1190, %v1196
    %v1199 = vadd.f32 %v1191, %v1197
    %v1200 = vlaneseq
    %v1201 = vshrl.u32 %v1200, 7
    %v1202 = vsub.s32 2, %v1201
    %v1203 = vrot.slane %v498, %v1202
    %v1204 = vmul.f32 %v1178, %v1203
    %v1205 = vmul.f32 %v1183, %v1203
    %v1206 = vadd.f32 %v1198, %v1204
    %v1207 = vadd.f32 %v1199, %v1205
    %v1208 = vlaneseq
    %v1209 = vshrl.u32 %v1208, 7
    %v1210 = vsub.s32 0, %v1209
    %v1211 = vrot.slane %v510, %v1210
    %v1212 = vadd.f32 %v1211, %v1206
    %v1213 = vadd.f32 %v1211, %v1207
    %v1214 = vld [vmem:[%s5 + $0x1a0] sm:$0xff]
    %v1215 = vld [vmem:[%s5 + $0x1a8] sm:$0xff]
    %1216 = vmatprep.subr.mxu0 0.0
    %1217 = vmatpush1.msra.mxu0 0.0
    %1218 = vmatprep.subr.mxu0 0.0
    %1219 = vmatpush1.msra.mxu0 0.0
    %1220 = vmatprep.subr.mxu0 0.0
    %1221 = vmatpush1.msra.mxu0 0.0
    %1222 = vmatprep.subr.mxu0 0.0
    %1223 = vmatpush1.msra.mxu0 0.0
    %1224 = vmatprep.subr.mxu0 0.0
    %1225 = vmatpush1.msra.mxu0 0.0
    %1226 = vmatprep.subr.mxu0 0.0
    %1227 = vmatpush1.msra.mxu0 0.0
    %1228 = vmatprep.subr.mxu0 0.0
    %1229 = vmatpush1.msra.mxu0 0.0
    %1230 = vmatprep.subr.mxu0 0.0
    %1231 = vmatpush1.msra.mxu0 0.0
    %1232 = vmatprep.subr.mxu0 0.0
    %1233 = vmatpush1.msra.mxu0 0.0
    %1234 = vmatprep.subr.mxu0 0.0
    %1235 = vmatpush1.msra.mxu0 0.0
    %1236 = vmatprep.subr.mxu0 0.0
    %1237 = vmatpush1.msra.mxu0 0.0
    %1238 = vmatprep.subr.mxu0 0.0
    %1239 = vmatpush1.msra.mxu0 0.0
    %1240 = vmatprep.subr.mxu0 0.0
    %1241 = vmatpush1.msra.mxu0 0.0
    %1242 = vmatprep.subr.mxu0 0.0
    %1243 = vmatpush1.msra.mxu0 0.0
    %1244 = vmatprep.subr.mxu0 0.0
    %1245 = vmatpush1.msra.mxu0 %v1215
    %1246 = vmatprep.subr.mxu0 0.0
    %1247 = vmatpush1.msra.mxu0 %v1214
    %1248 = vmatprep.subr.mxu0 0.0
    %1249 = vmatpush2.msra.mxu0 0.0
    %1250 = vmatprep.subr.mxu0 0.0
    %1251 = vmatpush2.msra.mxu0 0.0
    %1252 = vmatprep.subr.mxu0 0.0
    %1253 = vmatpush2.msra.mxu0 0.0
    %1254 = vmatprep.subr.mxu0 0.0
    %1255 = vmatpush2.msra.mxu0 0.0
    %1256 = vmatprep.subr.mxu0 0.0
    %1257 = vmatpush2.msra.mxu0 0.0
    %1258 = vmatprep.subr.mxu0 0.0
    %1259 = vmatpush2.msra.mxu0 0.0
    %1260 = vmatprep.subr.mxu0 0.0
    %1261 = vmatpush2.msra.mxu0 0.0
    %1262 = vmatprep.subr.mxu0 0.0
    %1263 = vmatpush2.msra.mxu0 0.0
    %1264 = vmatprep.subr.mxu0 0.0
    %1265 = vmatpush2.msra.mxu0 0.0
    %1266 = vmatprep.subr.mxu0 0.0
    %1267 = vmatpush2.msra.mxu0 0.0
    %1268 = vmatprep.subr.mxu0 0.0
    %1269 = vmatpush2.msra.mxu0 0.0
    %1270 = vmatprep.subr.mxu0 0.0
    %1271 = vmatpush2.msra.mxu0 0.0
    %1272 = vmatprep.subr.mxu0 0.0
    %1273 = vmatpush2.msra.mxu0 0.0
    %1274 = vmatprep.subr.mxu0 0.0
    %1275 = vmatpush2.msra.mxu0 0.0
    %1276 = vmatprep.subr.mxu0 0.0
    %1277 = vmatpush2.msra.mxu0 0.0
    %1278 = vmatprep.subr.mxu0 0.0
    %1279 = vmatpush2.msra.mxu0 0.0
    %1280 = vmatprep.mubr.f32.mxu0 0.0
    %1281 = vmatmul.mubr.f32.gmra.mxu0 %v515
    %v1282 = vpop.f32.mrf.mxu0
    %v1283 = vadd.f32 0.0, %v1282
    %v1284 = vpop.f32.mrf.mxu0
    %1285 = vmatprep.mubr.f32.mxu0 0.0
    %1286 = vmatmul.mubr.f32.gmra.mxu0 %v518
    %v1287 = vpop.f32.mrf.mxu0
    %v1288 = vadd.f32 0.0, %v1287
    %v1289 = vpop.f32.mrf.mxu0
    %1290 = vdwg.mxu0
    %v1292 = vsel %vm34, %v496, 0
    %v1295 = vsel %vm34, %v497, 0
    %1297 = vmatprep.subr.mxu0 0.0
    %1298 = vmatpush1.msra.mxu0 0.0
    %1299 = vmatprep.subr.mxu0 0.0
    %1300 = vmatpush1.msra.mxu0 0.0
    %1301 = vmatprep.subr.mxu0 0.0
    %1302 = vmatpush1.msra.mxu0 0.0
    %1303 = vmatprep.subr.mxu0 0.0
    %1304 = vmatpush1.msra.mxu0 0.0
    %1305 = vmatprep.subr.mxu0 0.0
    %1306 = vmatpush1.msra.mxu0 0.0
    %1307 = vmatprep.subr.mxu0 0.0
    %1308 = vmatpush1.msra.mxu0 0.0
    %1309 = vmatprep.subr.mxu0 0.0
    %1310 = vmatpush1.msra.mxu0 0.0
    %1311 = vmatprep.subr.mxu0 0.0
    %1312 = vmatpush1.msra.mxu0 0.0
    %1313 = vmatprep.subr.mxu0 0.0
    %1314 = vmatpush1.msra.mxu0 0.0
    %1315 = vmatprep.subr.mxu0 0.0
    %1316 = vmatpush1.msra.mxu0 0.0
    %1317 = vmatprep.subr.mxu0 0.0
    %1318 = vmatpush1.msra.mxu0 0.0
    %1319 = vmatprep.subr.mxu0 0.0
    %1320 = vmatpush1.msra.mxu0 0.0
    %1321 = vmatprep.subr.mxu0 0.0
    %1322 = vmatpush1.msra.mxu0 0.0
    %1323 = vmatprep.subr.mxu0 0.0
    %1324 = vmatpush1.msra.mxu0 0.0
    %1325 = vmatprep.subr.mxu0 0.0
    %1326 = vmatpush1.msra.mxu0 %v1215
    %1327 = vmatprep.subr.mxu0 0.0
    %1328 = vmatpush1.msra.mxu0 %v1214
    %1329 = vmatprep.subr.mxu0 0.0
    %1330 = vmatpush2.msra.mxu0 0.0
    %1331 = vmatprep.subr.mxu0 0.0
    %1332 = vmatpush2.msra.mxu0 0.0
    %1333 = vmatprep.subr.mxu0 0.0
    %1334 = vmatpush2.msra.mxu0 0.0
    %1335 = vmatprep.subr.mxu0 0.0
    %1336 = vmatpush2.msra.mxu0 0.0
    %1337 = vmatprep.subr.mxu0 0.0
    %1338 = vmatpush2.msra.mxu0 0.0
    %1339 = vmatprep.subr.mxu0 0.0
    %1340 = vmatpush2.msra.mxu0 0.0
    %1341 = vmatprep.subr.mxu0 0.0
    %1342 = vmatpush2.msra.mxu0 0.0
    %1343 = vmatprep.subr.mxu0 0.0
    %1344 = vmatpush2.msra.mxu0 0.0
    %1345 = vmatprep.subr.mxu0 0.0
    %1346 = vmatpush2.msra.mxu0 0.0
    %1347 = vmatprep.subr.mxu0 0.0
    %1348 = vmatpush2.msra.mxu0 0.0
    %1349 = vmatprep.subr.mxu0 0.0
    %1350 = vmatpush2.msra.mxu0 0.0
    %1351 = vmatprep.subr.mxu0 0.0
    %1352 = vmatpush2.msra.mxu0 0.0
    %1353 = vmatprep.subr.mxu0 0.0
    %1354 = vmatpush2.msra.mxu0 0.0
    %1355 = vmatprep.subr.mxu0 0.0
    %1356 = vmatpush2.msra.mxu0 0.0
    %1357 = vmatprep.subr.mxu0 0.0
    %1358 = vmatpush2.msra.mxu0 0.0
    %1359 = vmatprep.subr.mxu0 0.0
    %1360 = vmatpush2.msra.mxu0 0.0
    %1361 = vmatprep.mubr.f32.mxu0 0.0
    %1362 = vmatmul.mubr.f32.gmra.mxu0 %v1292
    %v1363 = vpop.f32.mrf.mxu0
    %v1364 = vadd.f32 0.0, %v1363
    %v1365 = vpop.f32.mrf.mxu0
    %1366 = vmatprep.mubr.f32.mxu0 0.0
    %1367 = vmatmul.mubr.f32.gmra.mxu0 %v1295
    %v1368 = vpop.f32.mrf.mxu0
    %v1369 = vadd.f32 0.0, %v1368
    %v1370 = vpop.f32.mrf.mxu0
    %1371 = vdwg.mxu0
    %v1372 = vld [vmem:[%s5 + $0x1b0] sm:$0xff]
    %v1373 = vld [vmem:[%s5 + $0x1b8] sm:$0xff]
    %v1374 = vld [vmem:[%s5 + $0x1c0] sm:$0xff]
    %v1375 = vld [vmem:[%s5 + $0x1c8] sm:$0xff]
    %v1376 = vld [vmem:[%s5 + $0x1d0] sm:$0xf]
    %v1378 = vsel %vm601, %v1372, 0
    %v1381 = vsel %vm601, %v1373, 0
    %v1384 = vsel %vm601, %v1374, 0
    %v1387 = vsel %vm601, %v1375, 0
    %v1390 = vsel %vm601, %v1376, 0
    %v1393 = vsel %vm601, %v1283, 0
    %v1396 = vsel %vm601, %v1288, 0
    %1398 = vmatprep.subr.mxu0 0.0
    %1399 = vmatpush1.xpose.msra.mxu0 0.0
    %1400 = vmatprep.subr.mxu0 0.0
    %1401 = vmatpush1.xpose.msra.mxu0 0.0
    %1402 = vmatprep.subr.mxu0 0.0
    %1403 = vmatpush1.xpose.msra.mxu0 0.0
    %1404 = vmatprep.subr.mxu0 0.0
    %1405 = vmatpush1.xpose.msra.mxu0 0.0
    %1406 = vmatprep.subr.mxu0 0.0
    %1407 = vmatpush1.xpose.msra.mxu0 0.0
    %1408 = vmatprep.subr.mxu0 0.0
    %1409 = vmatpush1.xpose.msra.mxu0 0.0
    %1410 = vmatprep.subr.mxu0 0.0
    %1411 = vmatpush1.xpose.msra.mxu0 0.0
    %1412 = vmatprep.subr.mxu0 0.0
    %1413 = vmatpush1.xpose.msra.mxu0 0.0
    %1414 = vmatprep.subr.mxu0 0.0
    %1415 = vmatpush1.xpose.msra.mxu0 0.0
    %1416 = vmatprep.subr.mxu0 0.0
    %1417 = vmatpush1.xpose.msra.mxu0 0.0
    %1418 = vmatprep.subr.mxu0 0.0
    %1419 = vmatpush1.xpose.msra.mxu0 0.0
    %1420 = vmatprep.subr.mxu0 0.0
    %1421 = vmatpush1.xpose.msra.mxu0 0.0
    %1422 = vmatprep.subr.mxu0 0.0
    %1423 = vmatpush1.xpose.msra.mxu0 0.0
    %1424 = vmatprep.subr.mxu0 0.0
    %1425 = vmatpush1.xpose.msra.mxu0 0.0
    %1426 = vmatprep.subr.mxu0 0.0
    %1427 = vmatpush1.xpose.msra.mxu0 %v1396
    %1428 = vmatprep.subr.mxu0 0.0
    %1429 = vmatpush1.xpose.msra.mxu0 %v1393
    %1430 = vmatprep.subr.mxu0 0.0
    %1431 = vmatpush2.xpose.msra.mxu0 0.0
    %1432 = vmatprep.subr.mxu0 0.0
    %1433 = vmatpush2.xpose.msra.mxu0 0.0
    %1434 = vmatprep.subr.mxu0 0.0
    %1435 = vmatpush2.xpose.msra.mxu0 0.0
    %1436 = vmatprep.subr.mxu0 0.0
    %1437 = vmatpush2.xpose.msra.mxu0 0.0
    %1438 = vmatprep.subr.mxu0 0.0
    %1439 = vmatpush2.xpose.msra.mxu0 0.0
    %1440 = vmatprep.subr.mxu0 0.0
    %1441 = vmatpush2.xpose.msra.mxu0 0.0
    %1442 = vmatprep.subr.mxu0 0.0
    %1443 = vmatpush2.xpose.msra.mxu0 0.0
    %1444 = vmatprep.subr.mxu0 0.0
    %1445 = vmatpush2.xpose.msra.mxu0 0.0
    %1446 = vmatprep.subr.mxu0 0.0
    %1447 = vmatpush2.xpose.msra.mxu0 0.0
    %1448 = vmatprep.subr.mxu0 0.0
    %1449 = vmatpush2.xpose.msra.mxu0 0.0
    %1450 = vmatprep.subr.mxu0 0.0
    %1451 = vmatpush2.xpose.msra.mxu0 0.0
    %1452 = vmatprep.subr.mxu0 0.0
    %1453 = vmatpush2.xpose.msra.mxu0 0.0
    %1454 = vmatprep.subr.mxu0 0.0
    %1455 = vmatpush2.xpose.msra.mxu0 0.0
    %1456 = vmatprep.subr.mxu0 0.0
    %1457 = vmatpush2.xpose.msra.mxu0 0.0
    %1458 = vmatprep.subr.mxu0 0.0
    %1459 = vmatpush2.xpose.msra.mxu0 0.0
    %1460 = vmatprep.subr.mxu0 0.0
    %1461 = vmatpush2.xpose.msra.mxu0 0.0
    %1462 = vmatprep.mubr.f32.mxu0 0.0
    %1463 = vmatmul.mubr.f32.gmra.mxu0 %v1378
    %v1464 = vpop.f32.mrf.mxu0
    %v1465 = vadd.f32 0.0, %v1464
    %v1466 = vpop.f32.mrf.mxu0
    %1467 = vmatprep.mubr.f32.mxu0 0.0
    %1468 = vmatmul.mubr.f32.gmra.mxu0 %v1381
    %v1469 = vpop.f32.mrf.mxu0
    %v1470 = vadd.f32 0.0, %v1469
    %v1471 = vpop.f32.mrf.mxu0
    %1472 = vmatprep.mubr.f32.mxu0 0.0
    %1473 = vmatmul.mubr.f32.gmra.mxu0 %v1384
    %v1474 = vpop.f32.mrf.mxu0
    %v1475 = vadd.f32 0.0, %v1474
    %v1476 = vpop.f32.mrf.mxu0
    %1477 = vmatprep.mubr.f32.mxu0 0.0
    %1478 = vmatmul.mubr.f32.gmra.mxu0 %v1387
    %v1479 = vpop.f32.mrf.mxu0
    %v1480 = vadd.f32 0.0, %v1479
    %v1481 = vpop.f32.mrf.mxu0
    %1482 = vmatprep.mubr.f32.mxu0 0.0
    %1483 = vmatmul.mubr.f32.gmra.mxu0 %v1390
    %v1484 = vpop.f32.mrf.mxu0
    %v1485 = vadd.f32 0.0, %v1484
    %v1486 = vpop.f32.mrf.mxu0
    %1487 = vdwg.mxu0
    %v1489 = vsel %vm116, %v505, 0
    %v1492 = vsel %vm116, %v506, 0
    %v1495 = vsel %vm116, %v507, 0
    %v1498 = vsel %vm116, %v508, 0
    %v1501 = vsel %vm116, %v509, 0
    %v1504 = vsel %vm123, %v1369, 0
    %1506 = vmatprep.subr.mxu0 0.0
    %1507 = vmatpush1.msra.mxu0 0.0
    %1508 = vmatprep.subr.mxu0 0.0
    %1509 = vmatpush1.msra.mxu0 0.0
    %1510 = vmatprep.subr.mxu0 0.0
    %1511 = vmatpush1.msra.mxu0 0.0
    %1512 = vmatprep.subr.mxu0 0.0
    %1513 = vmatpush1.msra.mxu0 0.0
    %1514 = vmatprep.subr.mxu0 0.0
    %1515 = vmatpush1.msra.mxu0 0.0
    %1516 = vmatprep.subr.mxu0 0.0
    %1517 = vmatpush1.msra.mxu0 0.0
    %1518 = vmatprep.subr.mxu0 0.0
    %1519 = vmatpush1.msra.mxu0 0.0
    %1520 = vmatprep.subr.mxu0 0.0
    %1521 = vmatpush1.msra.mxu0 0.0
    %1522 = vmatprep.subr.mxu0 0.0
    %1523 = vmatpush1.msra.mxu0 0.0
    %1524 = vmatprep.subr.mxu0 0.0
    %1525 = vmatpush1.msra.mxu0 0.0
    %1526 = vmatprep.subr.mxu0 0.0
    %1527 = vmatpush1.msra.mxu0 0.0
    %1528 = vmatprep.subr.mxu0 0.0
    %1529 = vmatpush1.msra.mxu0 0.0
    %1530 = vmatprep.subr.mxu0 0.0
    %1531 = vmatpush1.msra.mxu0 0.0
    %1532 = vmatprep.subr.mxu0 0.0
    %1533 = vmatpush1.msra.mxu0 0.0
    %1534 = vmatprep.subr.mxu0 0.0
    %1535 = vmatpush1.msra.mxu0 %v1504
    %1536 = vmatprep.subr.mxu0 0.0
    %1537 = vmatpush1.msra.mxu0 %v1364
    %1538 = vmatprep.subr.mxu0 0.0
    %1539 = vmatpush2.msra.mxu0 0.0
    %1540 = vmatprep.subr.mxu0 0.0
    %1541 = vmatpush2.msra.mxu0 0.0
    %1542 = vmatprep.subr.mxu0 0.0
    %1543 = vmatpush2.msra.mxu0 0.0
    %1544 = vmatprep.subr.mxu0 0.0
    %1545 = vmatpush2.msra.mxu0 0.0
    %1546 = vmatprep.subr.mxu0 0.0
    %1547 = vmatpush2.msra.mxu0 0.0
    %1548 = vmatprep.subr.mxu0 0.0
    %1549 = vmatpush2.msra.mxu0 0.0
    %1550 = vmatprep.subr.mxu0 0.0
    %1551 = vmatpush2.msra.mxu0 0.0
    %1552 = vmatprep.subr.mxu0 0.0
    %1553 = vmatpush2.msra.mxu0 0.0
    %1554 = vmatprep.subr.mxu0 0.0
    %1555 = vmatpush2.msra.mxu0 0.0
    %1556 = vmatprep.subr.mxu0 0.0
    %1557 = vmatpush2.msra.mxu0 0.0
    %1558 = vmatprep.subr.mxu0 0.0
    %1559 = vmatpush2.msra.mxu0 0.0
    %1560 = vmatprep.subr.mxu0 0.0
    %1561 = vmatpush2.msra.mxu0 0.0
    %1562 = vmatprep.subr.mxu0 0.0
    %1563 = vmatpush2.msra.mxu0 0.0
    %1564 = vmatprep.subr.mxu0 0.0
    %1565 = vmatpush2.msra.mxu0 0.0
    %1566 = vmatprep.subr.mxu0 0.0
    %1567 = vmatpush2.msra.mxu0 0.0
    %1568 = vmatprep.subr.mxu0 0.0
    %1569 = vmatpush2.msra.mxu0 0.0
    %1570 = vmatprep.mubr.f32.mxu0 0.0
    %1571 = vmatmul.mubr.f32.gmra.mxu0 %v1489
    %v1572 = vpop.f32.mrf.mxu0
    %v1573 = vadd.f32 0.0, %v1572
    %v1574 = vpop.f32.mrf.mxu0
    %1575 = vmatprep.mubr.f32.mxu0 0.0
    %1576 = vmatmul.mubr.f32.gmra.mxu0 %v1492
    %v1577 = vpop.f32.mrf.mxu0
    %v1578 = vadd.f32 0.0, %v1577
    %v1579 = vpop.f32.mrf.mxu0
    %1580 = vmatprep.mubr.f32.mxu0 0.0
    %1581 = vmatmul.mubr.f32.gmra.mxu0 %v1495
    %v1582 = vpop.f32.mrf.mxu0
    %v1583 = vadd.f32 0.0, %v1582
    %v1584 = vpop.f32.mrf.mxu0
    %1585 = vmatprep.mubr.f32.mxu0 0.0
    %1586 = vmatmul.mubr.f32.gmra.mxu0 %v1498
    %v1587 = vpop.f32.mrf.mxu0
    %v1588 = vadd.f32 0.0, %v1587
    %v1589 = vpop.f32.mrf.mxu0
    %1590 = vmatprep.mubr.f32.mxu0 0.0
    %1591 = vmatmul.mubr.f32.gmra.mxu0 %v1501
    %v1592 = vpop.f32.mrf.mxu0
    %v1593 = vadd.f32 0.0, %v1592
    %v1594 = vpop.f32.mrf.mxu0
    %1595 = vdwg.mxu0
    %v1596 = vld [vmem:[%s5 + $0x1d8] sm:$0xff]
    %v1597 = vld [vmem:[%s5 + $0x1e0] sm:$0xff]
    %v1598 = vld [vmem:[%s5 + $0x1e8] sm:$0xff]
    %v1599 = vld [vmem:[%s5 + $0x1f0] sm:$0xff]
    %v1600 = vld [vmem:[%s5 + $0x1f8] sm:$0xf]
    %v1601 = vmul.f32 %v1573, %v1596
    %v1602 = vmul.f32 %v1578, %v1597
    %v1603 = vmul.f32 %v1583, %v1598
    %v1604 = vmul.f32 %v1588, %v1599
    %v1605 = vmul.f32 %v1593, %v1600
    %v1606 = vsel %vm601, %v1601, 0.0
    %1607 = vadd.xlane.f32.xlu0 %v1606
    %v1608 = vpop.xlane.xlu0 %1607
    %v1609 = vsel %vm601, %v1602, 0.0
    %1610 = vadd.xlane.f32.xlu0 %v1609
    %v1611 = vpop.xlane.xlu0 %1610
    %v1612 = vsel %vm601, %v1603, 0.0
    %1613 = vadd.xlane.f32.xlu0 %v1612
    %v1614 = vpop.xlane.xlu0 %1613
    %v1615 = vsel %vm601, %v1604, 0.0
    %1616 = vadd.xlane.f32.xlu0 %v1615
    %v1617 = vpop.xlane.xlu0 %1616
    %vm1618 = vcmask 388096
    %v1619 = vsel %vm1618, %v1605, 0.0
    %1620 = vadd.xlane.f32.xlu0 %v1619
    %v1621 = vpop.xlane.xlu0 %1620
    %v1622 = vadd.f32 %v1608, %v1465
    %v1623 = vadd.f32 %v1611, %v1470
    %v1624 = vadd.f32 %v1614, %v1475
    %v1625 = vadd.f32 %v1617, %v1480
    %v1626 = vadd.f32 %v1621, %v1485
    %vm1627 = vcmp.gt.f32.partialorder %v1622, 0.0
    %vm1628 = vcmp.gt.f32.partialorder %v1623, 0.0
    %vm1629 = vcmp.gt.f32.partialorder %v1624, 0.0
    %vm1630 = vcmp.gt.f32.partialorder %v1625, 0.0
    %vm1631 = vcmp.gt.f32.partialorder %v1626, 0.0
    %v1632 = vmul.f32 %v1622, 0.2
    %v1633 = vmul.f32 %v1623, 0.2
    %v1634 = vmul.f32 %v1624, 0.2
    %v1635 = vmul.f32 %v1625, 0.2
    %v1636 = vmul.f32 %v1626, 0.2
    %v1637 = vsel %vm1627, %v1622, %v1632
    %v1638 = vsel %vm1628, %v1623, %v1633
    %v1639 = vsel %vm1629, %v1624, %v1634
    %v1640 = vsel %vm1630, %v1625, %v1635
    %v1641 = vsel %vm1631, %v1626, %v1636
    %v1642 = vsel %vm123, %v31, 0
    %1644 = vmatprep.subr.mxu0 0.0
    %1645 = vmatpush1.msra.mxu0 0.0
    %1646 = vmatprep.subr.mxu0 0.0
    %1647 = vmatpush1.msra.mxu0 0.0
    %1648 = vmatprep.subr.mxu0 0.0
    %1649 = vmatpush1.msra.mxu0 0.0
    %1650 = vmatprep.subr.mxu0 0.0
    %1651 = vmatpush1.msra.mxu0 0.0
    %1652 = vmatprep.subr.mxu0 0.0
    %1653 = vmatpush1.msra.mxu0 0.0
    %1654 = vmatprep.subr.mxu0 0.0
    %1655 = vmatpush1.msra.mxu0 0.0
    %1656 = vmatprep.subr.mxu0 0.0
    %1657 = vmatpush1.msra.mxu0 0.0
    %1658 = vmatprep.subr.mxu0 0.0
    %1659 = vmatpush1.msra.mxu0 0.0
    %1660 = vmatprep.subr.mxu0 0.0
    %1661 = vmatpush1.msra.mxu0 0.0
    %1662 = vmatprep.subr.mxu0 0.0
    %1663 = vmatpush1.msra.mxu0 0.0
    %1664 = vmatprep.subr.mxu0 0.0
    %1665 = vmatpush1.msra.mxu0 0.0
    %1666 = vmatprep.subr.mxu0 0.0
    %1667 = vmatpush1.msra.mxu0 0.0
    %1668 = vmatprep.subr.mxu0 0.0
    %1669 = vmatpush1.msra.mxu0 0.0
    %1670 = vmatprep.subr.mxu0 0.0
    %1671 = vmatpush1.msra.mxu0 0.0
    %1672 = vmatprep.subr.mxu0 0.0
    %1673 = vmatpush1.msra.mxu0 %v1642
    %1674 = vmatprep.subr.mxu0 0.0
    %1675 = vmatpush1.msra.mxu0 %v30
    %1676 = vmatprep.subr.mxu0 0.0
    %1677 = vmatpush2.msra.mxu0 0.0
    %1678 = vmatprep.subr.mxu0 0.0
    %1679 = vmatpush2.msra.mxu0 0.0
    %1680 = vmatprep.subr.mxu0 0.0
    %1681 = vmatpush2.msra.mxu0 0.0
    %1682 = vmatprep.subr.mxu0 0.0
    %1683 = vmatpush2.msra.mxu0 0.0
    %1684 = vmatprep.subr.mxu0 0.0
    %1685 = vmatpush2.msra.mxu0 0.0
    %1686 = vmatprep.subr.mxu0 0.0
    %1687 = vmatpush2.msra.mxu0 0.0
    %1688 = vmatprep.subr.mxu0 0.0
    %1689 = vmatpush2.msra.mxu0 0.0
    %1690 = vmatprep.subr.mxu0 0.0
    %1691 = vmatpush2.msra.mxu0 0.0
    %1692 = vmatprep.subr.mxu0 0.0
    %1693 = vmatpush2.msra.mxu0 0.0
    %1694 = vmatprep.subr.mxu0 0.0
    %1695 = vmatpush2.msra.mxu0 0.0
    %1696 = vmatprep.subr.mxu0 0.0
    %1697 = vmatpush2.msra.mxu0 0.0
    %1698 = vmatprep.subr.mxu0 0.0
    %1699 = vmatpush2.msra.mxu0 0.0
    %1700 = vmatprep.subr.mxu0 0.0
    %1701 = vmatpush2.msra.mxu0 0.0
    %1702 = vmatprep.subr.mxu0 0.0
    %1703 = vmatpush2.msra.mxu0 0.0
    %1704 = vmatprep.subr.mxu0 0.0
    %1705 = vmatpush2.msra.mxu0 0.0
    %1706 = vmatprep.subr.mxu0 0.0
    %1707 = vmatpush2.msra.mxu0 0.0
    %1708 = vmatprep.mubr.f32.mxu0 0.0
    %1709 = vmatmul.mubr.f32.gmra.mxu0 %v1489
    %v1710 = vpop.f32.mrf.mxu0
    %v1711 = vadd.f32 0.0, %v1710
    %v1712 = vpop.f32.mrf.mxu0
    %1713 = vmatprep.mubr.f32.mxu0 0.0
    %1714 = vmatmul.mubr.f32.gmra.mxu0 %v1492
    %v1715 = vpop.f32.mrf.mxu0
    %v1716 = vadd.f32 0.0, %v1715
    %v1717 = vpop.f32.mrf.mxu0
    %1718 = vmatprep.mubr.f32.mxu0 0.0
    %1719 = vmatmul.mubr.f32.gmra.mxu0 %v1495
    %v1720 = vpop.f32.mrf.mxu0
    %v1721 = vadd.f32 0.0, %v1720
    %v1722 = vpop.f32.mrf.mxu0
    %1723 = vmatprep.mubr.f32.mxu0 0.0
    %1724 = vmatmul.mubr.f32.gmra.mxu0 %v1498
    %v1725 = vpop.f32.mrf.mxu0
    %v1726 = vadd.f32 0.0, %v1725
    %v1727 = vpop.f32.mrf.mxu0
    %1728 = vmatprep.mubr.f32.mxu0 0.0
    %1729 = vmatmul.mubr.f32.gmra.mxu0 %v1501
    %v1730 = vpop.f32.mrf.mxu0
    %v1731 = vadd.f32 0.0, %v1730
    %v1732 = vpop.f32.mrf.mxu0
    %1733 = vdwg.mxu0
    %vm1734 = vcmp.gt.f32.partialorder %v1711, 0.0
    %vm1735 = vcmp.gt.f32.partialorder %v1716, 0.0
    %vm1736 = vcmp.gt.f32.partialorder %v1721, 0.0
    %vm1737 = vcmp.gt.f32.partialorder %v1726, 0.0
    %vm1738 = vcmp.gt.f32.partialorder %v1731, 0.0
    %v1739 = vsel %vm1734, %v1637, -1e+30
    %v1740 = vsel %vm1735, %v1638, -1e+30
    %v1741 = vsel %vm1736, %v1639, -1e+30
    %v1742 = vsel %vm1737, %v1640, -1e+30
    %v1743 = vsel %vm1738, %v1641, -1e+30
    %v1744 = vsel %vm34, %v1739, -inf
    %1745 = vmax.xlane.f32.xlu0 %v1744
    %v1746 = vpop.xlane.xlu0 %1745
    %v1747 = vsel %vm34, %v1740, -inf
    %1748 = vmax.xlane.f32.xlu0 %v1747
    %v1749 = vpop.xlane.xlu0 %1748
    %v1750 = vsel %vm34, %v1741, -inf
    %1751 = vmax.xlane.f32.xlu0 %v1750
    %v1752 = vpop.xlane.xlu0 %1751
    %v1753 = vsel %vm34, %v1742, -inf
    %1754 = vmax.xlane.f32.xlu0 %v1753
    %v1755 = vpop.xlane.xlu0 %1754
    %v1756 = vsel %vm488, %v1743, -inf
    %1757 = vmax.xlane.f32.xlu0 %v1756
    %v1758 = vpop.xlane.xlu0 %1757
    %v1759 = vsub.f32 %v1739, %v1746
    %v1760 = vsub.f32 %v1740, %v1749
    %v1761 = vsub.f32 %v1741, %v1752
    %v1762 = vsub.f32 %v1742, %v1755
    %v1763 = vsub.f32 %v1743, %v1758
    %v1764 = vmul.f32 %v1759, 1.442695
    %v1765 = vpow.pop %v1764
    %v1766 = vmul.f32 %v1760, 1.442695
    %v1767 = vpow.pop %v1766
    %v1768 = vmul.f32 %v1761, 1.442695
    %v1769 = vpow.pop %v1768
    %v1770 = vmul.f32 %v1762, 1.442695
    %v1771 = vpow.pop %v1770
    %v1772 = vmul.f32 %v1763, 1.442695
    %v1773 = vpow.pop %v1772
    %v1774 = vsel %vm1734, %v1765, 0.0
    %v1775 = vsel %vm1735, %v1767, 0.0
    %v1776 = vsel %vm1736, %v1769, 0.0
    %v1777 = vsel %vm1737, %v1771, 0.0
    %v1778 = vsel %vm1738, %v1773, 0.0
    %v1779 = vsel %vm34, %v1774, 0.0
    %1780 = vadd.xlane.f32.xlu0 %v1779
    %v1781 = vpop.xlane.xlu0 %1780
    %v1782 = vsel %vm34, %v1775, 0.0
    %1783 = vadd.xlane.f32.xlu0 %v1782
    %v1784 = vpop.xlane.xlu0 %1783
    %v1785 = vsel %vm34, %v1776, 0.0
    %1786 = vadd.xlane.f32.xlu0 %v1785
    %v1787 = vpop.xlane.xlu0 %1786
    %v1788 = vsel %vm34, %v1777, 0.0
    %1789 = vadd.xlane.f32.xlu0 %v1788
    %v1790 = vpop.xlane.xlu0 %1789
    %v1791 = vsel %vm488, %v1778, 0.0
    %1792 = vadd.xlane.f32.xlu0 %v1791
    %v1793 = vpop.xlane.xlu0 %1792
    %v1794 = vmax.f32 %v1781, 1e-12
    %v1795 = vmax.f32 %v1784, 1e-12
    %v1796 = vmax.f32 %v1787, 1e-12
    %v1797 = vmax.f32 %v1790, 1e-12
    %v1798 = vmax.f32 %v1793, 1e-12
    %v1799 = vrcp.pop %v1794
    %v1800 = vmul.f32 %v1774, %v1799
    %v1801 = vrcp.pop %v1795
    %v1802 = vmul.f32 %v1775, %v1801
    %v1803 = vrcp.pop %v1796
    %v1804 = vmul.f32 %v1776, %v1803
    %v1805 = vrcp.pop %v1797
    %v1806 = vmul.f32 %v1777, %v1805
    %v1807 = vrcp.pop %v1798
    %v1808 = vmul.f32 %v1778, %v1807
    %v1810 = vsel %vm34, %v1800, 0
    %v1813 = vsel %vm34, %v1802, 0
    %v1816 = vsel %vm34, %v1804, 0
    %v1819 = vsel %vm34, %v1806, 0
    %v1822 = vsel %vm34, %v1808, 0
    %1824 = vmatprep.subr.mxu0 0.0
    %1825 = vmatpush1.msra.mxu0 0.0
    %1826 = vmatprep.subr.mxu0 0.0
    %1827 = vmatpush1.msra.mxu0 0.0
    %1828 = vmatprep.subr.mxu0 0.0
    %1829 = vmatpush1.msra.mxu0 0.0
    %1830 = vmatprep.subr.mxu0 0.0
    %1831 = vmatpush1.msra.mxu0 0.0
    %1832 = vmatprep.subr.mxu0 0.0
    %1833 = vmatpush1.msra.mxu0 0.0
    %1834 = vmatprep.subr.mxu0 0.0
    %1835 = vmatpush1.msra.mxu0 0.0
    %1836 = vmatprep.subr.mxu0 0.0
    %1837 = vmatpush1.msra.mxu0 0.0
    %1838 = vmatprep.subr.mxu0 0.0
    %1839 = vmatpush1.msra.mxu0 0.0
    %1840 = vmatprep.subr.mxu0 0.0
    %1841 = vmatpush1.msra.mxu0 0.0
    %1842 = vmatprep.subr.mxu0 0.0
    %1843 = vmatpush1.msra.mxu0 0.0
    %1844 = vmatprep.subr.mxu0 0.0
    %1845 = vmatpush1.msra.mxu0 0.0
    %1846 = vmatprep.subr.mxu0 0.0
    %1847 = vmatpush1.msra.mxu0 0.0
    %1848 = vmatprep.subr.mxu0 0.0
    %1849 = vmatpush1.msra.mxu0 0.0
    %1850 = vmatprep.subr.mxu0 0.0
    %1851 = vmatpush1.msra.mxu0 0.0
    %1852 = vmatprep.subr.mxu0 0.0
    %1853 = vmatpush1.msra.mxu0 %v1288
    %1854 = vmatprep.subr.mxu0 0.0
    %1855 = vmatpush1.msra.mxu0 %v1283
    %1856 = vmatprep.subr.mxu0 0.0
    %1857 = vmatpush2.msra.mxu0 0.0
    %1858 = vmatprep.subr.mxu0 0.0
    %1859 = vmatpush2.msra.mxu0 0.0
    %1860 = vmatprep.subr.mxu0 0.0
    %1861 = vmatpush2.msra.mxu0 0.0
    %1862 = vmatprep.subr.mxu0 0.0
    %1863 = vmatpush2.msra.mxu0 0.0
    %1864 = vmatprep.subr.mxu0 0.0
    %1865 = vmatpush2.msra.mxu0 0.0
    %1866 = vmatprep.subr.mxu0 0.0
    %1867 = vmatpush2.msra.mxu0 0.0
    %1868 = vmatprep.subr.mxu0 0.0
    %1869 = vmatpush2.msra.mxu0 0.0
    %1870 = vmatprep.subr.mxu0 0.0
    %1871 = vmatpush2.msra.mxu0 0.0
    %1872 = vmatprep.subr.mxu0 0.0
    %1873 = vmatpush2.msra.mxu0 0.0
    %1874 = vmatprep.subr.mxu0 0.0
    %1875 = vmatpush2.msra.mxu0 0.0
    %1876 = vmatprep.subr.mxu0 0.0
    %1877 = vmatpush2.msra.mxu0 0.0
    %1878 = vmatprep.subr.mxu0 0.0
    %1879 = vmatpush2.msra.mxu0 0.0
    %1880 = vmatprep.subr.mxu0 0.0
    %1881 = vmatpush2.msra.mxu0 0.0
    %1882 = vmatprep.subr.mxu0 0.0
    %1883 = vmatpush2.msra.mxu0 0.0
    %1884 = vmatprep.subr.mxu0 0.0
    %1885 = vmatpush2.msra.mxu0 0.0
    %1886 = vmatprep.subr.mxu0 0.0
    %1887 = vmatpush2.msra.mxu0 0.0
    %1888 = vmatprep.mubr.f32.mxu0 0.0
    %1889 = vmatmul.mubr.f32.gmra.mxu0 %v1810
    %v1890 = vpop.f32.mrf.mxu0
    %v1891 = vadd.f32 0.0, %v1890
    %v1892 = vpop.f32.mrf.mxu0
    %1893 = vmatprep.mubr.f32.mxu0 0.0
    %1894 = vmatmul.mubr.f32.gmra.mxu0 %v1813
    %v1895 = vpop.f32.mrf.mxu0
    %v1896 = vadd.f32 0.0, %v1895
    %v1897 = vpop.f32.mrf.mxu0
    %1898 = vmatprep.mubr.f32.mxu0 0.0
    %1899 = vmatmul.mubr.f32.gmra.mxu0 %v1816
    %v1900 = vpop.f32.mrf.mxu0
    %v1901 = vadd.f32 0.0, %v1900
    %v1902 = vpop.f32.mrf.mxu0
    %1903 = vmatprep.mubr.f32.mxu0 0.0
    %1904 = vmatmul.mubr.f32.gmra.mxu0 %v1819
    %v1905 = vpop.f32.mrf.mxu0
    %v1906 = vadd.f32 0.0, %v1905
    %v1907 = vpop.f32.mrf.mxu0
    %1908 = vmatprep.mubr.f32.mxu0 0.0
    %1909 = vmatmul.mubr.f32.gmra.mxu0 %v1822
    %v1910 = vpop.f32.mrf.mxu0
    %v1911 = vadd.f32 0.0, %v1910
    %v1912 = vpop.f32.mrf.mxu0
    %1913 = vdwg.mxu0
    %v1914 = vmul.f32 %v1891, %v1189
    %v1915 = vmul.f32 %v1896, %v1189
    %v1916 = vmul.f32 %v1896, %v1195
    %v1917 = vmul.f32 %v1901, %v1195
    %v1920 = vrot.slane %v1916, 4
    %v1921 = vrot.slane %v1917, 4
    %v1922 = vsel %vm123, %v1920, %v1921
    %v1925 = vadd.f32 %v1914, %v1922
    %v1926 = vadd.f32 %v1915, %v1921
    %v1927 = vmul.f32 %v1906, %v1203
    %v1928 = vmul.f32 %v1911, %v1203
    %v1929 = vadd.f32 %v1925, %v1927
    %v1930 = vadd.f32 %v1926, %v1928
    %v1931 = vlaneseq
    %v1932 = vshrl.u32 %v1931, 7
    %v1933 = vsub.s32 0, %v1932
    %v1934 = vrot.slane %v511, %v1933
    %v1935 = vadd.f32 %v1934, %v1929
    %v1936 = vadd.f32 %v1934, %v1930
    %v1937 = vld [vmem:[%s5 + $0x200] sm:$0xff]
    %v1938 = vld [vmem:[%s5 + $0x208] sm:$0xff]
    %1939 = vmatprep.subr.mxu0 0.0
    %1940 = vmatpush1.msra.mxu0 0.0
    %1941 = vmatprep.subr.mxu0 0.0
    %1942 = vmatpush1.msra.mxu0 0.0
    %1943 = vmatprep.subr.mxu0 0.0
    %1944 = vmatpush1.msra.mxu0 0.0
    %1945 = vmatprep.subr.mxu0 0.0
    %1946 = vmatpush1.msra.mxu0 0.0
    %1947 = vmatprep.subr.mxu0 0.0
    %1948 = vmatpush1.msra.mxu0 0.0
    %1949 = vmatprep.subr.mxu0 0.0
    %1950 = vmatpush1.msra.mxu0 0.0
    %1951 = vmatprep.subr.mxu0 0.0
    %1952 = vmatpush1.msra.mxu0 0.0
    %1953 = vmatprep.subr.mxu0 0.0
    %1954 = vmatpush1.msra.mxu0 0.0
    %1955 = vmatprep.subr.mxu0 0.0
    %1956 = vmatpush1.msra.mxu0 0.0
    %1957 = vmatprep.subr.mxu0 0.0
    %1958 = vmatpush1.msra.mxu0 0.0
    %1959 = vmatprep.subr.mxu0 0.0
    %1960 = vmatpush1.msra.mxu0 0.0
    %1961 = vmatprep.subr.mxu0 0.0
    %1962 = vmatpush1.msra.mxu0 0.0
    %1963 = vmatprep.subr.mxu0 0.0
    %1964 = vmatpush1.msra.mxu0 0.0
    %1965 = vmatprep.subr.mxu0 0.0
    %1966 = vmatpush1.msra.mxu0 0.0
    %1967 = vmatprep.subr.mxu0 0.0
    %1968 = vmatpush1.msra.mxu0 %v1938
    %1969 = vmatprep.subr.mxu0 0.0
    %1970 = vmatpush1.msra.mxu0 %v1937
    %1971 = vmatprep.subr.mxu0 0.0
    %1972 = vmatpush2.msra.mxu0 0.0
    %1973 = vmatprep.subr.mxu0 0.0
    %1974 = vmatpush2.msra.mxu0 0.0
    %1975 = vmatprep.subr.mxu0 0.0
    %1976 = vmatpush2.msra.mxu0 0.0
    %1977 = vmatprep.subr.mxu0 0.0
    %1978 = vmatpush2.msra.mxu0 0.0
    %1979 = vmatprep.subr.mxu0 0.0
    %1980 = vmatpush2.msra.mxu0 0.0
    %1981 = vmatprep.subr.mxu0 0.0
    %1982 = vmatpush2.msra.mxu0 0.0
    %1983 = vmatprep.subr.mxu0 0.0
    %1984 = vmatpush2.msra.mxu0 0.0
    %1985 = vmatprep.subr.mxu0 0.0
    %1986 = vmatpush2.msra.mxu0 0.0
    %1987 = vmatprep.subr.mxu0 0.0
    %1988 = vmatpush2.msra.mxu0 0.0
    %1989 = vmatprep.subr.mxu0 0.0
    %1990 = vmatpush2.msra.mxu0 0.0
    %1991 = vmatprep.subr.mxu0 0.0
    %1992 = vmatpush2.msra.mxu0 0.0
    %1993 = vmatprep.subr.mxu0 0.0
    %1994 = vmatpush2.msra.mxu0 0.0
    %1995 = vmatprep.subr.mxu0 0.0
    %1996 = vmatpush2.msra.mxu0 0.0
    %1997 = vmatprep.subr.mxu0 0.0
    %1998 = vmatpush2.msra.mxu0 0.0
    %1999 = vmatprep.subr.mxu0 0.0
    %2000 = vmatpush2.msra.mxu0 0.0
    %2001 = vmatprep.subr.mxu0 0.0
    %2002 = vmatpush2.msra.mxu0 0.0
    %2003 = vmatprep.mubr.f32.mxu0 0.0
    %2004 = vmatmul.mubr.f32.gmra.mxu0 %v1292
    %v2005 = vpop.f32.mrf.mxu0
    %v2006 = vadd.f32 0.0, %v2005
    %v2007 = vpop.f32.mrf.mxu0
    %2008 = vmatprep.mubr.f32.mxu0 0.0
    %2009 = vmatmul.mubr.f32.gmra.mxu0 %v1295
    %v2010 = vpop.f32.mrf.mxu0
    %v2011 = vadd.f32 0.0, %v2010
    %v2012 = vpop.f32.mrf.mxu0
    %2013 = vdwg.mxu0
    %2014 = vmatprep.subr.mxu0 0.0
    %2015 = vmatpush1.msra.mxu0 0.0
    %2016 = vmatprep.subr.mxu0 0.0
    %2017 = vmatpush1.msra.mxu0 0.0
    %2018 = vmatprep.subr.mxu0 0.0
    %2019 = vmatpush1.msra.mxu0 0.0
    %2020 = vmatprep.subr.mxu0 0.0
    %2021 = vmatpush1.msra.mxu0 0.0
    %2022 = vmatprep.subr.mxu0 0.0
    %2023 = vmatpush1.msra.mxu0 0.0
    %2024 = vmatprep.subr.mxu0 0.0
    %2025 = vmatpush1.msra.mxu0 0.0
    %2026 = vmatprep.subr.mxu0 0.0
    %2027 = vmatpush1.msra.mxu0 0.0
    %2028 = vmatprep.subr.mxu0 0.0
    %2029 = vmatpush1.msra.mxu0 0.0
    %2030 = vmatprep.subr.mxu0 0.0
    %2031 = vmatpush1.msra.mxu0 0.0
    %2032 = vmatprep.subr.mxu0 0.0
    %2033 = vmatpush1.msra.mxu0 0.0
    %2034 = vmatprep.subr.mxu0 0.0
    %2035 = vmatpush1.msra.mxu0 0.0
    %2036 = vmatprep.subr.mxu0 0.0
    %2037 = vmatpush1.msra.mxu0 0.0
    %2038 = vmatprep.subr.mxu0 0.0
    %2039 = vmatpush1.msra.mxu0 0.0
    %2040 = vmatprep.subr.mxu0 0.0
    %2041 = vmatpush1.msra.mxu0 0.0
    %2042 = vmatprep.subr.mxu0 0.0
    %2043 = vmatpush1.msra.mxu0 %v1938
    %2044 = vmatprep.subr.mxu0 0.0
    %2045 = vmatpush1.msra.mxu0 %v1937
    %2046 = vmatprep.subr.mxu0 0.0
    %2047 = vmatpush2.msra.mxu0 0.0
    %2048 = vmatprep.subr.mxu0 0.0
    %2049 = vmatpush2.msra.mxu0 0.0
    %2050 = vmatprep.subr.mxu0 0.0
    %2051 = vmatpush2.msra.mxu0 0.0
    %2052 = vmatprep.subr.mxu0 0.0
    %2053 = vmatpush2.msra.mxu0 0.0
    %2054 = vmatprep.subr.mxu0 0.0
    %2055 = vmatpush2.msra.mxu0 0.0
    %2056 = vmatprep.subr.mxu0 0.0
    %2057 = vmatpush2.msra.mxu0 0.0
    %2058 = vmatprep.subr.mxu0 0.0
    %2059 = vmatpush2.msra.mxu0 0.0
    %2060 = vmatprep.subr.mxu0 0.0
    %2061 = vmatpush2.msra.mxu0 0.0
    %2062 = vmatprep.subr.mxu0 0.0
    %2063 = vmatpush2.msra.mxu0 0.0
    %2064 = vmatprep.subr.mxu0 0.0
    %2065 = vmatpush2.msra.mxu0 0.0
    %2066 = vmatprep.subr.mxu0 0.0
    %2067 = vmatpush2.msra.mxu0 0.0
    %2068 = vmatprep.subr.mxu0 0.0
    %2069 = vmatpush2.msra.mxu0 0.0
    %2070 = vmatprep.subr.mxu0 0.0
    %2071 = vmatpush2.msra.mxu0 0.0
    %2072 = vmatprep.subr.mxu0 0.0
    %2073 = vmatpush2.msra.mxu0 0.0
    %2074 = vmatprep.subr.mxu0 0.0
    %2075 = vmatpush2.msra.mxu0 0.0
    %2076 = vmatprep.subr.mxu0 0.0
    %2077 = vmatpush2.msra.mxu0 0.0
    %2078 = vmatprep.mubr.f32.mxu0 0.0
    %2079 = vmatmul.mubr.f32.gmra.mxu0 %v515
    %v2080 = vpop.f32.mrf.mxu0
    %v2081 = vadd.f32 0.0, %v2080
    %v2082 = vpop.f32.mrf.mxu0
    %2083 = vmatprep.mubr.f32.mxu0 0.0
    %2084 = vmatmul.mubr.f32.gmra.mxu0 %v518
    %v2085 = vpop.f32.mrf.mxu0
    %v2086 = vadd.f32 0.0, %v2085
    %v2087 = vpop.f32.mrf.mxu0
    %2088 = vdwg.mxu0
    %v2089 = vld [vmem:[%s5 + $0x210] sm:$0xff]
    %v2090 = vld [vmem:[%s5 + $0x218] sm:$0xff]
    %v2091 = vld [vmem:[%s5 + $0x220] sm:$0xff]
    %v2092 = vld [vmem:[%s5 + $0x228] sm:$0xff]
    %v2093 = vld [vmem:[%s5 + $0x230] sm:$0xff]
    %v2094 = vld [vmem:[%s5 + $0x238] sm:$0xff]
    %v2096 = vsel %vm601, %v2089, 0
    %v2099 = vsel %vm601, %v2090, 0
    %v2102 = vsel %vm601, %v2091, 0
    %v2105 = vsel %vm601, %v2092, 0
    %v2108 = vsel %vm601, %v2093, 0
    %v2111 = vsel %vm601, %v2094, 0
    %v2114 = vsel %vm601, %v2006, 0
    %v2117 = vsel %vm601, %v2011, 0
    %2119 = vmatprep.subr.mxu0 0.0
    %2120 = vmatpush1.xpose.msra.mxu0 0.0
    %2121 = vmatprep.subr.mxu0 0.0
    %2122 = vmatpush1.xpose.msra.mxu0 0.0
    %2123 = vmatprep.subr.mxu0 0.0
    %2124 = vmatpush1.xpose.msra.mxu0 0.0
    %2125 = vmatprep.subr.mxu0 0.0
    %2126 = vmatpush1.xpose.msra.mxu0 0.0
    %2127 = vmatprep.subr.mxu0 0.0
    %2128 = vmatpush1.xpose.msra.mxu0 0.0
    %2129 = vmatprep.subr.mxu0 0.0
    %2130 = vmatpush1.xpose.msra.mxu0 0.0
    %2131 = vmatprep.subr.mxu0 0.0
    %2132 = vmatpush1.xpose.msra.mxu0 0.0
    %2133 = vmatprep.subr.mxu0 0.0
    %2134 = vmatpush1.xpose.msra.mxu0 0.0
    %2135 = vmatprep.subr.mxu0 0.0
    %2136 = vmatpush1.xpose.msra.mxu0 0.0
    %2137 = vmatprep.subr.mxu0 0.0
    %2138 = vmatpush1.xpose.msra.mxu0 0.0
    %2139 = vmatprep.subr.mxu0 0.0
    %2140 = vmatpush1.xpose.msra.mxu0 0.0
    %2141 = vmatprep.subr.mxu0 0.0
    %2142 = vmatpush1.xpose.msra.mxu0 0.0
    %2143 = vmatprep.subr.mxu0 0.0
    %2144 = vmatpush1.xpose.msra.mxu0 0.0
    %2145 = vmatprep.subr.mxu0 0.0
    %2146 = vmatpush1.xpose.msra.mxu0 0.0
    %2147 = vmatprep.subr.mxu0 0.0
    %2148 = vmatpush1.xpose.msra.mxu0 %v2117
    %2149 = vmatprep.subr.mxu0 0.0
    %2150 = vmatpush1.xpose.msra.mxu0 %v2114
    %2151 = vmatprep.subr.mxu0 0.0
    %2152 = vmatpush2.xpose.msra.mxu0 0.0
    %2153 = vmatprep.subr.mxu0 0.0
    %2154 = vmatpush2.xpose.msra.mxu0 0.0
    %2155 = vmatprep.subr.mxu0 0.0
    %2156 = vmatpush2.xpose.msra.mxu0 0.0
    %2157 = vmatprep.subr.mxu0 0.0
    %2158 = vmatpush2.xpose.msra.mxu0 0.0
    %2159 = vmatprep.subr.mxu0 0.0
    %2160 = vmatpush2.xpose.msra.mxu0 0.0
    %2161 = vmatprep.subr.mxu0 0.0
    %2162 = vmatpush2.xpose.msra.mxu0 0.0
    %2163 = vmatprep.subr.mxu0 0.0
    %2164 = vmatpush2.xpose.msra.mxu0 0.0
    %2165 = vmatprep.subr.mxu0 0.0
    %2166 = vmatpush2.xpose.msra.mxu0 0.0
    %2167 = vmatprep.subr.mxu0 0.0
    %2168 = vmatpush2.xpose.msra.mxu0 0.0
    %2169 = vmatprep.subr.mxu0 0.0
    %2170 = vmatpush2.xpose.msra.mxu0 0.0
    %2171 = vmatprep.subr.mxu0 0.0
    %2172 = vmatpush2.xpose.msra.mxu0 0.0
    %2173 = vmatprep.subr.mxu0 0.0
    %2174 = vmatpush2.xpose.msra.mxu0 0.0
    %2175 = vmatprep.subr.mxu0 0.0
    %2176 = vmatpush2.xpose.msra.mxu0 0.0
    %2177 = vmatprep.subr.mxu0 0.0
    %2178 = vmatpush2.xpose.msra.mxu0 0.0
    %2179 = vmatprep.subr.mxu0 0.0
    %2180 = vmatpush2.xpose.msra.mxu0 0.0
    %2181 = vmatprep.subr.mxu0 0.0
    %2182 = vmatpush2.xpose.msra.mxu0 0.0
    %2183 = vmatprep.mubr.f32.mxu0 0.0
    %2184 = vmatmul.mubr.f32.gmra.mxu0 %v2096
    %v2185 = vpop.f32.mrf.mxu0
    %v2186 = vadd.f32 0.0, %v2185
    %v2187 = vpop.f32.mrf.mxu0
    %2188 = vmatprep.mubr.f32.mxu0 0.0
    %2189 = vmatmul.mubr.f32.gmra.mxu0 %v2099
    %v2190 = vpop.f32.mrf.mxu0
    %v2191 = vadd.f32 0.0, %v2190
    %v2192 = vpop.f32.mrf.mxu0
    %2193 = vmatprep.mubr.f32.mxu0 0.0
    %2194 = vmatmul.mubr.f32.gmra.mxu0 %v2102
    %v2195 = vpop.f32.mrf.mxu0
    %v2196 = vadd.f32 0.0, %v2195
    %v2197 = vpop.f32.mrf.mxu0
    %2198 = vmatprep.mubr.f32.mxu0 0.0
    %2199 = vmatmul.mubr.f32.gmra.mxu0 %v2105
    %v2200 = vpop.f32.mrf.mxu0
    %v2201 = vadd.f32 0.0, %v2200
    %v2202 = vpop.f32.mrf.mxu0
    %2203 = vmatprep.mubr.f32.mxu0 0.0
    %2204 = vmatmul.mubr.f32.gmra.mxu0 %v2108
    %v2205 = vpop.f32.mrf.mxu0
    %v2206 = vadd.f32 0.0, %v2205
    %v2207 = vpop.f32.mrf.mxu0
    %2208 = vmatprep.mubr.f32.mxu0 0.0
    %2209 = vmatmul.mubr.f32.gmra.mxu0 %v2111
    %v2210 = vpop.f32.mrf.mxu0
    %v2211 = vadd.f32 0.0, %v2210
    %v2212 = vpop.f32.mrf.mxu0
    %2213 = vdwg.mxu0
    %2214 = vmatprep.subr.mxu0 0.0
    %2215 = vmatpush1.msra.mxu0 0.0
    %2216 = vmatprep.subr.mxu0 0.0
    %2217 = vmatpush1.msra.mxu0 0.0
    %2218 = vmatprep.subr.mxu0 0.0
    %2219 = vmatpush1.msra.mxu0 0.0
    %2220 = vmatprep.subr.mxu0 0.0
    %2221 = vmatpush1.msra.mxu0 0.0
    %2222 = vmatprep.subr.mxu0 0.0
    %2223 = vmatpush1.msra.mxu0 0.0
    %2224 = vmatprep.subr.mxu0 0.0
    %2225 = vmatpush1.msra.mxu0 0.0
    %2226 = vmatprep.subr.mxu0 0.0
    %2227 = vmatpush1.msra.mxu0 0.0
    %2228 = vmatprep.subr.mxu0 0.0
    %2229 = vmatpush1.msra.mxu0 0.0
    %2230 = vmatprep.subr.mxu0 0.0
    %2231 = vmatpush1.msra.mxu0 0.0
    %2232 = vmatprep.subr.mxu0 0.0
    %2233 = vmatpush1.msra.mxu0 0.0
    %2234 = vmatprep.subr.mxu0 0.0
    %2235 = vmatpush1.msra.mxu0 0.0
    %2236 = vmatprep.subr.mxu0 0.0
    %2237 = vmatpush1.msra.mxu0 0.0
    %2238 = vmatprep.subr.mxu0 0.0
    %2239 = vmatpush1.msra.mxu0 0.0
    %2240 = vmatprep.subr.mxu0 0.0
    %2241 = vmatpush1.msra.mxu0 0.0
    %2242 = vmatprep.subr.mxu0 0.0
    %2243 = vmatpush1.msra.mxu0 %v2086
    %2244 = vmatprep.subr.mxu0 0.0
    %2245 = vmatpush1.msra.mxu0 %v2081
    %2246 = vmatprep.subr.mxu0 0.0
    %2247 = vmatpush2.msra.mxu0 0.0
    %2248 = vmatprep.subr.mxu0 0.0
    %2249 = vmatpush2.msra.mxu0 0.0
    %2250 = vmatprep.subr.mxu0 0.0
    %2251 = vmatpush2.msra.mxu0 0.0
    %2252 = vmatprep.subr.mxu0 0.0
    %2253 = vmatpush2.msra.mxu0 0.0
    %2254 = vmatprep.subr.mxu0 0.0
    %2255 = vmatpush2.msra.mxu0 0.0
    %2256 = vmatprep.subr.mxu0 0.0
    %2257 = vmatpush2.msra.mxu0 0.0
    %2258 = vmatprep.subr.mxu0 0.0
    %2259 = vmatpush2.msra.mxu0 0.0
    %2260 = vmatprep.subr.mxu0 0.0
    %2261 = vmatpush2.msra.mxu0 0.0
    %2262 = vmatprep.subr.mxu0 0.0
    %2263 = vmatpush2.msra.mxu0 0.0
    %2264 = vmatprep.subr.mxu0 0.0
    %2265 = vmatpush2.msra.mxu0 0.0
    %2266 = vmatprep.subr.mxu0 0.0
    %2267 = vmatpush2.msra.mxu0 0.0
    %2268 = vmatprep.subr.mxu0 0.0
    %2269 = vmatpush2.msra.mxu0 0.0
    %2270 = vmatprep.subr.mxu0 0.0
    %2271 = vmatpush2.msra.mxu0 0.0
    %2272 = vmatprep.subr.mxu0 0.0
    %2273 = vmatpush2.msra.mxu0 0.0
    %2274 = vmatprep.subr.mxu0 0.0
    %2275 = vmatpush2.msra.mxu0 0.0
    %2276 = vmatprep.subr.mxu0 0.0
    %2277 = vmatpush2.msra.mxu0 0.0
    %2278 = vmatprep.mubr.f32.mxu0 0.0
    %2279 = vmatmul.mubr.f32.gmra.mxu0 %v722
    %v2280 = vpop.f32.mrf.mxu0
    %v2281 = vadd.f32 0.0, %v2280
    %v2282 = vpop.f32.mrf.mxu0
    %2283 = vmatprep.mubr.f32.mxu0 0.0
    %2284 = vmatmul.mubr.f32.gmra.mxu0 %v725
    %v2285 = vpop.f32.mrf.mxu0
    %v2286 = vadd.f32 0.0, %v2285
    %v2287 = vpop.f32.mrf.mxu0
    %2288 = vmatprep.mubr.f32.mxu0 0.0
    %2289 = vmatmul.mubr.f32.gmra.mxu0 %v728
    %v2290 = vpop.f32.mrf.mxu0
    %v2291 = vadd.f32 0.0, %v2290
    %v2292 = vpop.f32.mrf.mxu0
    %2293 = vmatprep.mubr.f32.mxu0 0.0
    %2294 = vmatmul.mubr.f32.gmra.mxu0 %v731
    %v2295 = vpop.f32.mrf.mxu0
    %v2296 = vadd.f32 0.0, %v2295
    %v2297 = vpop.f32.mrf.mxu0
    %2298 = vmatprep.mubr.f32.mxu0 0.0
    %2299 = vmatmul.mubr.f32.gmra.mxu0 %v734
    %v2300 = vpop.f32.mrf.mxu0
    %v2301 = vadd.f32 0.0, %v2300
    %v2302 = vpop.f32.mrf.mxu0
    %2303 = vmatprep.mubr.f32.mxu0 0.0
    %2304 = vmatmul.mubr.f32.gmra.mxu0 %v737
    %v2305 = vpop.f32.mrf.mxu0
    %v2306 = vadd.f32 0.0, %v2305
    %v2307 = vpop.f32.mrf.mxu0
    %2308 = vdwg.mxu0
    %v2309 = vld [vmem:[%s5 + $0x240] sm:$0xff]
    %v2310 = vld [vmem:[%s5 + $0x248] sm:$0xff]
    %v2311 = vld [vmem:[%s5 + $0x250] sm:$0xff]
    %v2312 = vld [vmem:[%s5 + $0x258] sm:$0xff]
    %v2313 = vld [vmem:[%s5 + $0x260] sm:$0xff]
    %v2314 = vld [vmem:[%s5 + $0x268] sm:$0xff]
    %v2315 = vmul.f32 %v2281, %v2309
    %v2316 = vmul.f32 %v2286, %v2310
    %v2317 = vmul.f32 %v2291, %v2311
    %v2318 = vmul.f32 %v2296, %v2312
    %v2319 = vmul.f32 %v2301, %v2313
    %v2320 = vmul.f32 %v2306, %v2314
    %v2321 = vsel %vm601, %v2315, 0.0
    %2322 = vadd.xlane.f32.xlu0 %v2321
    %v2323 = vpop.xlane.xlu0 %2322
    %v2324 = vsel %vm601, %v2316, 0.0
    %2325 = vadd.xlane.f32.xlu0 %v2324
    %v2326 = vpop.xlane.xlu0 %2325
    %v2327 = vsel %vm601, %v2317, 0.0
    %2328 = vadd.xlane.f32.xlu0 %v2327
    %v2329 = vpop.xlane.xlu0 %2328
    %v2330 = vsel %vm601, %v2318, 0.0
    %2331 = vadd.xlane.f32.xlu0 %v2330
    %v2332 = vpop.xlane.xlu0 %2331
    %v2333 = vsel %vm601, %v2319, 0.0
    %2334 = vadd.xlane.f32.xlu0 %v2333
    %v2335 = vpop.xlane.xlu0 %2334
    %v2336 = vsel %vm601, %v2320, 0.0
    %2337 = vadd.xlane.f32.xlu0 %v2336
    %v2338 = vpop.xlane.xlu0 %2337
    %v2339 = vadd.f32 %v2323, %v2186
    %v2340 = vadd.f32 %v2326, %v2191
    %v2341 = vadd.f32 %v2329, %v2196
    %v2342 = vadd.f32 %v2332, %v2201
    %v2343 = vadd.f32 %v2335, %v2206
    %v2344 = vadd.f32 %v2338, %v2211
    %vm2345 = vcmp.gt.f32.partialorder %v2339, 0.0
    %vm2346 = vcmp.gt.f32.partialorder %v2340, 0.0
    %vm2347 = vcmp.gt.f32.partialorder %v2341, 0.0
    %vm2348 = vcmp.gt.f32.partialorder %v2342, 0.0
    %vm2349 = vcmp.gt.f32.partialorder %v2343, 0.0
    %vm2350 = vcmp.gt.f32.partialorder %v2344, 0.0
    %v2351 = vmul.f32 %v2339, 0.2
    %v2352 = vmul.f32 %v2340, 0.2
    %v2353 = vmul.f32 %v2341, 0.2
    %v2354 = vmul.f32 %v2342, 0.2
    %v2355 = vmul.f32 %v2343, 0.2
    %v2356 = vmul.f32 %v2344, 0.2
    %v2357 = vsel %vm2345, %v2339, %v2351
    %v2358 = vsel %vm2346, %v2340, %v2352
    %v2359 = vsel %vm2347, %v2341, %v2353
    %v2360 = vsel %vm2348, %v2342, %v2354
    %v2361 = vsel %vm2349, %v2343, %v2355
    %v2362 = vsel %vm2350, %v2344, %v2356
    %2363 = vmatprep.subr.mxu0 0.0
    %2364 = vmatpush1.msra.mxu0 0.0
    %2365 = vmatprep.subr.mxu0 0.0
    %2366 = vmatpush1.msra.mxu0 0.0
    %2367 = vmatprep.subr.mxu0 0.0
    %2368 = vmatpush1.msra.mxu0 0.0
    %2369 = vmatprep.subr.mxu0 0.0
    %2370 = vmatpush1.msra.mxu0 0.0
    %2371 = vmatprep.subr.mxu0 0.0
    %2372 = vmatpush1.msra.mxu0 0.0
    %2373 = vmatprep.subr.mxu0 0.0
    %2374 = vmatpush1.msra.mxu0 0.0
    %2375 = vmatprep.subr.mxu0 0.0
    %2376 = vmatpush1.msra.mxu0 0.0
    %2377 = vmatprep.subr.mxu0 0.0
    %2378 = vmatpush1.msra.mxu0 0.0
    %2379 = vmatprep.subr.mxu0 0.0
    %2380 = vmatpush1.msra.mxu0 0.0
    %2381 = vmatprep.subr.mxu0 0.0
    %2382 = vmatpush1.msra.mxu0 0.0
    %2383 = vmatprep.subr.mxu0 0.0
    %2384 = vmatpush1.msra.mxu0 0.0
    %2385 = vmatprep.subr.mxu0 0.0
    %2386 = vmatpush1.msra.mxu0 0.0
    %2387 = vmatprep.subr.mxu0 0.0
    %2388 = vmatpush1.msra.mxu0 0.0
    %2389 = vmatprep.subr.mxu0 0.0
    %2390 = vmatpush1.msra.mxu0 0.0
    %2391 = vmatprep.subr.mxu0 0.0
    %2392 = vmatpush1.msra.mxu0 %v33
    %2393 = vmatprep.subr.mxu0 0.0
    %2394 = vmatpush1.msra.mxu0 %v32
    %2395 = vmatprep.subr.mxu0 0.0
    %2396 = vmatpush2.msra.mxu0 0.0
    %2397 = vmatprep.subr.mxu0 0.0
    %2398 = vmatpush2.msra.mxu0 0.0
    %2399 = vmatprep.subr.mxu0 0.0
    %2400 = vmatpush2.msra.mxu0 0.0
    %2401 = vmatprep.subr.mxu0 0.0
    %2402 = vmatpush2.msra.mxu0 0.0
    %2403 = vmatprep.subr.mxu0 0.0
    %2404 = vmatpush2.msra.mxu0 0.0
    %2405 = vmatprep.subr.mxu0 0.0
    %2406 = vmatpush2.msra.mxu0 0.0
    %2407 = vmatprep.subr.mxu0 0.0
    %2408 = vmatpush2.msra.mxu0 0.0
    %2409 = vmatprep.subr.mxu0 0.0
    %2410 = vmatpush2.msra.mxu0 0.0
    %2411 = vmatprep.subr.mxu0 0.0
    %2412 = vmatpush2.msra.mxu0 0.0
    %2413 = vmatprep.subr.mxu0 0.0
    %2414 = vmatpush2.msra.mxu0 0.0
    %2415 = vmatprep.subr.mxu0 0.0
    %2416 = vmatpush2.msra.mxu0 0.0
    %2417 = vmatprep.subr.mxu0 0.0
    %2418 = vmatpush2.msra.mxu0 0.0
    %2419 = vmatprep.subr.mxu0 0.0
    %2420 = vmatpush2.msra.mxu0 0.0
    %2421 = vmatprep.subr.mxu0 0.0
    %2422 = vmatpush2.msra.mxu0 0.0
    %2423 = vmatprep.subr.mxu0 0.0
    %2424 = vmatpush2.msra.mxu0 0.0
    %2425 = vmatprep.subr.mxu0 0.0
    %2426 = vmatpush2.msra.mxu0 0.0
    %2427 = vmatprep.mubr.f32.mxu0 0.0
    %2428 = vmatmul.mubr.f32.gmra.mxu0 %v722
    %v2429 = vpop.f32.mrf.mxu0
    %v2430 = vadd.f32 0.0, %v2429
    %v2431 = vpop.f32.mrf.mxu0
    %2432 = vmatprep.mubr.f32.mxu0 0.0
    %2433 = vmatmul.mubr.f32.gmra.mxu0 %v725
    %v2434 = vpop.f32.mrf.mxu0
    %v2435 = vadd.f32 0.0, %v2434
    %v2436 = vpop.f32.mrf.mxu0
    %2437 = vmatprep.mubr.f32.mxu0 0.0
    %2438 = vmatmul.mubr.f32.gmra.mxu0 %v728
    %v2439 = vpop.f32.mrf.mxu0
    %v2440 = vadd.f32 0.0, %v2439
    %v2441 = vpop.f32.mrf.mxu0
    %2442 = vmatprep.mubr.f32.mxu0 0.0
    %2443 = vmatmul.mubr.f32.gmra.mxu0 %v731
    %v2444 = vpop.f32.mrf.mxu0
    %v2445 = vadd.f32 0.0, %v2444
    %v2446 = vpop.f32.mrf.mxu0
    %2447 = vmatprep.mubr.f32.mxu0 0.0
    %2448 = vmatmul.mubr.f32.gmra.mxu0 %v734
    %v2449 = vpop.f32.mrf.mxu0
    %v2450 = vadd.f32 0.0, %v2449
    %v2451 = vpop.f32.mrf.mxu0
    %2452 = vmatprep.mubr.f32.mxu0 0.0
    %2453 = vmatmul.mubr.f32.gmra.mxu0 %v737
    %v2454 = vpop.f32.mrf.mxu0
    %v2455 = vadd.f32 0.0, %v2454
    %v2456 = vpop.f32.mrf.mxu0
    %2457 = vdwg.mxu0
    %vm2458 = vcmp.gt.f32.partialorder %v2430, 0.0
    %vm2459 = vcmp.gt.f32.partialorder %v2435, 0.0
    %vm2460 = vcmp.gt.f32.partialorder %v2440, 0.0
    %vm2461 = vcmp.gt.f32.partialorder %v2445, 0.0
    %vm2462 = vcmp.gt.f32.partialorder %v2450, 0.0
    %vm2463 = vcmp.gt.f32.partialorder %v2455, 0.0
    %v2464 = vsel %vm2458, %v2357, -1e+30
    %v2465 = vsel %vm2459, %v2358, -1e+30
    %v2466 = vsel %vm2460, %v2359, -1e+30
    %v2467 = vsel %vm2461, %v2360, -1e+30
    %v2468 = vsel %vm2462, %v2361, -1e+30
    %v2469 = vsel %vm2463, %v2362, -1e+30
    %v2470 = vsel %vm116, %v2464, -inf
    %2471 = vmax.xlane.f32.xlu0 %v2470
    %v2472 = vpop.xlane.xlu0 %2471
    %v2473 = vsel %vm116, %v2465, -inf
    %2474 = vmax.xlane.f32.xlu0 %v2473
    %v2475 = vpop.xlane.xlu0 %2474
    %v2476 = vsel %vm116, %v2466, -inf
    %2477 = vmax.xlane.f32.xlu0 %v2476
    %v2478 = vpop.xlane.xlu0 %2477
    %v2479 = vsel %vm116, %v2467, -inf
    %2480 = vmax.xlane.f32.xlu0 %v2479
    %v2481 = vpop.xlane.xlu0 %2480
    %v2482 = vsel %vm116, %v2468, -inf
    %2483 = vmax.xlane.f32.xlu0 %v2482
    %v2484 = vpop.xlane.xlu0 %2483
    %v2485 = vsel %vm116, %v2469, -inf
    %2486 = vmax.xlane.f32.xlu0 %v2485
    %v2487 = vpop.xlane.xlu0 %2486
    %v2488 = vsub.f32 %v2464, %v2472
    %v2489 = vsub.f32 %v2465, %v2475
    %v2490 = vsub.f32 %v2466, %v2478
    %v2491 = vsub.f32 %v2467, %v2481
    %v2492 = vsub.f32 %v2468, %v2484
    %v2493 = vsub.f32 %v2469, %v2487
    %v2494 = vmul.f32 %v2488, 1.442695
    %v2495 = vpow.pop %v2494
    %v2496 = vmul.f32 %v2489, 1.442695
    %v2497 = vpow.pop %v2496
    %v2498 = vmul.f32 %v2490, 1.442695
    %v2499 = vpow.pop %v2498
    %v2500 = vmul.f32 %v2491, 1.442695
    %v2501 = vpow.pop %v2500
    %v2502 = vmul.f32 %v2492, 1.442695
    %v2503 = vpow.pop %v2502
    %v2504 = vmul.f32 %v2493, 1.442695
    %v2505 = vpow.pop %v2504
    %v2506 = vsel %vm2458, %v2495, 0.0
    %v2507 = vsel %vm2459, %v2497, 0.0
    %v2508 = vsel %vm2460, %v2499, 0.0
    %v2509 = vsel %vm2461, %v2501, 0.0
    %v2510 = vsel %vm2462, %v2503, 0.0
    %v2511 = vsel %vm2463, %v2505, 0.0
    %v2512 = vsel %vm116, %v2506, 0.0
    %2513 = vadd.xlane.f32.xlu0 %v2512
    %v2514 = vpop.xlane.xlu0 %2513
    %v2515 = vsel %vm116, %v2507, 0.0
    %2516 = vadd.xlane.f32.xlu0 %v2515
    %v2517 = vpop.xlane.xlu0 %2516
    %v2518 = vsel %vm116, %v2508, 0.0
    %2519 = vadd.xlane.f32.xlu0 %v2518
    %v2520 = vpop.xlane.xlu0 %2519
    %v2521 = vsel %vm116, %v2509, 0.0
    %2522 = vadd.xlane.f32.xlu0 %v2521
    %v2523 = vpop.xlane.xlu0 %2522
    %v2524 = vsel %vm116, %v2510, 0.0
    %2525 = vadd.xlane.f32.xlu0 %v2524
    %v2526 = vpop.xlane.xlu0 %2525
    %v2527 = vsel %vm116, %v2511, 0.0
    %2528 = vadd.xlane.f32.xlu0 %v2527
    %v2529 = vpop.xlane.xlu0 %2528
    %v2530 = vmax.f32 %v2514, 1e-12
    %v2531 = vmax.f32 %v2517, 1e-12
    %v2532 = vmax.f32 %v2520, 1e-12
    %v2533 = vmax.f32 %v2523, 1e-12
    %v2534 = vmax.f32 %v2526, 1e-12
    %v2535 = vmax.f32 %v2529, 1e-12
    %v2536 = vrcp.pop %v2530
    %v2537 = vmul.f32 %v2506, %v2536
    %v2538 = vrcp.pop %v2531
    %v2539 = vmul.f32 %v2507, %v2538
    %v2540 = vrcp.pop %v2532
    %v2541 = vmul.f32 %v2508, %v2540
    %v2542 = vrcp.pop %v2533
    %v2543 = vmul.f32 %v2509, %v2542
    %v2544 = vrcp.pop %v2534
    %v2545 = vmul.f32 %v2510, %v2544
    %v2546 = vrcp.pop %v2535
    %v2547 = vmul.f32 %v2511, %v2546
    %v2549 = vsel %vm116, %v2537, 0
    %v2552 = vsel %vm116, %v2539, 0
    %v2555 = vsel %vm116, %v2541, 0
    %v2558 = vsel %vm116, %v2543, 0
    %v2561 = vsel %vm116, %v2545, 0
    %v2564 = vsel %vm116, %v2547, 0
    %v2566 = vsel %vm123, %v2011, 0
    %2568 = vmatprep.subr.mxu0 0.0
    %2569 = vmatpush1.msra.mxu0 0.0
    %2570 = vmatprep.subr.mxu0 0.0
    %2571 = vmatpush1.msra.mxu0 0.0
    %2572 = vmatprep.subr.mxu0 0.0
    %2573 = vmatpush1.msra.mxu0 0.0
    %2574 = vmatprep.subr.mxu0 0.0
    %2575 = vmatpush1.msra.mxu0 0.0
    %2576 = vmatprep.subr.mxu0 0.0
    %2577 = vmatpush1.msra.mxu0 0.0
    %2578 = vmatprep.subr.mxu0 0.0
    %2579 = vmatpush1.msra.mxu0 0.0
    %2580 = vmatprep.subr.mxu0 0.0
    %2581 = vmatpush1.msra.mxu0 0.0
    %2582 = vmatprep.subr.mxu0 0.0
    %2583 = vmatpush1.msra.mxu0 0.0
    %2584 = vmatprep.subr.mxu0 0.0
    %2585 = vmatpush1.msra.mxu0 0.0
    %2586 = vmatprep.subr.mxu0 0.0
    %2587 = vmatpush1.msra.mxu0 0.0
    %2588 = vmatprep.subr.mxu0 0.0
    %2589 = vmatpush1.msra.mxu0 0.0
    %2590 = vmatprep.subr.mxu0 0.0
    %2591 = vmatpush1.msra.mxu0 0.0
    %2592 = vmatprep.subr.mxu0 0.0
    %2593 = vmatpush1.msra.mxu0 0.0
    %2594 = vmatprep.subr.mxu0 0.0
    %2595 = vmatpush1.msra.mxu0 0.0
    %2596 = vmatprep.subr.mxu0 0.0
    %2597 = vmatpush1.msra.mxu0 %v2566
    %2598 = vmatprep.subr.mxu0 0.0
    %2599 = vmatpush1.msra.mxu0 %v2006
    %2600 = vmatprep.subr.mxu0 0.0
    %2601 = vmatpush2.msra.mxu0 0.0
    %2602 = vmatprep.subr.mxu0 0.0
    %2603 = vmatpush2.msra.mxu0 0.0
    %2604 = vmatprep.subr.mxu0 0.0
    %2605 = vmatpush2.msra.mxu0 0.0
    %2606 = vmatprep.subr.mxu0 0.0
    %2607 = vmatpush2.msra.mxu0 0.0
    %2608 = vmatprep.subr.mxu0 0.0
    %2609 = vmatpush2.msra.mxu0 0.0
    %2610 = vmatprep.subr.mxu0 0.0
    %2611 = vmatpush2.msra.mxu0 0.0
    %2612 = vmatprep.subr.mxu0 0.0
    %2613 = vmatpush2.msra.mxu0 0.0
    %2614 = vmatprep.subr.mxu0 0.0
    %2615 = vmatpush2.msra.mxu0 0.0
    %2616 = vmatprep.subr.mxu0 0.0
    %2617 = vmatpush2.msra.mxu0 0.0
    %2618 = vmatprep.subr.mxu0 0.0
    %2619 = vmatpush2.msra.mxu0 0.0
    %2620 = vmatprep.subr.mxu0 0.0
    %2621 = vmatpush2.msra.mxu0 0.0
    %2622 = vmatprep.subr.mxu0 0.0
    %2623 = vmatpush2.msra.mxu0 0.0
    %2624 = vmatprep.subr.mxu0 0.0
    %2625 = vmatpush2.msra.mxu0 0.0
    %2626 = vmatprep.subr.mxu0 0.0
    %2627 = vmatpush2.msra.mxu0 0.0
    %2628 = vmatprep.subr.mxu0 0.0
    %2629 = vmatpush2.msra.mxu0 0.0
    %2630 = vmatprep.subr.mxu0 0.0
    %2631 = vmatpush2.msra.mxu0 0.0
    %2632 = vmatprep.mubr.f32.mxu0 0.0
    %2633 = vmatmul.mubr.f32.gmra.mxu0 %v2549
    %v2634 = vpop.f32.mrf.mxu0
    %v2635 = vadd.f32 0.0, %v2634
    %v2636 = vpop.f32.mrf.mxu0
    %2637 = vmatprep.mubr.f32.mxu0 0.0
    %2638 = vmatmul.mubr.f32.gmra.mxu0 %v2552
    %v2639 = vpop.f32.mrf.mxu0
    %v2640 = vadd.f32 0.0, %v2639
    %v2641 = vpop.f32.mrf.mxu0
    %2642 = vmatprep.mubr.f32.mxu0 0.0
    %2643 = vmatmul.mubr.f32.gmra.mxu0 %v2555
    %v2644 = vpop.f32.mrf.mxu0
    %v2645 = vadd.f32 0.0, %v2644
    %v2646 = vpop.f32.mrf.mxu0
    %2647 = vmatprep.mubr.f32.mxu0 0.0
    %2648 = vmatmul.mubr.f32.gmra.mxu0 %v2558
    %v2649 = vpop.f32.mrf.mxu0
    %v2650 = vadd.f32 0.0, %v2649
    %v2651 = vpop.f32.mrf.mxu0
    %2652 = vmatprep.mubr.f32.mxu0 0.0
    %2653 = vmatmul.mubr.f32.gmra.mxu0 %v2561
    %v2654 = vpop.f32.mrf.mxu0
    %v2655 = vadd.f32 0.0, %v2654
    %v2656 = vpop.f32.mrf.mxu0
    %2657 = vmatprep.mubr.f32.mxu0 0.0
    %2658 = vmatmul.mubr.f32.gmra.mxu0 %v2564
    %v2659 = vpop.f32.mrf.mxu0
    %v2660 = vadd.f32 0.0, %v2659
    %v2661 = vpop.f32.mrf.mxu0
    %2662 = vdwg.mxu0
    %v2663 = vmul.f32 %v2635, %v1189
    %v2664 = vmul.f32 %v2640, %v1189
    %v2665 = vmul.f32 %v2645, %v1195
    %v2666 = vmul.f32 %v2650, %v1195
    %v2667 = vadd.f32 %v2663, %v2665
    %v2668 = vadd.f32 %v2664, %v2666
    %v2669 = vmul.f32 %v2655, %v1203
    %v2670 = vmul.f32 %v2660, %v1203
    %v2671 = vadd.f32 %v2667, %v2669
    %v2672 = vadd.f32 %v2668, %v2670
    %v2673 = vadd.f32 %v1212, %v2671
    %v2674 = vadd.f32 %v1213, %v2672
    %v2675 = vmax.f32 %v2673, 0.0
    %v2676 = vmax.f32 %v2674, 0.0
    %v2677 = vmax.f32 %v1935, 0.0
    %v2678 = vmax.f32 %v1936, 0.0
    %2679 = vmatprep.subr.mxu0 0.0
    %2680 = vmatpush1.msra.mxu0 0.0
    %2681 = vmatprep.subr.mxu0 0.0
    %2682 = vmatpush1.msra.mxu0 0.0
    %2683 = vmatprep.subr.mxu0 0.0
    %2684 = vmatpush1.msra.mxu0 0.0
    %2685 = vmatprep.subr.mxu0 0.0
    %2686 = vmatpush1.msra.mxu0 0.0
    %2687 = vmatprep.subr.mxu0 0.0
    %2688 = vmatpush1.msra.mxu0 0.0
    %2689 = vmatprep.subr.mxu0 0.0
    %2690 = vmatpush1.msra.mxu0 0.0
    %2691 = vmatprep.subr.mxu0 0.0
    %2692 = vmatpush1.msra.mxu0 0.0
    %2693 = vmatprep.subr.mxu0 0.0
    %2694 = vmatpush1.msra.mxu0 0.0
    %2695 = vmatprep.subr.mxu0 0.0
    %2696 = vmatpush1.msra.mxu0 0.0
    %2697 = vmatprep.subr.mxu0 0.0
    %2698 = vmatpush1.msra.mxu0 0.0
    %2699 = vmatprep.subr.mxu0 0.0
    %2700 = vmatpush1.msra.mxu0 0.0
    %2701 = vmatprep.subr.mxu0 0.0
    %2702 = vmatpush1.msra.mxu0 0.0
    %2703 = vmatprep.subr.mxu0 0.0
    %2704 = vmatpush1.msra.mxu0 0.0
    %2705 = vmatprep.subr.mxu0 0.0
    %2706 = vmatpush1.msra.mxu0 0.0
    %2707 = vmatprep.subr.mxu0 0.0
    %2708 = vmatpush1.msra.mxu0 %v2676
    %2709 = vmatprep.subr.mxu0 0.0
    %2710 = vmatpush1.msra.mxu0 %v2675
    %2711 = vmatprep.subr.mxu0 0.0
    %2712 = vmatpush2.msra.mxu0 0.0
    %2713 = vmatprep.subr.mxu0 0.0
    %2714 = vmatpush2.msra.mxu0 0.0
    %2715 = vmatprep.subr.mxu0 0.0
    %2716 = vmatpush2.msra.mxu0 0.0
    %2717 = vmatprep.subr.mxu0 0.0
    %2718 = vmatpush2.msra.mxu0 0.0
    %2719 = vmatprep.subr.mxu0 0.0
    %2720 = vmatpush2.msra.mxu0 0.0
    %2721 = vmatprep.subr.mxu0 0.0
    %2722 = vmatpush2.msra.mxu0 0.0
    %2723 = vmatprep.subr.mxu0 0.0
    %2724 = vmatpush2.msra.mxu0 0.0
    %2725 = vmatprep.subr.mxu0 0.0
    %2726 = vmatpush2.msra.mxu0 0.0
    %2727 = vmatprep.subr.mxu0 0.0
    %2728 = vmatpush2.msra.mxu0 0.0
    %2729 = vmatprep.subr.mxu0 0.0
    %2730 = vmatpush2.msra.mxu0 0.0
    %2731 = vmatprep.subr.mxu0 0.0
    %2732 = vmatpush2.msra.mxu0 0.0
    %2733 = vmatprep.subr.mxu0 0.0
    %2734 = vmatpush2.msra.mxu0 0.0
    %2735 = vmatprep.subr.mxu0 0.0
    %2736 = vmatpush2.msra.mxu0 0.0
    %2737 = vmatprep.subr.mxu0 0.0
    %2738 = vmatpush2.msra.mxu0 0.0
    %2739 = vmatprep.subr.mxu0 0.0
    %2740 = vmatpush2.msra.mxu0 0.0
    %2741 = vmatprep.subr.mxu0 0.0
    %2742 = vmatpush2.msra.mxu0 0.0
    %2743 = vmatprep.mubr.f32.mxu0 0.0
    %2744 = vmatmul.mubr.f32.gmra.mxu0 %v36
    %v2745 = vpop.f32.mrf.mxu0
    %v2746 = vadd.f32 0.0, %v2745
    %v2747 = vpop.f32.mrf.mxu0
    %2748 = vmatprep.mubr.f32.mxu0 0.0
    %2749 = vmatmul.mubr.f32.gmra.mxu0 %v39
    %v2750 = vpop.f32.mrf.mxu0
    %v2751 = vadd.f32 0.0, %v2750
    %v2752 = vpop.f32.mrf.mxu0
    %2753 = vdwg.mxu0
    %v2755 = vsel %vm123, %v2678, 0
    %2757 = vmatprep.subr.mxu0 0.0
    %2758 = vmatpush1.msra.mxu0 0.0
    %2759 = vmatprep.subr.mxu0 0.0
    %2760 = vmatpush1.msra.mxu0 0.0
    %2761 = vmatprep.subr.mxu0 0.0
    %2762 = vmatpush1.msra.mxu0 0.0
    %2763 = vmatprep.subr.mxu0 0.0
    %2764 = vmatpush1.msra.mxu0 0.0
    %2765 = vmatprep.subr.mxu0 0.0
    %2766 = vmatpush1.msra.mxu0 0.0
    %2767 = vmatprep.subr.mxu0 0.0
    %2768 = vmatpush1.msra.mxu0 0.0
    %2769 = vmatprep.subr.mxu0 0.0
    %2770 = vmatpush1.msra.mxu0 0.0
    %2771 = vmatprep.subr.mxu0 0.0
    %2772 = vmatpush1.msra.mxu0 0.0
    %2773 = vmatprep.subr.mxu0 0.0
    %2774 = vmatpush1.msra.mxu0 0.0
    %2775 = vmatprep.subr.mxu0 0.0
    %2776 = vmatpush1.msra.mxu0 0.0
    %2777 = vmatprep.subr.mxu0 0.0
    %2778 = vmatpush1.msra.mxu0 0.0
    %2779 = vmatprep.subr.mxu0 0.0
    %2780 = vmatpush1.msra.mxu0 0.0
    %2781 = vmatprep.subr.mxu0 0.0
    %2782 = vmatpush1.msra.mxu0 0.0
    %2783 = vmatprep.subr.mxu0 0.0
    %2784 = vmatpush1.msra.mxu0 0.0
    %2785 = vmatprep.subr.mxu0 0.0
    %2786 = vmatpush1.msra.mxu0 %v2755
    %2787 = vmatprep.subr.mxu0 0.0
    %2788 = vmatpush1.msra.mxu0 %v2677
    %2789 = vmatprep.subr.mxu0 0.0
    %2790 = vmatpush2.msra.mxu0 0.0
    %2791 = vmatprep.subr.mxu0 0.0
    %2792 = vmatpush2.msra.mxu0 0.0
    %2793 = vmatprep.subr.mxu0 0.0
    %2794 = vmatpush2.msra.mxu0 0.0
    %2795 = vmatprep.subr.mxu0 0.0
    %2796 = vmatpush2.msra.mxu0 0.0
    %2797 = vmatprep.subr.mxu0 0.0
    %2798 = vmatpush2.msra.mxu0 0.0
    %2799 = vmatprep.subr.mxu0 0.0
    %2800 = vmatpush2.msra.mxu0 0.0
    %2801 = vmatprep.subr.mxu0 0.0
    %2802 = vmatpush2.msra.mxu0 0.0
    %2803 = vmatprep.subr.mxu0 0.0
    %2804 = vmatpush2.msra.mxu0 0.0
    %2805 = vmatprep.subr.mxu0 0.0
    %2806 = vmatpush2.msra.mxu0 0.0
    %2807 = vmatprep.subr.mxu0 0.0
    %2808 = vmatpush2.msra.mxu0 0.0
    %2809 = vmatprep.subr.mxu0 0.0
    %2810 = vmatpush2.msra.mxu0 0.0
    %2811 = vmatprep.subr.mxu0 0.0
    %2812 = vmatpush2.msra.mxu0 0.0
    %2813 = vmatprep.subr.mxu0 0.0
    %2814 = vmatpush2.msra.mxu0 0.0
    %2815 = vmatprep.subr.mxu0 0.0
    %2816 = vmatpush2.msra.mxu0 0.0
    %2817 = vmatprep.subr.mxu0 0.0
    %2818 = vmatpush2.msra.mxu0 0.0
    %2819 = vmatprep.subr.mxu0 0.0
    %2820 = vmatpush2.msra.mxu0 0.0
    %2821 = vmatprep.mubr.f32.mxu0 0.0
    %2822 = vmatmul.mubr.f32.gmra.mxu0 %v118
    %v2823 = vpop.f32.mrf.mxu0
    %v2824 = vadd.f32 0.0, %v2823
    %v2825 = vpop.f32.mrf.mxu0
    %2826 = vmatprep.mubr.f32.mxu0 0.0
    %2827 = vmatmul.mubr.f32.gmra.mxu0 %v121
    %v2828 = vpop.f32.mrf.mxu0
    %v2829 = vadd.f32 0.0, %v2828
    %v2830 = vpop.f32.mrf.mxu0
    %2831 = vdwg.mxu0
    %2834 = vrot.lane.b32.xlu0 %v2824, 48
    %v2835 = vpop.permute.xlu0 %2834
    %2836 = vrot.lane.b32.xlu0 %v2829, 48
    %v2837 = vpop.permute.xlu0 %2836
    %v2840 = vsel %vm601, %v2746, %v2835
    %v2841 = vsel %vm601, %v2751, %v2837
    %v2842 = vld [vmem:[%s5 + $0x20] sm:$0xff]
    %v2843 = vld [vmem:[%s5 + $0x28] sm:$0xff]
    %v2844 = vld [vmem:[%s5 + $0x30] sm:$0xff]
    %v2845 = vld [vmem:[%s5 + $0x38] sm:$0xff]
    %v2846 = vld [vmem:[%s5 + $0x40] sm:$0xff]
    %v2847 = vld [vmem:[%s5 + $0x48] sm:$0xff]
    %v2848 = vld [vmem:[%s5 + $0x50] sm:$0xff]
    %v2849 = vld [vmem:[%s5 + $0x58] sm:$0xff]
    %v2850 = vld [vmem:[%s5 + $0x60] sm:$0xff]
    %v2851 = vld [vmem:[%s5 + $0x68] sm:$0xff]
    %v2852 = vld [vmem:[%s5 + $0x70] sm:$0xff]
    %v2853 = vld [vmem:[%s5 + $0x78] sm:$0xff]
    %v2854 = vld [vmem:[%s5 + $0x80] sm:$0x1]
    %v2855 = vlaneseq
    %v2856 = vshrl.u32 %v2855, 7
    %v2857 = vsub.s32 0, %v2856
    %v2858 = vrot.slane %v2854, %v2857
    %vm2859 = vcmask 785408
    %v2861 = vsel %vm2859, %v2840, 0
    %v2864 = vsel %vm2859, %v2841, 0
    %2866 = vmatprep.subr.mxu0 0.0
    %2867 = vmatpush1.msra.mxu0 0.0
    %2868 = vmatprep.subr.mxu0 0.0
    %2869 = vmatpush1.msra.mxu0 0.0
    %2870 = vmatprep.subr.mxu0 0.0
    %2871 = vmatpush1.msra.mxu0 0.0
    %2872 = vmatprep.subr.mxu0 0.0
    %2873 = vmatpush1.msra.mxu0 0.0
    %2874 = vmatprep.subr.mxu0 0.0
    %2875 = vmatpush1.msra.mxu0 %v2853
    %2876 = vmatprep.subr.mxu0 0.0
    %2877 = vmatpush1.msra.mxu0 %v2852
    %2878 = vmatprep.subr.mxu0 0.0
    %2879 = vmatpush1.msra.mxu0 %v2851
    %2880 = vmatprep.subr.mxu0 0.0
    %2881 = vmatpush1.msra.mxu0 %v2850
    %2882 = vmatprep.subr.mxu0 0.0
    %2883 = vmatpush1.msra.mxu0 %v2849
    %2884 = vmatprep.subr.mxu0 0.0
    %2885 = vmatpush1.msra.mxu0 %v2848
    %2886 = vmatprep.subr.mxu0 0.0
    %2887 = vmatpush1.msra.mxu0 %v2847
    %2888 = vmatprep.subr.mxu0 0.0
    %2889 = vmatpush1.msra.mxu0 %v2846
    %2890 = vmatprep.subr.mxu0 0.0
    %2891 = vmatpush1.msra.mxu0 %v2845
    %2892 = vmatprep.subr.mxu0 0.0
    %2893 = vmatpush1.msra.mxu0 %v2844
    %2894 = vmatprep.subr.mxu0 0.0
    %2895 = vmatpush1.msra.mxu0 %v2843
    %2896 = vmatprep.subr.mxu0 0.0
    %2897 = vmatpush1.msra.mxu0 %v2842
    %2898 = vmatprep.subr.mxu0 0.0
    %2899 = vmatpush2.msra.mxu0 0.0
    %2900 = vmatprep.subr.mxu0 0.0
    %2901 = vmatpush2.msra.mxu0 0.0
    %2902 = vmatprep.subr.mxu0 0.0
    %2903 = vmatpush2.msra.mxu0 0.0
    %2904 = vmatprep.subr.mxu0 0.0
    %2905 = vmatpush2.msra.mxu0 0.0
    %2906 = vmatprep.subr.mxu0 0.0
    %2907 = vmatpush2.msra.mxu0 0.0
    %2908 = vmatprep.subr.mxu0 0.0
    %2909 = vmatpush2.msra.mxu0 0.0
    %2910 = vmatprep.subr.mxu0 0.0
    %2911 = vmatpush2.msra.mxu0 0.0
    %2912 = vmatprep.subr.mxu0 0.0
    %2913 = vmatpush2.msra.mxu0 0.0
    %2914 = vmatprep.subr.mxu0 0.0
    %2915 = vmatpush2.msra.mxu0 0.0
    %2916 = vmatprep.subr.mxu0 0.0
    %2917 = vmatpush2.msra.mxu0 0.0
    %2918 = vmatprep.subr.mxu0 0.0
    %2919 = vmatpush2.msra.mxu0 0.0
    %2920 = vmatprep.subr.mxu0 0.0
    %2921 = vmatpush2.msra.mxu0 0.0
    %2922 = vmatprep.subr.mxu0 0.0
    %2923 = vmatpush2.msra.mxu0 0.0
    %2924 = vmatprep.subr.mxu0 0.0
    %2925 = vmatpush2.msra.mxu0 0.0
    %2926 = vmatprep.subr.mxu0 0.0
    %2927 = vmatpush2.msra.mxu0 0.0
    %2928 = vmatprep.subr.mxu0 0.0
    %2929 = vmatpush2.msra.mxu0 0.0
    %2930 = vmatprep.mubr.f32.mxu0 0.0
    %2931 = vmatmul.mubr.f32.gmra.mxu0 %v2861
    %v2932 = vpop.f32.mrf.mxu0
    %v2933 = vadd.f32 %v2858, %v2932
    %v2934 = vpop.f32.mrf.mxu0
    %2935 = vmatprep.mubr.f32.mxu0 0.0
    %2936 = vmatmul.mubr.f32.gmra.mxu0 %v2864
    %v2937 = vpop.f32.mrf.mxu0
    %v2938 = vadd.f32 %v2858, %v2937
    %v2939 = vpop.f32.mrf.mxu0
    %2940 = vdwg.mxu0
    %2941 = vmatprep.subr.mxu0 0.0
    %2942 = vmatpush1.msra.mxu0 0.0
    %2943 = vmatprep.subr.mxu0 0.0
    %2944 = vmatpush1.msra.mxu0 0.0
    %2945 = vmatprep.subr.mxu0 0.0
    %2946 = vmatpush1.msra.mxu0 0.0
    %2947 = vmatprep.subr.mxu0 0.0
    %2948 = vmatpush1.msra.mxu0 0.0
    %2949 = vmatprep.subr.mxu0 0.0
    %2950 = vmatpush1.msra.mxu0 0.0
    %2951 = vmatprep.subr.mxu0 0.0
    %2952 = vmatpush1.msra.mxu0 0.0
    %2953 = vmatprep.subr.mxu0 0.0
    %2954 = vmatpush1.msra.mxu0 0.0
    %2955 = vmatprep.subr.mxu0 0.0
    %2956 = vmatpush1.msra.mxu0 0.0
    %2957 = vmatprep.subr.mxu0 0.0
    %2958 = vmatpush1.msra.mxu0 0.0
    %2959 = vmatprep.subr.mxu0 0.0
    %2960 = vmatpush1.msra.mxu0 0.0
    %2961 = vmatprep.subr.mxu0 0.0
    %2962 = vmatpush1.msra.mxu0 0.0
    %2963 = vmatprep.subr.mxu0 0.0
    %2964 = vmatpush1.msra.mxu0 0.0
    %2965 = vmatprep.subr.mxu0 0.0
    %2966 = vmatpush1.msra.mxu0 0.0
    %2967 = vmatprep.subr.mxu0 0.0
    %2968 = vmatpush1.msra.mxu0 0.0
    %2969 = vmatprep.subr.mxu0 0.0
    %2970 = vmatpush1.msra.mxu0 %v2676
    %2971 = vmatprep.subr.mxu0 0.0
    %2972 = vmatpush1.msra.mxu0 %v2675
    %2973 = vmatprep.subr.mxu0 0.0
    %2974 = vmatpush2.msra.mxu0 0.0
    %2975 = vmatprep.subr.mxu0 0.0
    %2976 = vmatpush2.msra.mxu0 0.0
    %2977 = vmatprep.subr.mxu0 0.0
    %2978 = vmatpush2.msra.mxu0 0.0
    %2979 = vmatprep.subr.mxu0 0.0
    %2980 = vmatpush2.msra.mxu0 0.0
    %2981 = vmatprep.subr.mxu0 0.0
    %2982 = vmatpush2.msra.mxu0 0.0
    %2983 = vmatprep.subr.mxu0 0.0
    %2984 = vmatpush2.msra.mxu0 0.0
    %2985 = vmatprep.subr.mxu0 0.0
    %2986 = vmatpush2.msra.mxu0 0.0
    %2987 = vmatprep.subr.mxu0 0.0
    %2988 = vmatpush2.msra.mxu0 0.0
    %2989 = vmatprep.subr.mxu0 0.0
    %2990 = vmatpush2.msra.mxu0 0.0
    %2991 = vmatprep.subr.mxu0 0.0
    %2992 = vmatpush2.msra.mxu0 0.0
    %2993 = vmatprep.subr.mxu0 0.0
    %2994 = vmatpush2.msra.mxu0 0.0
    %2995 = vmatprep.subr.mxu0 0.0
    %2996 = vmatpush2.msra.mxu0 0.0
    %2997 = vmatprep.subr.mxu0 0.0
    %2998 = vmatpush2.msra.mxu0 0.0
    %2999 = vmatprep.subr.mxu0 0.0
    %3000 = vmatpush2.msra.mxu0 0.0
    %3001 = vmatprep.subr.mxu0 0.0
    %3002 = vmatpush2.msra.mxu0 0.0
    %3003 = vmatprep.subr.mxu0 0.0
    %3004 = vmatpush2.msra.mxu0 0.0
    %3005 = vmatprep.mubr.f32.mxu0 0.0
    %3006 = vmatmul.mubr.f32.gmra.mxu0 %v316
    %v3007 = vpop.f32.mrf.mxu0
    %v3008 = vadd.f32 0.0, %v3007
    %v3009 = vpop.f32.mrf.mxu0
    %3010 = vmatprep.mubr.f32.mxu0 0.0
    %3011 = vmatmul.mubr.f32.gmra.mxu0 %v319
    %v3012 = vpop.f32.mrf.mxu0
    %v3013 = vadd.f32 0.0, %v3012
    %v3014 = vpop.f32.mrf.mxu0
    %3015 = vdwg.mxu0
    %v3016 = vld [vmem:[%s5 + $0xd0] sm:$0xff]
    %v3017 = vld [vmem:[%s5 + $0xd8] sm:$0xff]
    %v3018 = vld [vmem:[%s5 + $0xe0] sm:$0xff]
    %v3019 = vld [vmem:[%s5 + $0xe8] sm:$0xff]
    %v3020 = vld [vmem:[%s5 + $0xf0] sm:$0xff]
    %v3021 = vld [vmem:[%s5 + $0xf8] sm:$0xff]
    %v3022 = vld [vmem:[%s5 + $0x100] sm:$0x1]
    %v3023 = vlaneseq
    %v3024 = vshrl.u32 %v3023, 7
    %v3025 = vsub.s32 0, %v3024
    %v3026 = vrot.slane %v3022, %v3025
    %v3028 = vsel %vm601, %v3008, 0
    %v3031 = vsel %vm601, %v3013, 0
    %3033 = vmatprep.subr.mxu0 0.0
    %3034 = vmatpush1.msra.mxu0 0.0
    %3035 = vmatprep.subr.mxu0 0.0
    %3036 = vmatpush1.msra.mxu0 0.0
    %3037 = vmatprep.subr.mxu0 0.0
    %3038 = vmatpush1.msra.mxu0 0.0
    %3039 = vmatprep.subr.mxu0 0.0
    %3040 = vmatpush1.msra.mxu0 0.0
    %3041 = vmatprep.subr.mxu0 0.0
    %3042 = vmatpush1.msra.mxu0 0.0
    %3043 = vmatprep.subr.mxu0 0.0
    %3044 = vmatpush1.msra.mxu0 0.0
    %3045 = vmatprep.subr.mxu0 0.0
    %3046 = vmatpush1.msra.mxu0 0.0
    %3047 = vmatprep.subr.mxu0 0.0
    %3048 = vmatpush1.msra.mxu0 0.0
    %3049 = vmatprep.subr.mxu0 0.0
    %3050 = vmatpush1.msra.mxu0 0.0
    %3051 = vmatprep.subr.mxu0 0.0
    %3052 = vmatpush1.msra.mxu0 0.0
    %3053 = vmatprep.subr.mxu0 0.0
    %3054 = vmatpush1.msra.mxu0 %v3021
    %3055 = vmatprep.subr.mxu0 0.0
    %3056 = vmatpush1.msra.mxu0 %v3020
    %3057 = vmatprep.subr.mxu0 0.0
    %3058 = vmatpush1.msra.mxu0 %v3019
    %3059 = vmatprep.subr.mxu0 0.0
    %3060 = vmatpush1.msra.mxu0 %v3018
    %3061 = vmatprep.subr.mxu0 0.0
    %3062 = vmatpush1.msra.mxu0 %v3017
    %3063 = vmatprep.subr.mxu0 0.0
    %3064 = vmatpush1.msra.mxu0 %v3016
    %3065 = vmatprep.subr.mxu0 0.0
    %3066 = vmatpush2.msra.mxu0 0.0
    %3067 = vmatprep.subr.mxu0 0.0
    %3068 = vmatpush2.msra.mxu0 0.0
    %3069 = vmatprep.subr.mxu0 0.0
    %3070 = vmatpush2.msra.mxu0 0.0
    %3071 = vmatprep.subr.mxu0 0.0
    %3072 = vmatpush2.msra.mxu0 0.0
    %3073 = vmatprep.subr.mxu0 0.0
    %3074 = vmatpush2.msra.mxu0 0.0
    %3075 = vmatprep.subr.mxu0 0.0
    %3076 = vmatpush2.msra.mxu0 0.0
    %3077 = vmatprep.subr.mxu0 0.0
    %3078 = vmatpush2.msra.mxu0 0.0
    %3079 = vmatprep.subr.mxu0 0.0
    %3080 = vmatpush2.msra.mxu0 0.0
    %3081 = vmatprep.subr.mxu0 0.0
    %3082 = vmatpush2.msra.mxu0 0.0
    %3083 = vmatprep.subr.mxu0 0.0
    %3084 = vmatpush2.msra.mxu0 0.0
    %3085 = vmatprep.subr.mxu0 0.0
    %3086 = vmatpush2.msra.mxu0 0.0
    %3087 = vmatprep.subr.mxu0 0.0
    %3088 = vmatpush2.msra.mxu0 0.0
    %3089 = vmatprep.subr.mxu0 0.0
    %3090 = vmatpush2.msra.mxu0 0.0
    %3091 = vmatprep.subr.mxu0 0.0
    %3092 = vmatpush2.msra.mxu0 0.0
    %3093 = vmatprep.subr.mxu0 0.0
    %3094 = vmatpush2.msra.mxu0 0.0
    %3095 = vmatprep.subr.mxu0 0.0
    %3096 = vmatpush2.msra.mxu0 0.0
    %3097 = vmatprep.mubr.f32.mxu0 0.0
    %3098 = vmatmul.mubr.f32.gmra.mxu0 %v3028
    %v3099 = vpop.f32.mrf.mxu0
    %v3100 = vadd.f32 %v3026, %v3099
    %v3101 = vpop.f32.mrf.mxu0
    %3102 = vmatprep.mubr.f32.mxu0 0.0
    %3103 = vmatmul.mubr.f32.gmra.mxu0 %v3031
    %v3104 = vpop.f32.mrf.mxu0
    %v3105 = vadd.f32 %v3026, %v3104
    %v3106 = vpop.f32.mrf.mxu0
    %3107 = vdwg.mxu0
    %v3108 = vxor.u32 %v3100, 2147483648
    %v3109 = vxor.u32 %v3105, 2147483648
    %v3110 = vmul.f32 %v3108, 1.442695
    %v3111 = vpow.pop %v3110
    %v3112 = vmul.f32 %v3109, 1.442695
    %v3113 = vpow.pop %v3112
    %v3114 = vadd.f32 %v3111, 1.0
    %v3115 = vadd.f32 %v3113, 1.0
    %v3116 = vrcp.pop %v3114
    %v3117 = vmul.f32 1.0, %v3116
    %v3118 = vrcp.pop %v3115
    %v3119 = vmul.f32 1.0, %v3118
    %v3120 = vxor.u32 %v2933, 2147483648
    %v3121 = vxor.u32 %v2938, 2147483648
    %v3122 = vmul.f32 %v3120, 1.442695
    %v3123 = vpow.pop %v3122
    %v3124 = vmul.f32 %v3121, 1.442695
    %v3125 = vpow.pop %v3124
    %v3126 = vadd.f32 %v3123, 1.0
    %v3127 = vadd.f32 %v3125, 1.0
    %v3128 = vrcp.pop %v3126
    %v3129 = vmul.f32 1.0, %v3128
    %v3130 = vrcp.pop %v3127
    %v3131 = vmul.f32 1.0, %v3130
    %v3133 = vsel %vm34, 0.0625, 0
    %3135 = vmatprep.subr.mxu0 0.0
    %3136 = vmatpush1.msra.mxu0 0.0
    %3137 = vmatprep.subr.mxu0 0.0
    %3138 = vmatpush1.msra.mxu0 0.0
    %3139 = vmatprep.subr.mxu0 0.0
    %3140 = vmatpush1.msra.mxu0 0.0
    %3141 = vmatprep.subr.mxu0 0.0
    %3142 = vmatpush1.msra.mxu0 0.0
    %3143 = vmatprep.subr.mxu0 0.0
    %3144 = vmatpush1.msra.mxu0 0.0
    %3145 = vmatprep.subr.mxu0 0.0
    %3146 = vmatpush1.msra.mxu0 0.0
    %3147 = vmatprep.subr.mxu0 0.0
    %3148 = vmatpush1.msra.mxu0 0.0
    %3149 = vmatprep.subr.mxu0 0.0
    %3150 = vmatpush1.msra.mxu0 0.0
    %3151 = vmatprep.subr.mxu0 0.0
    %3152 = vmatpush1.msra.mxu0 0.0
    %3153 = vmatprep.subr.mxu0 0.0
    %3154 = vmatpush1.msra.mxu0 0.0
    %3155 = vmatprep.subr.mxu0 0.0
    %3156 = vmatpush1.msra.mxu0 0.0
    %3157 = vmatprep.subr.mxu0 0.0
    %3158 = vmatpush1.msra.mxu0 0.0
    %3159 = vmatprep.subr.mxu0 0.0
    %3160 = vmatpush1.msra.mxu0 0.0
    %3161 = vmatprep.subr.mxu0 0.0
    %3162 = vmatpush1.msra.mxu0 0.0
    %3163 = vmatprep.subr.mxu0 0.0
    %3164 = vmatpush1.msra.mxu0 %v3131
    %3165 = vmatprep.subr.mxu0 0.0
    %3166 = vmatpush1.msra.mxu0 %v3129
    %3167 = vmatprep.subr.mxu0 0.0
    %3168 = vmatpush2.msra.mxu0 0.0
    %3169 = vmatprep.subr.mxu0 0.0
    %3170 = vmatpush2.msra.mxu0 0.0
    %3171 = vmatprep.subr.mxu0 0.0
    %3172 = vmatpush2.msra.mxu0 0.0
    %3173 = vmatprep.subr.mxu0 0.0
    %3174 = vmatpush2.msra.mxu0 0.0
    %3175 = vmatprep.subr.mxu0 0.0
    %3176 = vmatpush2.msra.mxu0 0.0
    %3177 = vmatprep.subr.mxu0 0.0
    %3178 = vmatpush2.msra.mxu0 0.0
    %3179 = vmatprep.subr.mxu0 0.0
    %3180 = vmatpush2.msra.mxu0 0.0
    %3181 = vmatprep.subr.mxu0 0.0
    %3182 = vmatpush2.msra.mxu0 0.0
    %3183 = vmatprep.subr.mxu0 0.0
    %3184 = vmatpush2.msra.mxu0 0.0
    %3185 = vmatprep.subr.mxu0 0.0
    %3186 = vmatpush2.msra.mxu0 0.0
    %3187 = vmatprep.subr.mxu0 0.0
    %3188 = vmatpush2.msra.mxu0 0.0
    %3189 = vmatprep.subr.mxu0 0.0
    %3190 = vmatpush2.msra.mxu0 0.0
    %3191 = vmatprep.subr.mxu0 0.0
    %3192 = vmatpush2.msra.mxu0 0.0
    %3193 = vmatprep.subr.mxu0 0.0
    %3194 = vmatpush2.msra.mxu0 0.0
    %3195 = vmatprep.subr.mxu0 0.0
    %3196 = vmatpush2.msra.mxu0 0.0
    %3197 = vmatprep.subr.mxu0 0.0
    %3198 = vmatpush2.msra.mxu0 0.0
    %3199 = vmatprep.mubr.f32.mxu0 0.0
    %3200 = vmatmul.mubr.f32.gmra.mxu0 %v3133
    %v3201 = vpop.f32.mrf.mxu0
    %v3202 = vadd.f32 0.0, %v3201
    %v3203 = vpop.f32.mrf.mxu0
    %3204 = vdwg.mxu0
    %v3206 = vsel %vm116, 0.083333336, 0
    %v3209 = vsel %vm123, %v3119, 0
    %3211 = vmatprep.subr.mxu0 0.0
    %3212 = vmatpush1.msra.mxu0 0.0
    %3213 = vmatprep.subr.mxu0 0.0
    %3214 = vmatpush1.msra.mxu0 0.0
    %3215 = vmatprep.subr.mxu0 0.0
    %3216 = vmatpush1.msra.mxu0 0.0
    %3217 = vmatprep.subr.mxu0 0.0
    %3218 = vmatpush1.msra.mxu0 0.0
    %3219 = vmatprep.subr.mxu0 0.0
    %3220 = vmatpush1.msra.mxu0 0.0
    %3221 = vmatprep.subr.mxu0 0.0
    %3222 = vmatpush1.msra.mxu0 0.0
    %3223 = vmatprep.subr.mxu0 0.0
    %3224 = vmatpush1.msra.mxu0 0.0
    %3225 = vmatprep.subr.mxu0 0.0
    %3226 = vmatpush1.msra.mxu0 0.0
    %3227 = vmatprep.subr.mxu0 0.0
    %3228 = vmatpush1.msra.mxu0 0.0
    %3229 = vmatprep.subr.mxu0 0.0
    %3230 = vmatpush1.msra.mxu0 0.0
    %3231 = vmatprep.subr.mxu0 0.0
    %3232 = vmatpush1.msra.mxu0 0.0
    %3233 = vmatprep.subr.mxu0 0.0
    %3234 = vmatpush1.msra.mxu0 0.0
    %3235 = vmatprep.subr.mxu0 0.0
    %3236 = vmatpush1.msra.mxu0 0.0
    %3237 = vmatprep.subr.mxu0 0.0
    %3238 = vmatpush1.msra.mxu0 0.0
    %3239 = vmatprep.subr.mxu0 0.0
    %3240 = vmatpush1.msra.mxu0 %v3209
    %3241 = vmatprep.subr.mxu0 0.0
    %3242 = vmatpush1.msra.mxu0 %v3117
    %3243 = vmatprep.subr.mxu0 0.0
    %3244 = vmatpush2.msra.mxu0 0.0
    %3245 = vmatprep.subr.mxu0 0.0
    %3246 = vmatpush2.msra.mxu0 0.0
    %3247 = vmatprep.subr.mxu0 0.0
    %3248 = vmatpush2.msra.mxu0 0.0
    %3249 = vmatprep.subr.mxu0 0.0
    %3250 = vmatpush2.msra.mxu0 0.0
    %3251 = vmatprep.subr.mxu0 0.0
    %3252 = vmatpush2.msra.mxu0 0.0
    %3253 = vmatprep.subr.mxu0 0.0
    %3254 = vmatpush2.msra.mxu0 0.0
    %3255 = vmatprep.subr.mxu0 0.0
    %3256 = vmatpush2.msra.mxu0 0.0
    %3257 = vmatprep.subr.mxu0 0.0
    %3258 = vmatpush2.msra.mxu0 0.0
    %3259 = vmatprep.subr.mxu0 0.0
    %3260 = vmatpush2.msra.mxu0 0.0
    %3261 = vmatprep.subr.mxu0 0.0
    %3262 = vmatpush2.msra.mxu0 0.0
    %3263 = vmatprep.subr.mxu0 0.0
    %3264 = vmatpush2.msra.mxu0 0.0
    %3265 = vmatprep.subr.mxu0 0.0
    %3266 = vmatpush2.msra.mxu0 0.0
    %3267 = vmatprep.subr.mxu0 0.0
    %3268 = vmatpush2.msra.mxu0 0.0
    %3269 = vmatprep.subr.mxu0 0.0
    %3270 = vmatpush2.msra.mxu0 0.0
    %3271 = vmatprep.subr.mxu0 0.0
    %3272 = vmatpush2.msra.mxu0 0.0
    %3273 = vmatprep.subr.mxu0 0.0
    %3274 = vmatpush2.msra.mxu0 0.0
    %3275 = vmatprep.mubr.f32.mxu0 0.0
    %3276 = vmatmul.mubr.f32.gmra.mxu0 %v3206
    %v3277 = vpop.f32.mrf.mxu0
    %v3278 = vadd.f32 %v3202, %v3277
    %v3279 = vpop.f32.mrf.mxu0
    %3280 = vdwg.mxu0
    %v3281 = vld [vmem:[%s5 + $0x270] sm:$0xff]
    %v3282 = vld [vmem:[%s5 + $0x278] sm:$0xff]
    %v3283 = vld [vmem:[%s5 + $0x280] sm:$0xff]
    %v3284 = vld [vmem:[%s5 + $0x288] sm:$0xff]
    %v3285 = vld [vmem:[%s5 + $0x290] sm:$0xff]
    %v3286 = vld [vmem:[%s5 + $0x298] sm:$0xff]
    %v3287 = vld [vmem:[%s5 + $0x2a0] sm:$0x1]
    %v3289 = vsel %vm601, %v3278, 0
    %3291 = vmatprep.subr.mxu0 0.0
    %3292 = vmatpush1.msra.mxu0 0.0
    %3293 = vmatprep.subr.mxu0 0.0
    %3294 = vmatpush1.msra.mxu0 0.0
    %3295 = vmatprep.subr.mxu0 0.0
    %3296 = vmatpush1.msra.mxu0 0.0
    %3297 = vmatprep.subr.mxu0 0.0
    %3298 = vmatpush1.msra.mxu0 0.0
    %3299 = vmatprep.subr.mxu0 0.0
    %3300 = vmatpush1.msra.mxu0 0.0
    %3301 = vmatprep.subr.mxu0 0.0
    %3302 = vmatpush1.msra.mxu0 0.0
    %3303 = vmatprep.subr.mxu0 0.0
    %3304 = vmatpush1.msra.mxu0 0.0
    %3305 = vmatprep.subr.mxu0 0.0
    %3306 = vmatpush1.msra.mxu0 0.0
    %3307 = vmatprep.subr.mxu0 0.0
    %3308 = vmatpush1.msra.mxu0 0.0
    %3309 = vmatprep.subr.mxu0 0.0
    %3310 = vmatpush1.msra.mxu0 0.0
    %3311 = vmatprep.subr.mxu0 0.0
    %3312 = vmatpush1.msra.mxu0 %v3286
    %3313 = vmatprep.subr.mxu0 0.0
    %3314 = vmatpush1.msra.mxu0 %v3285
    %3315 = vmatprep.subr.mxu0 0.0
    %3316 = vmatpush1.msra.mxu0 %v3284
    %3317 = vmatprep.subr.mxu0 0.0
    %3318 = vmatpush1.msra.mxu0 %v3283
    %3319 = vmatprep.subr.mxu0 0.0
    %3320 = vmatpush1.msra.mxu0 %v3282
    %3321 = vmatprep.subr.mxu0 0.0
    %3322 = vmatpush1.msra.mxu0 %v3281
    %3323 = vmatprep.subr.mxu0 0.0
    %3324 = vmatpush2.msra.mxu0 0.0
    %3325 = vmatprep.subr.mxu0 0.0
    %3326 = vmatpush2.msra.mxu0 0.0
    %3327 = vmatprep.subr.mxu0 0.0
    %3328 = vmatpush2.msra.mxu0 0.0
    %3329 = vmatprep.subr.mxu0 0.0
    %3330 = vmatpush2.msra.mxu0 0.0
    %3331 = vmatprep.subr.mxu0 0.0
    %3332 = vmatpush2.msra.mxu0 0.0
    %3333 = vmatprep.subr.mxu0 0.0
    %3334 = vmatpush2.msra.mxu0 0.0
    %3335 = vmatprep.subr.mxu0 0.0
    %3336 = vmatpush2.msra.mxu0 0.0
    %3337 = vmatprep.subr.mxu0 0.0
    %3338 = vmatpush2.msra.mxu0 0.0
    %3339 = vmatprep.subr.mxu0 0.0
    %3340 = vmatpush2.msra.mxu0 0.0
    %3341 = vmatprep.subr.mxu0 0.0
    %3342 = vmatpush2.msra.mxu0 0.0
    %3343 = vmatprep.subr.mxu0 0.0
    %3344 = vmatpush2.msra.mxu0 0.0
    %3345 = vmatprep.subr.mxu0 0.0
    %3346 = vmatpush2.msra.mxu0 0.0
    %3347 = vmatprep.subr.mxu0 0.0
    %3348 = vmatpush2.msra.mxu0 0.0
    %3349 = vmatprep.subr.mxu0 0.0
    %3350 = vmatpush2.msra.mxu0 0.0
    %3351 = vmatprep.subr.mxu0 0.0
    %3352 = vmatpush2.msra.mxu0 0.0
    %3353 = vmatprep.subr.mxu0 0.0
    %3354 = vmatpush2.msra.mxu0 0.0
    %3355 = vmatprep.mubr.f32.mxu0 0.0
    %3356 = vmatmul.mubr.f32.gmra.mxu0 %v3289
    %v3357 = vpop.f32.mrf.mxu0
    %v3358 = vadd.f32 %v3287, %v3357
    %v3359 = vpop.f32.mrf.mxu0
    %3360 = vdwg.mxu0
    %v3361 = vxor.u32 %v3358, 2147483648
    %v3362 = vmul.f32 %v3361, 1.442695
    %v3363 = vpow.pop %v3362
    %v3364 = vadd.f32 %v3363, 1.0
    %v3365 = vrcp.pop %v3364
    %v3366 = vmul.f32 1.0, %v3365
    %v3367 = vld [vmem:[%s5 + $0x2a8] sm:$0xff]
    %v3368 = vld [vmem:[%s5 + $0x2b0] sm:$0xf]
    %v3370 = vsel %vm116, %v3366, 0
    %v3373 = vsel %vm123, %v3368, 0
    %3375 = vmatprep.subr.mxu0 0.0
    %3376 = vmatpush1.msra.mxu0 0.0
    %3377 = vmatprep.subr.mxu0 0.0
    %3378 = vmatpush1.msra.mxu0 0.0
    %3379 = vmatprep.subr.mxu0 0.0
    %3380 = vmatpush1.msra.mxu0 0.0
    %3381 = vmatprep.subr.mxu0 0.0
    %3382 = vmatpush1.msra.mxu0 0.0
    %3383 = vmatprep.subr.mxu0 0.0
    %3384 = vmatpush1.msra.mxu0 0.0
    %3385 = vmatprep.subr.mxu0 0.0
    %3386 = vmatpush1.msra.mxu0 0.0
    %3387 = vmatprep.subr.mxu0 0.0
    %3388 = vmatpush1.msra.mxu0 0.0
    %3389 = vmatprep.subr.mxu0 0.0
    %3390 = vmatpush1.msra.mxu0 0.0
    %3391 = vmatprep.subr.mxu0 0.0
    %3392 = vmatpush1.msra.mxu0 0.0
    %3393 = vmatprep.subr.mxu0 0.0
    %3394 = vmatpush1.msra.mxu0 0.0
    %3395 = vmatprep.subr.mxu0 0.0
    %3396 = vmatpush1.msra.mxu0 0.0
    %3397 = vmatprep.subr.mxu0 0.0
    %3398 = vmatpush1.msra.mxu0 0.0
    %3399 = vmatprep.subr.mxu0 0.0
    %3400 = vmatpush1.msra.mxu0 0.0
    %3401 = vmatprep.subr.mxu0 0.0
    %3402 = vmatpush1.msra.mxu0 0.0
    %3403 = vmatprep.subr.mxu0 0.0
    %3404 = vmatpush1.msra.mxu0 %v3373
    %3405 = vmatprep.subr.mxu0 0.0
    %3406 = vmatpush1.msra.mxu0 %v3367
    %3407 = vmatprep.subr.mxu0 0.0
    %3408 = vmatpush2.msra.mxu0 0.0
    %3409 = vmatprep.subr.mxu0 0.0
    %3410 = vmatpush2.msra.mxu0 0.0
    %3411 = vmatprep.subr.mxu0 0.0
    %3412 = vmatpush2.msra.mxu0 0.0
    %3413 = vmatprep.subr.mxu0 0.0
    %3414 = vmatpush2.msra.mxu0 0.0
    %3415 = vmatprep.subr.mxu0 0.0
    %3416 = vmatpush2.msra.mxu0 0.0
    %3417 = vmatprep.subr.mxu0 0.0
    %3418 = vmatpush2.msra.mxu0 0.0
    %3419 = vmatprep.subr.mxu0 0.0
    %3420 = vmatpush2.msra.mxu0 0.0
    %3421 = vmatprep.subr.mxu0 0.0
    %3422 = vmatpush2.msra.mxu0 0.0
    %3423 = vmatprep.subr.mxu0 0.0
    %3424 = vmatpush2.msra.mxu0 0.0
    %3425 = vmatprep.subr.mxu0 0.0
    %3426 = vmatpush2.msra.mxu0 0.0
    %3427 = vmatprep.subr.mxu0 0.0
    %3428 = vmatpush2.msra.mxu0 0.0
    %3429 = vmatprep.subr.mxu0 0.0
    %3430 = vmatpush2.msra.mxu0 0.0
    %3431 = vmatprep.subr.mxu0 0.0
    %3432 = vmatpush2.msra.mxu0 0.0
    %3433 = vmatprep.subr.mxu0 0.0
    %3434 = vmatpush2.msra.mxu0 0.0
    %3435 = vmatprep.subr.mxu0 0.0
    %3436 = vmatpush2.msra.mxu0 0.0
    %3437 = vmatprep.subr.mxu0 0.0
    %3438 = vmatpush2.msra.mxu0 0.0
    %3439 = vmatprep.mubr.f32.mxu0 0.0
    %3440 = vmatmul.mubr.f32.gmra.mxu0 %v3370
    %v3441 = vpop.f32.mrf.mxu0
    %v3442 = vadd.f32 0.0, %v3441
    %v3443 = vpop.f32.mrf.mxu0
    %3444 = vdwg.mxu0
    %vm3445 = vcmask 16384
    %3446 = vst.msk [vmem:[#allocation2] sm:$0x1] %vm3445, %v3442
    // Predicated region
    $region26: #{tpu_custom_call.1} parent=1 // pred_check
      _
    $region27: #{tpu_custom_call.1} parent=1 // pred_check_branch
      %3448 = sbr.rel (0) target = $region29
    $region28: #{tpu_custom_call.1} parent=1 // pred_region
      %s3450 = ssub.s32 16, 16
      %3451 = vsyncadd [#allocation3], %s3450
      %s3453 = sshll.u32 [#allocation2], 4
      %s3454 = int_to_ptr.vmem [resolvable:$true] %s3453
      %3456 = dma.vmem_to_hbm [thread:$0]  %s3454, 16, %s6, [#allocation3]
    $region29: #{tpu_custom_call.1} parent=1 // pred_fallthru
      _
    // Predicated region
    $region30: #{tpu_custom_call.1} parent=1 // pred_check
      _
    $region31: #{tpu_custom_call.1} parent=1 // pred_check_branch
      %3458 = sbr.rel (0) target = $region33
    $region32: #{tpu_custom_call.1} parent=1 // pred_region
      %3459 = dma.done [#allocation3], 16
    $region33: #{tpu_custom_call.1} parent=1 // pred_fallthru
      _
    %3460 = vsyncpa [#allocation3], 1

</llo_original>
